<compile_context>
chip_gen: v5e
topology: v5e:2x2
jax: 0.10.0
libtpu: 0.0.40
codegen_flags: <defaults>
</compile_context>

<pallas_src>
import functools

import numpy as np
import jax
import jax.numpy as jnp
from jax.experimental import pallas as pl
from jax.experimental.pallas import tpu as pltpu


# ------------------------------ helpers --------------------------------------

def _round_up(x, m):
    return ((x + m - 1) // m) * m


def _padded_bytes(rows, cols, itemsize):
    """Rough VMEM footprint of a 2-D tile after (8,128) vreg padding."""
    return _round_up(max(rows, 1), 8) * _round_up(max(cols, 1), 128) * itemsize


def _im2col_3x3_with_valid_bf16(x_nchw):
    """NCHW -> [B*H*W, 9*(C+1)] bf16 patches for a 3x3 / stride-1 / pad-1 conv.

    An extra all-ones channel is carried per tap ("validity"): 1 where the tap
    reads a real pixel, 0 where it reads zero padding, so the per-channel
    normalization can be folded into the weights while reproducing the original
    `pad(normalize(x))` border behavior exactly.  Emitted directly in bf16 with
    K left at its real size (36) — one fused XLA pass, no separate pad+cast.
    """
    B, C, H, W = x_nchw.shape
    x = jnp.transpose(x_nchw, (0, 2, 3, 1))                       # NHWC
    ones = jnp.ones((B, H, W, 1), x.dtype)
    xv = jnp.concatenate([x, ones], axis=-1).astype(jnp.bfloat16)  # [B,H,W,C+1]
    xp = jnp.pad(xv, ((0, 0), (1, 1), (1, 1), (0, 0)))
    patches = [xp[:, ki:ki + H, kj:kj + W, :]
               for ki in range(3) for kj in range(3)]
    patches = jnp.stack(patches, axis=3)                          # [B,H,W,9,C+1]
    return patches.reshape(B * H * W, 9 * (C + 1))


def _fold_norm_into_weights(w, mean, std):
    """Fold (x - mean)/std into a [9*C, Cout] conv weight.

    Returns a [9*(C+1), Cout] weight matching the (raw channels | validity)
    patch layout of `_im2col_3x3_with_valid_bf16`:
      raw rows:      w / std
      validity rows: -sum_c mean[c]/std[c] * w[tap, c, :]
    so  raw.w' + valid.w'_v == ((raw - mean)/std).w  inside the image and 0 on
    zero-padded taps — identical to conv(normalize(x)) with zero padding.
    """
    C = mean.shape[0]
    Cout = w.shape[1]
    w3 = w.reshape(9, C, Cout)
    w_scaled = w3 / std[None, :, None]
    w_valid = -jnp.sum(w3 * (mean / std)[None, :, None], axis=1, keepdims=True)
    return jnp.concatenate([w_scaled, w_valid], axis=1).reshape(9 * (C + 1), Cout)


# ----------------------------- Pallas kernels --------------------------------

def conv_mm_kernel(p_ref, w_ref, b_ref, o_ref):
    """Fused X|Y 3x3 conv tile as an im2col matmul:
       [TILE_M, K=36] bf16 @ [K, N=2*Cout] bf16 -> f32 accumulate, + bias,
       ReLU, bf16 store at the real (un-padded) output width."""
    acc = jnp.dot(p_ref[...], w_ref[...], preferred_element_type=jnp.float32)
    o_ref[...] = jnp.maximum(acc + b_ref[...], 0.0).astype(o_ref.dtype)


def pdc_kernel(f_ref, o_ref, gx_ref, gy_ref, *, n, cout, n_total, d_chunk):
    """Partial distance correlation residual, D-tiled.

    Per D-chunk: accumulate Gram matrices G_X, G_Y (f32, VMEM scratch) of the
    interleaved [n, D] feature array, separating the X / Y branches with a
    (lane % n_total) < cout mask (so one HBM stream serves both branches).
    Epilogue (last chunk): Gram-form distances d2 = |fi|^2+|fj|^2-2<fi,fj>,
    U-centering, diagonal zeroing, and P_removal.  The n(n-3) bracket
    denominators cancel in the ratio and are dropped.
    """
    k = pl.program_id(0)

    @pl.when(k == 0)
    def _():
        gx_ref[...] = jnp.zeros_like(gx_ref)
        gy_ref[...] = jnp.zeros_like(gy_ref)

    fc = f_ref[...].astype(jnp.float32)                           # [n, d_chunk]
    lane = jax.lax.broadcasted_iota(jnp.int32, fc.shape, 1) + k * d_chunk
    is_x = (lane % n_total) < cout
    fcx = jnp.where(is_x, fc, 0.0)                                # X lanes only
    fct = fc.T                                                    # [d_chunk, n]
    # Masked-lhs @ full-rhs^T restricts the contraction to one branch's lanes.
    gx_ref[...] += jnp.dot(fcx, fct, preferred_element_type=jnp.float32)
    gy_ref[...] += jnp.dot(fc - fcx, fct, preferred_element_type=jnp.float32)

    @pl.when(k == pl.num_programs(0) - 1)
    def _():
        ii = jax.lax.broadcasted_iota(jnp.int32, (n, n), 0)
        jj = jax.lax.broadcasted_iota(jnp.int32, (n, n), 1)
        eye = ii == jj

        def centered(g):
            gd = jnp.where(eye, g, 0.0)                           # diag(G)=|f_i|^2
            sq_col = jnp.sum(gd, axis=1, keepdims=True)           # [n,1]
            sq_row = jnp.sum(gd, axis=0, keepdims=True)           # [1,n]
            d2 = jnp.maximum(sq_col + sq_row - 2.0 * g, 0.0)      # clamp cancellation
            a = jnp.sqrt(d2 + 1e-18)
            row = jnp.sum(a, axis=0, keepdims=True)
            col = jnp.sum(a, axis=1, keepdims=True)
            tot = jnp.sum(a)
            A = a - row / (n - 2) - col / (n - 2) + tot / ((n - 1) * (n - 2))
            return jnp.where(eye, 0.0, A)                         # zero the diagonal

        A = centered(gx_ref[...])
        Bm = centered(gy_ref[...])
        # bracket(A,B)/bracket(B,B): the n(n-3) denominators cancel.
        # (If featuresY were degenerate this divides by ~0 — same as PyTorch.)
        ratio = jnp.sum(A * Bm) / jnp.sum(Bm * Bm)
        o_ref[...] = A - ratio * Bm


# ------------------------------- wrappers -------------------------------------

def _fused_conv3x3_relu(x_nchw, w_cat, b_cat, *, max_tile_m=1024):
    """Run the fused (X|Y) conv3x3+ReLU as a gridded Pallas matmul.

    Returns [B*H*W, N] bf16 features (NHWC row order, X|Y interleaved in lanes).
    """
    B, C, H, W = x_nchw.shape
    K, N = w_cat.shape
    M = B * H * W

    # >= 2 grid steps so v7x's two TensorCores both get work under "parallel";
    # tiles as large as possible otherwise to amortize per-step overhead.
    num_m = max(2, pl.cdiv(M, max_tile_m))
    tile_m = _round_up(pl.cdiv(M, num_m), 16)                     # bf16 sublane pack
    m_pad = num_m * tile_m

    patches = _im2col_3x3_with_valid_bf16(x_nchw)                 # [M, K] bf16
    if m_pad != M:
        patches = jnp.pad(patches, ((0, m_pad - M), (0, 0)))
    wp = w_cat.astype(jnp.bfloat16)                               # [K, N], resident
    bp = b_cat.astype(jnp.float32).reshape(1, N)

    # Explicit VMEM budget: double-buffered in/out tiles + resident weights/bias.
    step_vmem = (2 * _padded_bytes(tile_m, K, 2) + 2 * _padded_bytes(tile_m, N, 2)
                 + _padded_bytes(K, N, 2) + _padded_bytes(1, N, 4))
    vmem_limit = int(min(32 << 20, max(16 << 20, 4 * step_vmem)))

    out = pl.pallas_call(
        conv_mm_kernel,
        out_shape=jax.ShapeDtypeStruct((m_pad, N), jnp.bfloat16),
        grid=(num_m,),
        in_specs=[
            pl.BlockSpec((tile_m, K), lambda i: (i, 0)),          # patch rows: tiled over M
            pl.BlockSpec((K, N), lambda i: (0, 0)),               # weights: resident
            pl.BlockSpec((1, N), lambda i: (0, 0)),               # bias: resident
        ],
        out_specs=pl.BlockSpec((tile_m, N), lambda i: (i, 0)),
        compiler_params=pltpu.CompilerParams(
            dimension_semantics=("parallel",),                    # megacore / v7x 2-TC split
            vmem_limit_bytes=vmem_limit),
    )(patches, wp, bp)
    return out[:M] if m_pad != M else out


def pdc_residual(feats_bd, cout, n_total, *, d_tile=2048):
    """P_removal(P_Distance_Matrix(fX), P_Distance_Matrix(fY)) with fX/fY
    interleaved per n_total-lane group inside `feats_bd` ([n, D] bf16)."""
    n, D = feats_bd.shape
    assert n > 3, "PDC denominators (n-2), (n-1)(n-2), n(n-3) require batch > 3"

    d_chunk = min(d_tile, _round_up(D, 128))                      # multiple of 128
    num_d = pl.cdiv(D, d_chunk)
    d_pad = num_d * d_chunk
    if d_pad != D:
        feats_bd = jnp.pad(feats_bd, ((0, 0), (0, d_pad - D)))    # zero lanes: no-op in Gram

    kernel = functools.partial(pdc_kernel, n=n, cout=cout,
                               n_total=n_total, d_chunk=d_chunk)

    step_vmem = (2 * _padded_bytes(n, d_chunk, 2)                 # double-buffered input
                 + 2 * _padded_bytes(d_chunk, n, 4)               # f32 upcast + transpose temps
                 + 3 * _padded_bytes(n, n, 4))                    # scratch + output
    vmem_limit = int(min(32 << 20, max(16 << 20, 4 * step_vmem)))

    return pl.pallas_call(
        kernel,
        out_shape=jax.ShapeDtypeStruct((n, n), jnp.float32),
        grid=(num_d,),
        in_specs=[pl.BlockSpec((n, d_chunk), lambda k: (0, k))],
        out_specs=pl.BlockSpec((n, n), lambda k: (0, 0)),
        scratch_shapes=[pltpu.VMEM((n, n), jnp.float32),          # G_X accumulator
                        pltpu.VMEM((n, n), jnp.float32)],         # G_Y accumulator
        compiler_params=pltpu.CompilerParams(
            dimension_semantics=("arbitrary",),                   # D is a reduction axis
            vmem_limit_bytes=vmem_limit),
    )(feats_bd)


def pdc_model_forward(inputs, params):
    """PDC_Model.forward:
       normalize_X/Y folded into conv weights -> one shared bf16 im2col ->
       fused (X|Y) conv+ReLU matmul (bf16 features, real width) ->
       zero-copy [B, D] view -> D-tiled P_Distance_Matrix / P_removal."""
    (meanX, stdX, wX, bX), (meanY, stdY, wY, bY) = params
    B, C, H, W = inputs.shape
    cout = wX.shape[1]
    n_total = 2 * cout

    wXf = _fold_norm_into_weights(wX, meanX, stdX)                # [9*(C+1), Cout]
    wYf = _fold_norm_into_weights(wY, meanY, stdY)
    w_cat = jnp.concatenate([wXf, wYf], axis=1)                   # [K, 2*Cout]
    b_cat = jnp.concatenate([bX, bY], axis=0)                     # [2*Cout]

    feats = _fused_conv3x3_relu(inputs, w_cat, b_cat)             # [B*H*W, 2*Cout] bf16
    # Row-major [B*H*W, 2*Cout] == row-major [B, H*W*2*Cout]: zero-copy reshape.
    # Column order is a permutation of PyTorch's NCHW flatten (and X|Y are
    # interleaved); pairwise distances are invariant to column permutation, so
    # the PDC output is unchanged while a full layout pass is saved.
    feats_bd = feats.reshape(B, H * W * n_total)
    return pdc_residual(feats_bd, cout, n_total)


# --------------------------- pure-JAX references ------------------------------

def _ref_p_distance_matrix(latent):
    n = latent.shape[0]
    a = jnp.sqrt(jnp.sum(jnp.square(latent[None, :, :] - latent[:, None, :]),
                         axis=-1) + 1e-18)
    A = (a - jnp.sum(a, axis=0, keepdims=True) / (n - 2)
           - jnp.sum(a, axis=1, keepdims=True) / (n - 2)
           + jnp.sum(a) / ((n - 1) * (n - 2)))
    return A - jnp.diag(jnp.diag(A))


def _ref_bracket(A, B):
    n = A.shape[0]
    return jnp.sum(A * B) / (n * (n - 3))


def _ref_pdc(fx, fy):
    A = _ref_p_distance_matrix(fx)
    B = _ref_p_distance_matrix(fy)
    return A - _ref_bracket(A, B) / _ref_bracket(B, B) * B


def _ref_forward_f32(inputs, params):
    """PyTorch-faithful reference: normalize -> f32 conv3x3 (lax.conv) + ReLU ->
       NCHW flatten -> direct-formula PDC.  Fully f32."""
    def branch(mean, std, w, b):
        xn = (inputs - mean[None, :, None, None]) / std[None, :, None, None]
        C = xn.shape[1]
        Cout = w.shape[1]
        k_hwio = w.reshape(3, 3, C, Cout)
        y = jax.lax.conv_general_dilated(
            xn, k_hwio, window_strides=(1, 1), padding=((1, 1), (1, 1)),
            dimension_numbers=("NCHW", "HWIO", "NCHW"))
        y = jnp.maximum(y + b[None, :, None, None], 0.0)
        return y.reshape(xn.shape[0], -1)                         # PyTorch NCHW flatten

    (meanX, stdX, wX, bX), (meanY, stdY, wY, bY) = params
    return _ref_pdc(branch(meanX, stdX, wX, bX), branch(meanY, stdY, wY, bY))


def _ref_forward_bf16(inputs, params):
    """Numerics-matched reference: same folded bf16 conv operands / f32
       accumulate / bf16 feature store as the Pallas path, but direct
       (broadcast) distance formulation in plain JAX."""
    (meanX, stdX, wX, bX), (meanY, stdY, wY, bY) = params
    B, C, H, W = inputs.shape
    cout = wX.shape[1]
    patches = _im2col_3x3_with_valid_bf16(inputs)

    def branch(wf, b):
        y = jnp.dot(patches, wf.astype(jnp.bfloat16),
                    preferred_element_type=jnp.float32)
        y = jnp.maximum(y + b[None, :], 0.0)
        y = y.astype(jnp.bfloat16).astype(jnp.float32)            # match bf16 feature store
        return y.reshape(B, H * W * cout)

    fX = branch(_fold_norm_into_weights(wX, meanX, stdX), bX)
    fY = branch(_fold_norm_into_weights(wY, meanY, stdY), bY)
    return _ref_pdc(fX, fY)


# ----------------------------------- main --------------------------------------

if __name__ == "__main__":
    # batch must be > 3 so the (n-2), (n-3) PDC denominators are valid.
    BATCH, C, H, W = 8, 3, 16, 16
    COUT = 8

    key = jax.random.PRNGKey(0)
    k_in, k_wx, k_bx, k_wy, k_by = jax.random.split(key, 5)

    inputs = jax.random.normal(k_in, (BATCH, C, H, W), jnp.float32)

    # Synthetic parameters for the two branches (X and Y).
    meanX = jnp.array([0.485, 0.456, 0.406], jnp.float32)
    stdX = jnp.array([0.229, 0.224, 0.225], jnp.float32)
    meanY = jnp.array([0.5, 0.5, 0.5], jnp.float32)
    stdY = jnp.array([0.5, 0.5, 0.5], jnp.float32)
    wX = 0.1 * jax.random.normal(k_wx, (9 * C, COUT), jnp.float32)
    bX = 0.1 * jax.random.normal(k_bx, (COUT,), jnp.float32)
    wY = 0.1 * jax.random.normal(k_wy, (9 * C, COUT), jnp.float32)
    bY = 0.1 * jax.random.normal(k_by, (COUT,), jnp.float32)

    params = ((meanX, stdX, wX, bX), (meanY, stdY, wY, bY))

    out = jax.block_until_ready(jax.jit(pdc_model_forward)(inputs, params))

    assert out.shape == (BATCH, BATCH), f"bad output shape {out.shape}"
    assert bool(jnp.all(jnp.isfinite(out))), "non-finite values in output"

    # (1) Tight check against a pure-JAX path with identical conv numerics
    #     (folded bf16 operands, f32 accumulate, bf16 feature store) but
    #     direct-formula PDC.
    ref_tight = jax.block_until_ready(_ref_forward_bf16(inputs, params))
    np.testing.assert_allclose(np.asarray(out), np.asarray(ref_tight),
                               rtol=2e-3, atol=2e-3)

    # (2) Semantics check against the fully-f32, PyTorch-faithful formulation.
    #     Deviations are only the bf16 MXU operands / bf16 feature store, so
    #     compare with a tolerance scaled to the output magnitude.
    ref_f32 = jax.block_until_ready(_ref_forward_f32(inputs, params))
    scale = float(jnp.max(jnp.abs(ref_f32)))
    max_err = float(jnp.max(jnp.abs(out - ref_f32)))
    assert max_err <= 6e-2 * scale, f"max_err={max_err} vs scale={scale}"

    print("KERNEL_OK")
</pallas_src>

<mosaic_0001>
module attributes {stable_mosaic.version = 11 : i64} {
  func.func @conv_mm_kernel(%arg0: i32, %arg1: memref<1024x36xbf16, #tpu.memory_space<vmem>>, %arg2: memref<36x16xbf16, #tpu.memory_space<vmem>>, %arg3: memref<1x16xf32, #tpu.memory_space<vmem>>, %arg4: memref<1024x16xbf16, #tpu.memory_space<vmem>>) attributes {dimension_semantics = [#tpu.dimension_semantics<parallel>], iteration_bounds = array<i64: 2>, scalar_prefetch = 0 : i64, scratch_operands = 0 : i64, tpu.core_type = #tpu.core_type<tc>, window_params = [{transform_indices = @transform_0, window_bounds = array<i64: 1024, 36>}, {pipeline_mode = #tpu.pipeline_mode<synchronous>, transform_indices = @transform_1, window_bounds = array<i64: 36, 16>}, {pipeline_mode = #tpu.pipeline_mode<synchronous>, transform_indices = @transform_2, window_bounds = array<i64: 1, 16>}, {transform_indices = @transform_3, window_bounds = array<i64: 1024, 16>}]} {
    %c0 = arith.constant 0 : index
    %c0_0 = arith.constant 0 : index
    %0 = vector.load %arg1[%c0, %c0_0] : memref<1024x36xbf16, #tpu.memory_space<vmem>>, vector<1024x36xbf16>
    %c0_1 = arith.constant 0 : index
    %c0_2 = arith.constant 0 : index
    %1 = vector.load %arg2[%c0_1, %c0_2] : memref<36x16xbf16, #tpu.memory_space<vmem>>, vector<36x16xbf16>
    %cst = arith.constant dense<0.000000e+00> : vector<1024x16xf32>
    %2 = tpu.matmul %0, %1, %cst {dimension_numbers = #tpu.dot_dimension_numbers<[1], [0], [0], [1], [0, 0, 1, 1], [], []>} : vector<1024x36xbf16>, vector<36x16xbf16>, vector<1024x16xf32> -> vector<1024x16xf32>
    %c0_3 = arith.constant 0 : index
    %c0_4 = arith.constant 0 : index
    %3 = vector.load %arg3[%c0_3, %c0_4] : memref<1x16xf32, #tpu.memory_space<vmem>>, vector<1x16xf32>
    %4 = vector.broadcast %3 : vector<1x16xf32> to vector<1024x16xf32>
    %5 = arith.addf %2, %4 : vector<1024x16xf32>
    %cst_5 = arith.constant 0.000000e+00 : f32
    %6 = vector.broadcast %cst_5 : f32 to vector<1024x16xf32>
    %7 = arith.maximumf %5, %6 : vector<1024x16xf32>
    %8 = arith.truncf %7 : vector<1024x16xf32> to vector<1024x16xbf16>
    %c0_6 = arith.constant 0 : index
    %c0_7 = arith.constant 0 : index
    %9 = vector.load %arg4[%c0_6, %c0_7] : memref<1024x16xbf16, #tpu.memory_space<vmem>>, vector<1024x16xbf16>
    tpu.vector_store %arg4[%c0_6, %c0_7], %8 {strides = array<i32>} : memref<1024x16xbf16, #tpu.memory_space<vmem>>, vector<1024x16xbf16>,
    return
  }
  func.func @transform_0(%arg0: i32) -> (i32, i32) {
    %c0_i32 = arith.constant 0 : i32
    %c0_i32_0 = arith.constant 0 : i32
    return %arg0, %c0_i32 : i32, i32
  }
  func.func @transform_1(%arg0: i32) -> (i32, i32) {
    %c0_i32 = arith.constant 0 : i32
    %c0_i32_0 = arith.constant 0 : i32
    %c0_i32_1 = arith.constant 0 : i32
    return %c0_i32, %c0_i32_0 : i32, i32
  }
  func.func @transform_2(%arg0: i32) -> (i32, i32) {
    %c0_i32 = arith.constant 0 : i32
    %c0_i32_0 = arith.constant 0 : i32
    %c0_i32_1 = arith.constant 0 : i32
    return %c0_i32, %c0_i32_0 : i32, i32
  }
  func.func @transform_3(%arg0: i32) -> (i32, i32) {
    %c0_i32 = arith.constant 0 : i32
    %c0_i32_0 = arith.constant 0 : i32
    return %arg0, %c0_i32 : i32, i32
  }
}

module attributes {stable_mosaic.version = 11 : i64} {
  func.func @pdc_kernel(%arg0: i32, %arg1: memref<8x2048xbf16, #tpu.memory_space<vmem>>, %arg2: memref<8x8xf32, #tpu.memory_space<vmem>>, %arg3: memref<8x8xf32, #tpu.memory_space<vmem>>, %arg4: memref<8x8xf32, #tpu.memory_space<vmem>>) attributes {dimension_semantics = [#tpu.dimension_semantics<arbitrary>], iteration_bounds = array<i64: 2>, scalar_prefetch = 0 : i64, scratch_operands = 2 : i64, tpu.core_type = #tpu.core_type<tc>, window_params = [{transform_indices = @transform_0, window_bounds = array<i64: 8, 2048>}, {pipeline_mode = #tpu.pipeline_mode<synchronous>, transform_indices = @transform_1, window_bounds = array<i64: 8, 8>}]} {
    %c0_i32 = arith.constant 0 : i32
    %0 = arith.cmpi eq, %arg0, %c0_i32 : i32
    %1 = arith.extui %0 : i1 to i32
    %c0_i32_0 = arith.constant 0 : i32
    %2 = arith.cmpi ne, %1, %c0_i32_0 : i32
    scf.if %2 {
      %cst_18 = arith.constant 0.000000e+00 : f32
      %42 = vector.broadcast %cst_18 : f32 to vector<8x8xf32>
      %c0_19 = arith.constant 0 : index
      %c0_20 = arith.constant 0 : index
      %43 = vector.load %arg3[%c0_19, %c0_20] : memref<8x8xf32, #tpu.memory_space<vmem>>, vector<8x8xf32>
      tpu.vector_store %arg3[%c0_19, %c0_20], %42 {strides = array<i32>} : memref<8x8xf32, #tpu.memory_space<vmem>>, vector<8x8xf32>,
      %cst_21 = arith.constant 0.000000e+00 : f32
      %44 = vector.broadcast %cst_21 : f32 to vector<8x8xf32>
      %c0_22 = arith.constant 0 : index
      %c0_23 = arith.constant 0 : index
      %45 = vector.load %arg4[%c0_22, %c0_23] : memref<8x8xf32, #tpu.memory_space<vmem>>, vector<8x8xf32>
      tpu.vector_store %arg4[%c0_22, %c0_23], %44 {strides = array<i32>} : memref<8x8xf32, #tpu.memory_space<vmem>>, vector<8x8xf32>,
    } else {
    }
    %c0 = arith.constant 0 : index
    %c0_1 = arith.constant 0 : index
    %3 = vector.load %arg1[%c0, %c0_1] : memref<8x2048xbf16, #tpu.memory_space<vmem>>, vector<8x2048xbf16>
    %4 = arith.extf %3 : vector<8x2048xbf16> to vector<8x2048xf32>
    %5 = tpu.iota {dimensions = array<i32: 1>} : vector<8x2048xi32>
    %c2048_i32 = arith.constant 2048 : i32
    %6 = arith.muli %arg0, %c2048_i32 : i32
    %7 = vector.broadcast %6 : i32 to vector<8x2048xi32>
    %8 = arith.addi %5, %7 : vector<8x2048xi32>
    %c16_i32 = arith.constant 16 : i32
    %c0_i32_2 = arith.constant 0 : i32
    %9 = arith.cmpi eq, %c16_i32, %c0_i32_2 : i32
    %c1_i32 = arith.constant 1 : i32
    %10 = arith.select %9, %c1_i32, %c16_i32 : i32
    %11 = vector.broadcast %10 : i32 to vector<8x2048xi32>
    %12 = arith.remsi %8, %11 : vector<8x2048xi32>
    %c0_i32_3 = arith.constant 0 : i32
    %13 = vector.broadcast %c0_i32_3 : i32 to vector<8x2048xi32>
    %14 = arith.cmpi ne, %12, %13 : vector<8x2048xi32>
    %c0_i32_4 = arith.constant 0 : i32
    %15 = vector.broadcast %c0_i32_4 : i32 to vector<8x2048xi32>
    %16 = arith.cmpi slt, %12, %15 : vector<8x2048xi32>
    %c0_i32_5 = arith.constant 0 : i32
    %17 = arith.cmpi slt, %10, %c0_i32_5 : i32
    %18 = vector.broadcast %17 : i1 to vector<8x2048xi1>
    %19 = vector.broadcast %18 : vector<8x2048xi1> to vector<8x2048xi1>
    %20 = arith.xori %16, %19 : vector<8x2048xi1>
    %21 = arith.andi %20, %14 : vector<8x2048xi1>
    %22 = vector.broadcast %10 : i32 to vector<8x2048xi32>
    %23 = arith.addi %12, %22 : vector<8x2048xi32>
    %24 = arith.select %21, %23, %12 : vector<8x2048xi1>, vector<8x2048xi32>
    %c8_i32 = arith.constant 8 : i32
    %25 = vector.broadcast %c8_i32 : i32 to vector<8x2048xi32>
    %26 = arith.cmpi slt, %24, %25 : vector<8x2048xi32>
    %cst = arith.constant 0.000000e+00 : f32
    %27 = vector.broadcast %cst : f32 to vector<8x2048xf32>
    %28 = arith.select %26, %4, %27 : vector<8x2048xi1>, vector<8x2048xf32>
    %29 = tpu.transpose %4, [1, 0] : vector<8x2048xf32> -> vector<2048x8xf32>
    %c0_6 = arith.constant 0 : index
    %c0_7 = arith.constant 0 : index
    %30 = vector.load %arg3[%c0_6, %c0_7] : memref<8x8xf32, #tpu.memory_space<vmem>>, vector<8x8xf32>
    %cst_8 = arith.constant dense<0.000000e+00> : vector<8x8xf32>
    %31 = tpu.matmul %28, %29, %cst_8 {dimension_numbers = #tpu.dot_dimension_numbers<[1], [0], [0], [1], [0, 0, 1, 1], [], []>} : vector<8x2048xf32>, vector<2048x8xf32>, vector<8x8xf32> -> vector<8x8xf32>
    %32 = arith.addf %30, %31 : vector<8x8xf32>
    %c0_9 = arith.constant 0 : index
    %c0_10 = arith.constant 0 : index
    %33 = vector.load %arg3[%c0_9, %c0_10] : memref<8x8xf32, #tpu.memory_space<vmem>>, vector<8x8xf32>
    tpu.vector_store %arg3[%c0_9, %c0_10], %32 {strides = array<i32>} : memref<8x8xf32, #tpu.memory_space<vmem>>, vector<8x8xf32>,
    %c0_11 = arith.constant 0 : index
    %c0_12 = arith.constant 0 : index
    %34 = vector.load %arg4[%c0_11, %c0_12] : memref<8x8xf32, #tpu.memory_space<vmem>>, vector<8x8xf32>
    %35 = arith.subf %4, %28 : vector<8x2048xf32>
    %cst_13 = arith.constant dense<0.000000e+00> : vector<8x8xf32>
    %36 = tpu.matmul %35, %29, %cst_13 {dimension_numbers = #tpu.dot_dimension_numbers<[1], [0], [0], [1], [0, 0, 1, 1], [], []>} : vector<8x2048xf32>, vector<2048x8xf32>, vector<8x8xf32> -> vector<8x8xf32>
    %37 = arith.addf %34, %36 : vector<8x8xf32>
    %c0_14 = arith.constant 0 : index
    %c0_15 = arith.constant 0 : index
    %38 = vector.load %arg4[%c0_14, %c0_15] : memref<8x8xf32, #tpu.memory_space<vmem>>, vector<8x8xf32>
    tpu.vector_store %arg4[%c0_14, %c0_15], %37 {strides = array<i32>} : memref<8x8xf32, #tpu.memory_space<vmem>>, vector<8x8xf32>,
    %c1_i32_16 = arith.constant 1 : i32
    %39 = arith.cmpi eq, %arg0, %c1_i32_16 : i32
    %40 = arith.extui %39 : i1 to i32
    %c0_i32_17 = arith.constant 0 : i32
    %41 = arith.cmpi ne, %40, %c0_i32_17 : i32
    scf.if %41 {
      %42 = tpu.iota {dimensions = array<i32: 0>} : vector<8x8xi32>
      %43 = tpu.iota {dimensions = array<i32: 1>} : vector<8x8xi32>
      %44 = arith.cmpi eq, %42, %43 : vector<8x8xi32>
      %c0_18 = arith.constant 0 : index
      %c0_19 = arith.constant 0 : index
      %45 = vector.load %arg3[%c0_18, %c0_19] : memref<8x8xf32, #tpu.memory_space<vmem>>, vector<8x8xf32>
      %cst_20 = arith.constant 0.000000e+00 : f32
      %46 = vector.broadcast %cst_20 : f32 to vector<8x8xf32>
      %47 = arith.select %44, %45, %46 : vector<8x8xi1>, vector<8x8xf32>
      %cst_21 = arith.constant dense<0.000000e+00> : vector<8xf32>
      %48 = vector.multi_reduction <add>, %47, %cst_21 [1] : vector<8x8xf32> to vector<8xf32>
      %49 = vector.shape_cast %48 : vector<8xf32> to vector<8x1xf32>
      %cst_22 = arith.constant dense<0.000000e+00> : vector<8xf32>
      %50 = vector.multi_reduction <add>, %47, %cst_22 [0] : vector<8x8xf32> to vector<8xf32>
      %51 = vector.shape_cast %50 : vector<8xf32> to vector<1x8xf32>
      %52 = vector.broadcast %49 : vector<8x1xf32> to vector<8x8xf32>
      %53 = vector.broadcast %51 : vector<1x8xf32> to vector<8x8xf32>
      %54 = arith.addf %52, %53 : vector<8x8xf32>
      %cst_23 = arith.constant 2.000000e+00 : f32
      %55 = vector.broadcast %cst_23 : f32 to vector<8x8xf32>
      %56 = arith.mulf %55, %45 : vector<8x8xf32>
      %57 = arith.subf %54, %56 : vector<8x8xf32>
      %cst_24 = arith.constant 0.000000e+00 : f32
      %58 = vector.broadcast %cst_24 : f32 to vector<8x8xf32>
      %59 = arith.maximumf %57, %58 : vector<8x8xf32>
      %cst_25 = arith.constant 1.000000e-18 : f32
      %60 = vector.broadcast %cst_25 : f32 to vector<8x8xf32>
      %61 = arith.addf %59, %60 : vector<8x8xf32>
      %62 = math.sqrt %61 : vector<8x8xf32>
      %cst_26 = arith.constant dense<0.000000e+00> : vector<8xf32>
      %63 = vector.multi_reduction <add>, %62, %cst_26 [0] : vector<8x8xf32> to vector<8xf32>
      %64 = vector.shape_cast %63 : vector<8xf32> to vector<1x8xf32>
      %cst_27 = arith.constant dense<0.000000e+00> : vector<8xf32>
      %65 = vector.multi_reduction <add>, %62, %cst_27 [1] : vector<8x8xf32> to vector<8xf32>
      %66 = vector.shape_cast %65 : vector<8xf32> to vector<8x1xf32>
      %67 = vector.shape_cast %62 : vector<8x8xf32> to vector<1x8x8xf32>
      %cst_28 = arith.constant dense<0.000000e+00> : vector<1xf32>
      %68 = vector.multi_reduction <add>, %67, %cst_28 [1, 2] : vector<1x8x8xf32> to vector<1xf32>
      %69 = vector.shape_cast %68 : vector<1xf32> to vector<1x1x1xf32>
      %70 = vector.extract %69[0, 0, 0] : f32 from vector<1x1x1xf32>
      %cst_29 = arith.constant 6.000000e+00 : f32
      %71 = vector.broadcast %cst_29 : f32 to vector<1x8xf32>
      %72 = arith.divf %64, %71 : vector<1x8xf32>
      %73 = vector.broadcast %72 : vector<1x8xf32> to vector<8x8xf32>
      %74 = arith.subf %62, %73 : vector<8x8xf32>
      %cst_30 = arith.constant 6.000000e+00 : f32
      %75 = vector.broadcast %cst_30 : f32 to vector<8x1xf32>
      %76 = arith.divf %66, %75 : vector<8x1xf32>
      %77 = vector.broadcast %76 : vector<8x1xf32> to vector<8x8xf32>
      %78 = arith.subf %74, %77 : vector<8x8xf32>
      %cst_31 = arith.constant 4.200000e+01 : f32
      %79 = arith.divf %70, %cst_31 : f32
      %80 = vector.broadcast %79 : f32 to vector<8x8xf32>
      %81 = arith.addf %78, %80 : vector<8x8xf32>
      %cst_32 = arith.constant 0.000000e+00 : f32
      %82 = vector.broadcast %cst_32 : f32 to vector<8x8xf32>
      %83 = arith.select %44, %82, %81 : vector<8x8xi1>, vector<8x8xf32>
      %c0_33 = arith.constant 0 : index
      %c0_34 = arith.constant 0 : index
      %84 = vector.load %arg4[%c0_33, %c0_34] : memref<8x8xf32, #tpu.memory_space<vmem>>, vector<8x8xf32>
      %cst_35 = arith.constant 0.000000e+00 : f32
      %85 = vector.broadcast %cst_35 : f32 to vector<8x8xf32>
      %86 = arith.select %44, %84, %85 : vector<8x8xi1>, vector<8x8xf32>
      %cst_36 = arith.constant dense<0.000000e+00> : vector<8xf32>
      %87 = vector.multi_reduction <add>, %86, %cst_36 [1] : vector<8x8xf32> to vector<8xf32>
      %88 = vector.shape_cast %87 : vector<8xf32> to vector<8x1xf32>
      %cst_37 = arith.constant dense<0.000000e+00> : vector<8xf32>
      %89 = vector.multi_reduction <add>, %86, %cst_37 [0] : vector<8x8xf32> to vector<8xf32>
      %90 = vector.shape_cast %89 : vector<8xf32> to vector<1x8xf32>
      %91 = vector.broadcast %88 : vector<8x1xf32> to vector<8x8xf32>
      %92 = vector.broadcast %90 : vector<1x8xf32> to vector<8x8xf32>
      %93 = arith.addf %91, %92 : vector<8x8xf32>
      %cst_38 = arith.constant 2.000000e+00 : f32
      %94 = vector.broadcast %cst_38 : f32 to vector<8x8xf32>
      %95 = arith.mulf %94, %84 : vector<8x8xf32>
      %96 = arith.subf %93, %95 : vector<8x8xf32>
      %cst_39 = arith.constant 0.000000e+00 : f32
      %97 = vector.broadcast %cst_39 : f32 to vector<8x8xf32>
      %98 = arith.maximumf %96, %97 : vector<8x8xf32>
      %cst_40 = arith.constant 1.000000e-18 : f32
      %99 = vector.broadcast %cst_40 : f32 to vector<8x8xf32>
      %100 = arith.addf %98, %99 : vector<8x8xf32>
      %101 = math.sqrt %100 : vector<8x8xf32>
      %cst_41 = arith.constant dense<0.000000e+00> : vector<8xf32>
      %102 = vector.multi_reduction <add>, %101, %cst_41 [0] : vector<8x8xf32> to vector<8xf32>
      %103 = vector.shape_cast %102 : vector<8xf32> to vector<1x8xf32>
      %cst_42 = arith.constant dense<0.000000e+00> : vector<8xf32>
      %104 = vector.multi_reduction <add>, %101, %cst_42 [1] : vector<8x8xf32> to vector<8xf32>
      %105 = vector.shape_cast %104 : vector<8xf32> to vector<8x1xf32>
      %106 = vector.shape_cast %101 : vector<8x8xf32> to vector<1x8x8xf32>
      %cst_43 = arith.constant dense<0.000000e+00> : vector<1xf32>
      %107 = vector.multi_reduction <add>, %106, %cst_43 [1, 2] : vector<1x8x8xf32> to vector<1xf32>
      %108 = vector.shape_cast %107 : vector<1xf32> to vector<1x1x1xf32>
      %109 = vector.extract %108[0, 0, 0] : f32 from vector<1x1x1xf32>
      %cst_44 = arith.constant 6.000000e+00 : f32
      %110 = vector.broadcast %cst_44 : f32 to vector<1x8xf32>
      %111 = arith.divf %103, %110 : vector<1x8xf32>
      %112 = vector.broadcast %111 : vector<1x8xf32> to vector<8x8xf32>
      %113 = arith.subf %101, %112 : vector<8x8xf32>
      %cst_45 = arith.constant 6.000000e+00 : f32
      %114 = vector.broadcast %cst_45 : f32 to vector<8x1xf32>
      %115 = arith.divf %105, %114 : vector<8x1xf32>
      %116 = vector.broadcast %115 : vector<8x1xf32> to vector<8x8xf32>
      %117 = arith.subf %113, %116 : vector<8x8xf32>
      %cst_46 = arith.constant 4.200000e+01 : f32
      %118 = arith.divf %109, %cst_46 : f32
      %119 = vector.broadcast %118 : f32 to vector<8x8xf32>
      %120 = arith.addf %117, %119 : vector<8x8xf32>
      %cst_47 = arith.constant 0.000000e+00 : f32
      %121 = vector.broadcast %cst_47 : f32 to vector<8x8xf32>
      %122 = arith.select %44, %121, %120 : vector<8x8xi1>, vector<8x8xf32>
      %123 = arith.mulf %83, %122 : vector<8x8xf32>
      %124 = vector.shape_cast %123 : vector<8x8xf32> to vector<1x8x8xf32>
      %cst_48 = arith.constant dense<0.000000e+00> : vector<1xf32>
      %125 = vector.multi_reduction <add>, %124, %cst_48 [1, 2] : vector<1x8x8xf32> to vector<1xf32>
      %126 = vector.shape_cast %125 : vector<1xf32> to vector<1x1x1xf32>
      %127 = vector.extract %126[0, 0, 0] : f32 from vector<1x1x1xf32>
      %128 = arith.mulf %122, %122 : vector<8x8xf32>
      %129 = vector.shape_cast %128 : vector<8x8xf32> to vector<1x8x8xf32>
      %cst_49 = arith.constant dense<0.000000e+00> : vector<1xf32>
      %130 = vector.multi_reduction <add>, %129, %cst_49 [1, 2] : vector<1x8x8xf32> to vector<1xf32>
      %131 = vector.shape_cast %130 : vector<1xf32> to vector<1x1x1xf32>
      %132 = vector.extract %131[0, 0, 0] : f32 from vector<1x1x1xf32>
      %133 = arith.divf %127, %132 : f32
      %134 = vector.broadcast %133 : f32 to vector<8x8xf32>
      %135 = arith.mulf %134, %122 : vector<8x8xf32>
      %136 = arith.subf %83, %135 : vector<8x8xf32>
      %c0_50 = arith.constant 0 : index
      %c0_51 = arith.constant 0 : index
      %137 = vector.load %arg2[%c0_50, %c0_51] : memref<8x8xf32, #tpu.memory_space<vmem>>, vector<8x8xf32>
      tpu.vector_store %arg2[%c0_50, %c0_51], %136 {strides = array<i32>} : memref<8x8xf32, #tpu.memory_space<vmem>>, vector<8x8xf32>,
    } else {
    }
    return
  }
  func.func @transform_0(%arg0: i32) -> (i32, i32) {
    %c0_i32 = arith.constant 0 : i32
    %c0_i32_0 = arith.constant 0 : i32
    return %c0_i32, %arg0 : i32, i32
  }
  func.func @transform_1(%arg0: i32) -> (i32, i32) {
    %c0_i32 = arith.constant 0 : i32
    %c0_i32_0 = arith.constant 0 : i32
    %c0_i32_1 = arith.constant 0 : i32
    return %c0_i32, %c0_i32_0 : i32, i32
  }
}

</mosaic_0001>

<llo_original>
// kernel: div.14
$region0: #{div.14}
  #allocation0 [shape = 's32[1]{0}', space=sflag, size = 0x4, scoped, tag = 'scoped memory for div.14']
  %s0 = inlined_call_operand.vmem [shape: f32[3], index: 0, kind: input, shape index: {}]
  %s1 = inlined_call_operand.vmem [shape: f32[3], index: 1, kind: input, shape index: {}]
  %s2 = inlined_call_operand.vmem [shape: f32[3], index: 2, kind: output, shape index: {}]
  %v3 = vld [vmem:[%s0] sm:$0x1]
  %v4 = vld [vmem:[%s1] sm:$0x1]
  %5 = xla_tuple %v3, %v4
  %6 = xla_tuple %5
  %v7 = vrcp.pop %v4
  %v8 = vmul.f32 %v4, %v7
  %v9 = vsub.f32 1.0, %v8
  %v10 = vmul.f32 %v7, %v9
  %v11 = vadd.f32 %v7, %v10
  %vm12 = vweird.f32 %v4
  %vm13 = vweird.f32 %v7
  %vm14 = vmor %vm12, %vm13
  %v15 = vsel %vm14, %v7, %v11
  %v16 = vand.u32 2147483647, %v4
  %vm17 = vcmp.eq.f32.partialorder %v16, 8.507059e+37
  %v18 = vand.u32 %v4, 2147483648
  %v19 = vor.u32 1.1754944e-38, %v18
  %v20 = vsel %vm17, %v19, %v15
  %v21 = vmul.f32 %v3, %v20
  %22 = xla_tuple %v21
  %23 = vst [vmem:[%s2] sm:$0x1] %v21

// kernel: pdc_model_forward.3
$region0: #{pdc_model_forward.3}
  #allocation0 [shape = 'u32[]', space=smem, size = 0x4, offset = 0x4, fixed_abs, tag = 'smem constant byte address 0x4 - core index']
  #allocation1 [shape = 'u32[72,128]{1,0:T(1,128)}', space=vmem, size = 0x9000, scoped, tag = 'internal scratch']
  #allocation2 [shape = 'f32[8,8]{1,0:T(8,128)}', space=vmem, size = 0x1000, scoped, tag = 'scratch operand']
  #allocation3 [shape = 'f32[8,8]{1,0:T(8,128)}', space=vmem, size = 0x1000, scoped, tag = 'scratch operand']
  %s0 = inlined_call_operand.vmem [shape: bf16[8,4096], index: 0, kind: input, shape index: {}]
  %s1 = inlined_call_operand.hbm [shape: f32[8,8], index: 1, kind: output, shape index: {}]
  %s2 = sld [smem:[#allocation0]]
  $region45: #{pdc_model_forward.3} parent=0
    _
  %s4 = ssub.s32 1, %s2
  %s5 = scalar_select 0, %s4, %s2
  $region1: #{pdc_model_forward.3} parent=0
    #allocation4 [shape = 'u8[4096]{0}', space=vmem, size = 0x1000, scoped, tag = 'output window, operand 0, single buffered']
    #allocation5 [shape = 's32[2]{0}', space=sflag, size = 0x8, scoped, tag = 'scoped memory for pdc_model_forward.3']
    %6 = vsyncpa [#allocation5], 0
    loop: start=0, step=1, limit=4
    $region2: #{pdc_model_forward.3} parent=1 // loop_pre_header
      _
    $region3: #{pdc_model_forward.3} parent=1 // loop_header
      %s8 = sphi 0, %s12
      %p9 = scmp.ge.s32.totalorder %s8, 4
      %s18 = sphi 0, %s20
      %s21 = sphi 0, %s18
      %s22 = sphi 0, %s21
      %s38 = sphi 0, %s22
      %s42 = sphi 0, %s42
      %s44 = sphi 0, %s42
      %s45 = sphi 0, %s44
      %s59 = sphi 0, %s45
    $region4: #{pdc_model_forward.3} parent=1 // loop_header_branch
      %11 = sbr.rel (%p9) target = $region8
    $region5: #{pdc_model_forward.3} parent=1 // loop_body
      %s13 = ssub.s32 %s8, 1
      %s14 = ssub.s32 %s8, 2
      %s15 = sadd.s32 %s8, 1
      %s16 = ssub.s32 %s8, %s15
      %p17 = scmp.eq.s32.totalorder %s16, 0
      %s19 = sadd.s32 %s18, 1
      %s20 = scalar_select %p17, %s18, %s19
      %p23 = pneg %p17
      %p24 = scmp.eq.s32.totalorder %s8, 1
      %p25 = por %p23, %p24
      %p26 = scmp.ne.s32.totalorder %s18, %s21
      %p27 = scmp.eq.s32.totalorder %s8, 0
      %p28 = por %p26, %p27
      %p29 = scmp.ne.s32.totalorder %s18, %s21
      %p30 = scmp.eq.s32.totalorder %s13, 1
      %p31 = por %p29, %p30
      %p32 = scmp.ne.s32.totalorder %s21, %s22
      %p33 = scmp.eq.s32.totalorder %s13, 0
      %p34 = por %p32, %p33
      %p35 = scmp.ne.s32.totalorder %s21, %s22
      %p36 = scmp.eq.s32.totalorder %s14, 1
      %p37 = por %p35, %p36
      %p39 = scmp.ne.s32.totalorder %s22, %s38
      %p40 = scmp.eq.s32.totalorder %s14, 0
      %p41 = por %p39, %p40
      %s43 = sadd.s32 %s42, 1
      %p46 = scmp.eq.s32.totalorder %s8, 1
      %p47 = scmp.ne.s32.totalorder %s42, %s44
      %p48 = scmp.eq.s32.totalorder %s8, 0
      %p49 = por %p47, %p48
      %p50 = scmp.ne.s32.totalorder %s42, %s44
      %p51 = scmp.eq.s32.totalorder %s13, 1
      %p52 = por %p50, %p51
      %p53 = scmp.ne.s32.totalorder %s44, %s45
      %p54 = scmp.eq.s32.totalorder %s13, 0
      %p55 = por %p53, %p54
      %p56 = scmp.ne.s32.totalorder %s44, %s45
      %p57 = scmp.eq.s32.totalorder %s14, 1
      %p58 = por %p56, %p57
      %p60 = scmp.ne.s32.totalorder %s45, %s59
      %p61 = scmp.eq.s32.totalorder %s14, 0
      %p62 = por %p60, %p61
      %p63 = scmp.le.s32.totalorder 1, %s8
      %p64 = scmp.lt.s32.totalorder %s8, 3
      %p65 = pnand %p63, %p64
      %p66 = pneg %p65
      // Predicated region
      $region9: #{pdc_model_forward.3} parent=5 // pred_check
        _
      $region10: #{pdc_model_forward.3} parent=5 // pred_check_branch
        %68 = sbr.rel (%p65) target = $region12
      $region11: #{pdc_model_forward.3} parent=5 // pred_region
        %s69 = ssub.s32 %s8, 1
      $region12: #{pdc_model_forward.3} parent=5 // pred_fallthru
        _
      %p70 = scmp.lt.s32.totalorder %s8, 2
      // Predicated region
      $region13: #{pdc_model_forward.3} parent=5 // pred_check
        %p71 = pneg %p70
      $region14: #{pdc_model_forward.3} parent=5 // pred_check_branch
        %73 = sbr.rel (%p71) target = $region16
      $region15: #{pdc_model_forward.3} parent=5 // pred_region
        // Predicated region
        $region17: #{pdc_model_forward.3} parent=15 // pred_check
          %p74 = pneg %p28
        $region18: #{pdc_model_forward.3} parent=15 // pred_check_branch
          %76 = sbr.rel (%p74) target = $region20
        $region19: #{pdc_model_forward.3} parent=15 // pred_region
          %s77 = smul.u32 16, %s8
          %p78 = scmp.lt.s32.totalorder %s77, 31
          %s79 = scalar_select %p78, %s77, 31
          %s80 = smul.addr %s79, 4
          %s81 = scalar_lea.vmem %s0, %s80
          %s82 = smul.u32 16, %s8
        $region20: #{pdc_model_forward.3} parent=15 // pred_fallthru
          _
      $region16: #{pdc_model_forward.3} parent=5 // pred_fallthru
        _
      %p83 = scmp.le.s32.totalorder 1, %s8
      %p84 = scmp.lt.s32.totalorder %s8, 3
      %p85 = pnand %p83, %p84
      %p86 = pneg %p85
      // Predicated region
      $region21: #{pdc_model_forward.3} parent=5 // pred_check
        _
      $region22: #{pdc_model_forward.3} parent=5 // pred_check_branch
        %88 = sbr.rel (%p85) target = $region24
      $region23: #{pdc_model_forward.3} parent=5 // pred_region
        %s89 = ssub.s32 %s8, 1
        %s90 = smul.u32 16, %s13
        %p91 = scmp.lt.s32.totalorder %s90, 31
        %s92 = scalar_select %p91, %s90, 31
        %s93 = smul.addr %s92, 4
        %s94 = scalar_lea.vmem %s0, %s93
        %p95 = pneg %p34
        %p96 = pneg %p31
        %p97 = pneg %p55
        %p98 = pneg %p52
        %s99 = smul.u32 16, %s13
        %p100 = scmp.lt.s32.totalorder %s99, 31
        %s101 = scalar_select %p100, %s99, 31
        %s102 = smul.addr %s101, 4
        %s103 = scalar_lea.vmem %s0, %s102
        %s104 = smul.u32 16, %s13
        %p105 = scmp.eq.s32.totalorder %s13, 0
        // Predicated region
        $region25: #{pdc_model_forward.3} parent=23 // pred_check
          %p106 = pneg %p105
        $region26: #{pdc_model_forward.3} parent=23 // pred_check_branch
          %108 = sbr.rel (%p106) target = $region28
        $region27: #{pdc_model_forward.3} parent=23 // pred_region
          %vm109 = vcmask 64512
          %110 = vst.msk [vmem:[#allocation2] sm:$0xff] %vm109, 0.0
          %111 = vst.msk [vmem:[#allocation3] sm:$0xff] %vm109, 0.0
        $region28: #{pdc_model_forward.3} parent=23 // pred_fallthru
          _
        %v112 = vld [vmem:[%s103] sm:$0xff]
        %v113 = vld [vmem:[%s103 + $0x8] sm:$0xff]
        %v114 = vld [vmem:[%s103 + $0x10] sm:$0xff]
        %v115 = vld [vmem:[%s103 + $0x18] sm:$0xff]
        %v116 = vld [vmem:[%s103 + $0x20] sm:$0xff]
        %v117 = vld [vmem:[%s103 + $0x28] sm:$0xff]
        %v118 = vld [vmem:[%s103 + $0x30] sm:$0xff]
        %v119 = vld [vmem:[%s103 + $0x38] sm:$0xff]
        %v120 = vunpack.c.l.bf16 %v112
        %v121 = vunpack.c.h.bf16 %v112
        %v122 = vunpack.c.l.bf16 %v113
        %v123 = vunpack.c.h.bf16 %v113
        %v124 = vunpack.c.l.bf16 %v114
        %v125 = vunpack.c.h.bf16 %v114
        %v126 = vunpack.c.l.bf16 %v115
        %v127 = vunpack.c.h.bf16 %v115
        %v128 = vunpack.c.l.bf16 %v116
        %v129 = vunpack.c.h.bf16 %v116
        %v130 = vunpack.c.l.bf16 %v117
        %v131 = vunpack.c.h.bf16 %v117
        %v132 = vunpack.c.l.bf16 %v118
        %v133 = vunpack.c.h.bf16 %v118
        %v134 = vunpack.c.l.bf16 %v119
        %v135 = vunpack.c.h.bf16 %v119
        %v136 = vlaneseq
        %v137 = vand.u32 %v136, 127
        %v138 = vadd.s32 %v137, 128
        %v139 = vadd.s32 %v137, 256
        %v140 = vadd.s32 %v137, 384
        %v141 = vadd.s32 %v137, 512
        %v142 = vadd.s32 %v137, 640
        %v143 = vadd.s32 %v137, 768
        %v144 = vadd.s32 %v137, 896
        %v145 = vadd.s32 %v137, 1024
        %v146 = vadd.s32 %v137, 1152
        %v147 = vadd.s32 %v137, 1280
        %v148 = vadd.s32 %v137, 1408
        %v149 = vadd.s32 %v137, 1536
        %v150 = vadd.s32 %v137, 1664
        %v151 = vadd.s32 %v137, 1792
        %v152 = vadd.s32 %v137, 1920
        %s153 = smul.u32 %s13, 2048
        %v154 = vstv %s153
        %v155 = vadd.s32 %v137, %v154
        %v156 = vadd.s32 %v138, %v154
        %v157 = vadd.s32 %v139, %v154
        %v158 = vadd.s32 %v140, %v154
        %v159 = vadd.s32 %v141, %v154
        %v160 = vadd.s32 %v142, %v154
        %v161 = vadd.s32 %v143, %v154
        %v162 = vadd.s32 %v144, %v154
        %v163 = vadd.s32 %v145, %v154
        %v164 = vadd.s32 %v146, %v154
        %v165 = vadd.s32 %v147, %v154
        %v166 = vadd.s32 %v148, %v154
        %v167 = vadd.s32 %v149, %v154
        %v168 = vadd.s32 %v150, %v154
        %v169 = vadd.s32 %v151, %v154
        %v170 = vadd.s32 %v152, %v154
        %vm171 = vcmp.lt.s32.totalorder %v155, 0
        %v172 = vsub.s32 0, %v155
        %v173 = vsel %vm171, %v172, %v155
        %v174 = vshrl.u32 %v173, 4
        %v175 = vand.u32 %v173, 15
        %v176 = vsub.s32 0, %v175
        %v177 = vsel %vm171, %v176, %v175
        %vm178 = vcmp.lt.s32.totalorder %v156, 0
        %v179 = vsub.s32 0, %v156
        %v180 = vsel %vm178, %v179, %v156
        %v181 = vshrl.u32 %v180, 4
        %v182 = vand.u32 %v180, 15
        %v183 = vsub.s32 0, %v182
        %v184 = vsel %vm178, %v183, %v182
        %vm185 = vcmp.lt.s32.totalorder %v157, 0
        %v186 = vsub.s32 0, %v157
        %v187 = vsel %vm185, %v186, %v157
        %v188 = vshrl.u32 %v187, 4
        %v189 = vand.u32 %v187, 15
        %v190 = vsub.s32 0, %v189
        %v191 = vsel %vm185, %v190, %v189
        %vm192 = vcmp.lt.s32.totalorder %v158, 0
        %v193 = vsub.s32 0, %v158
        %v194 = vsel %vm192, %v193, %v158
        %v195 = vshrl.u32 %v194, 4
        %v196 = vand.u32 %v194, 15
        %v197 = vsub.s32 0, %v196
        %v198 = vsel %vm192, %v197, %v196
        %vm199 = vcmp.lt.s32.totalorder %v159, 0
        %v200 = vsub.s32 0, %v159
        %v201 = vsel %vm199, %v200, %v159
        %v202 = vshrl.u32 %v201, 4
        %v203 = vand.u32 %v201, 15
        %v204 = vsub.s32 0, %v203
        %v205 = vsel %vm199, %v204, %v203
        %vm206 = vcmp.lt.s32.totalorder %v160, 0
        %v207 = vsub.s32 0, %v160
        %v208 = vsel %vm206, %v207, %v160
        %v209 = vshrl.u32 %v208, 4
        %v210 = vand.u32 %v208, 15
        %v211 = vsub.s32 0, %v210
        %v212 = vsel %vm206, %v211, %v210
        %vm213 = vcmp.lt.s32.totalorder %v161, 0
        %v214 = vsub.s32 0, %v161
        %v215 = vsel %vm213, %v214, %v161
        %v216 = vshrl.u32 %v215, 4
        %v217 = vand.u32 %v215, 15
        %v218 = vsub.s32 0, %v217
        %v219 = vsel %vm213, %v218, %v217
        %vm220 = vcmp.lt.s32.totalorder %v162, 0
        %v221 = vsub.s32 0, %v162
        %v222 = vsel %vm220, %v221, %v162
        %v223 = vshrl.u32 %v222, 4
        %v224 = vand.u32 %v222, 15
        %v225 = vsub.s32 0, %v224
        %v226 = vsel %vm220, %v225, %v224
        %vm227 = vcmp.lt.s32.totalorder %v163, 0
        %v228 = vsub.s32 0, %v163
        %v229 = vsel %vm227, %v228, %v163
        %v230 = vshrl.u32 %v229, 4
        %v231 = vand.u32 %v229, 15
        %v232 = vsub.s32 0, %v231
        %v233 = vsel %vm227, %v232, %v231
        %vm234 = vcmp.lt.s32.totalorder %v164, 0
        %v235 = vsub.s32 0, %v164
        %v236 = vsel %vm234, %v235, %v164
        %v237 = vshrl.u32 %v236, 4
        %v238 = vand.u32 %v236, 15
        %v239 = vsub.s32 0, %v238
        %v240 = vsel %vm234, %v239, %v238
        %vm241 = vcmp.lt.s32.totalorder %v165, 0
        %v242 = vsub.s32 0, %v165
        %v243 = vsel %vm241, %v242, %v165
        %v244 = vshrl.u32 %v243, 4
        %v245 = vand.u32 %v243, 15
        %v246 = vsub.s32 0, %v245
        %v247 = vsel %vm241, %v246, %v245
        %vm248 = vcmp.lt.s32.totalorder %v166, 0
        %v249 = vsub.s32 0, %v166
        %v250 = vsel %vm248, %v249, %v166
        %v251 = vshrl.u32 %v250, 4
        %v252 = vand.u32 %v250, 15
        %v253 = vsub.s32 0, %v252
        %v254 = vsel %vm248, %v253, %v252
        %vm255 = vcmp.lt.s32.totalorder %v167, 0
        %v256 = vsub.s32 0, %v167
        %v257 = vsel %vm255, %v256, %v167
        %v258 = vshrl.u32 %v257, 4
        %v259 = vand.u32 %v257, 15
        %v260 = vsub.s32 0, %v259
        %v261 = vsel %vm255, %v260, %v259
        %vm262 = vcmp.lt.s32.totalorder %v168, 0
        %v263 = vsub.s32 0, %v168
        %v264 = vsel %vm262, %v263, %v168
        %v265 = vshrl.u32 %v264, 4
        %v266 = vand.u32 %v264, 15
        %v267 = vsub.s32 0, %v266
        %v268 = vsel %vm262, %v267, %v266
        %vm269 = vcmp.lt.s32.totalorder %v169, 0
        %v270 = vsub.s32 0, %v169
        %v271 = vsel %vm269, %v270, %v169
        %v272 = vshrl.u32 %v271, 4
        %v273 = vand.u32 %v271, 15
        %v274 = vsub.s32 0, %v273
        %v275 = vsel %vm269, %v274, %v273
        %vm276 = vcmp.lt.s32.totalorder %v170, 0
        %v277 = vsub.s32 0, %v170
        %v278 = vsel %vm276, %v277, %v170
        %v279 = vshrl.u32 %v278, 4
        %v280 = vand.u32 %v278, 15
        %v281 = vsub.s32 0, %v280
        %v282 = vsel %vm276, %v281, %v280
        %vm283 = vcmp.ne.s32.totalorder %v177, 0
        %vm284 = vcmp.ne.s32.totalorder %v184, 0
        %vm285 = vcmp.ne.s32.totalorder %v191, 0
        %vm286 = vcmp.ne.s32.totalorder %v198, 0
        %vm287 = vcmp.ne.s32.totalorder %v205, 0
        %vm288 = vcmp.ne.s32.totalorder %v212, 0
        %vm289 = vcmp.ne.s32.totalorder %v219, 0
        %vm290 = vcmp.ne.s32.totalorder %v226, 0
        %vm291 = vcmp.ne.s32.totalorder %v233, 0
        %vm292 = vcmp.ne.s32.totalorder %v240, 0
        %vm293 = vcmp.ne.s32.totalorder %v247, 0
        %vm294 = vcmp.ne.s32.totalorder %v254, 0
        %vm295 = vcmp.ne.s32.totalorder %v261, 0
        %vm296 = vcmp.ne.s32.totalorder %v268, 0
        %vm297 = vcmp.ne.s32.totalorder %v275, 0
        %vm298 = vcmp.ne.s32.totalorder %v282, 0
        %vm299 = vcmp.lt.s32.totalorder %v177, 0
        %vm300 = vcmp.lt.s32.totalorder %v184, 0
        %vm301 = vcmp.lt.s32.totalorder %v191, 0
        %vm302 = vcmp.lt.s32.totalorder %v198, 0
        %vm303 = vcmp.lt.s32.totalorder %v205, 0
        %vm304 = vcmp.lt.s32.totalorder %v212, 0
        %vm305 = vcmp.lt.s32.totalorder %v219, 0
        %vm306 = vcmp.lt.s32.totalorder %v226, 0
        %vm307 = vcmp.lt.s32.totalorder %v233, 0
        %vm308 = vcmp.lt.s32.totalorder %v240, 0
        %vm309 = vcmp.lt.s32.totalorder %v247, 0
        %vm310 = vcmp.lt.s32.totalorder %v254, 0
        %vm311 = vcmp.lt.s32.totalorder %v261, 0
        %vm312 = vcmp.lt.s32.totalorder %v268, 0
        %vm313 = vcmp.lt.s32.totalorder %v275, 0
        %vm314 = vcmp.lt.s32.totalorder %v282, 0
        %vm315 = vmand %vm299, %vm283
        %vm316 = vmand %vm300, %vm284
        %vm317 = vmand %vm301, %vm285
        %vm318 = vmand %vm302, %vm286
        %vm319 = vmand %vm303, %vm287
        %vm320 = vmand %vm304, %vm288
        %vm321 = vmand %vm305, %vm289
        %vm322 = vmand %vm306, %vm290
        %vm323 = vmand %vm307, %vm291
        %vm324 = vmand %vm308, %vm292
        %vm325 = vmand %vm309, %vm293
        %vm326 = vmand %vm310, %vm294
        %vm327 = vmand %vm311, %vm295
        %vm328 = vmand %vm312, %vm296
        %vm329 = vmand %vm313, %vm297
        %vm330 = vmand %vm314, %vm298
        %v331 = vadd.s32 %v177, 16
        %v332 = vadd.s32 %v184, 16
        %v333 = vadd.s32 %v191, 16
        %v334 = vadd.s32 %v198, 16
        %v335 = vadd.s32 %v205, 16
        %v336 = vadd.s32 %v212, 16
        %v337 = vadd.s32 %v219, 16
        %v338 = vadd.s32 %v226, 16
        %v339 = vadd.s32 %v233, 16
        %v340 = vadd.s32 %v240, 16
        %v341 = vadd.s32 %v247, 16
        %v342 = vadd.s32 %v254, 16
        %v343 = vadd.s32 %v261, 16
        %v344 = vadd.s32 %v268, 16
        %v345 = vadd.s32 %v275, 16
        %v346 = vadd.s32 %v282, 16
        %v347 = vsel %vm315, %v331, %v177
        %v348 = vsel %vm316, %v332, %v184
        %v349 = vsel %vm317, %v333, %v191
        %v350 = vsel %vm318, %v334, %v198
        %v351 = vsel %vm319, %v335, %v205
        %v352 = vsel %vm320, %v336, %v212
        %v353 = vsel %vm321, %v337, %v219
        %v354 = vsel %vm322, %v338, %v226
        %v355 = vsel %vm323, %v339, %v233
        %v356 = vsel %vm324, %v340, %v240
        %v357 = vsel %vm325, %v341, %v247
        %v358 = vsel %vm326, %v342, %v254
        %v359 = vsel %vm327, %v343, %v261
        %v360 = vsel %vm328, %v344, %v268
        %v361 = vsel %vm329, %v345, %v275
        %v362 = vsel %vm330, %v346, %v282
        %vm363 = vcmp.lt.s32.totalorder %v347, 8
        %vm364 = vcmp.lt.s32.totalorder %v348, 8
        %vm365 = vcmp.lt.s32.totalorder %v349, 8
        %vm366 = vcmp.lt.s32.totalorder %v350, 8
        %vm367 = vcmp.lt.s32.totalorder %v351, 8
        %vm368 = vcmp.lt.s32.totalorder %v352, 8
        %vm369 = vcmp.lt.s32.totalorder %v353, 8
        %vm370 = vcmp.lt.s32.totalorder %v354, 8
        %vm371 = vcmp.lt.s32.totalorder %v355, 8
        %vm372 = vcmp.lt.s32.totalorder %v356, 8
        %vm373 = vcmp.lt.s32.totalorder %v357, 8
        %vm374 = vcmp.lt.s32.totalorder %v358, 8
        %vm375 = vcmp.lt.s32.totalorder %v359, 8
        %vm376 = vcmp.lt.s32.totalorder %v360, 8
        %vm377 = vcmp.lt.s32.totalorder %v361, 8
        %vm378 = vcmp.lt.s32.totalorder %v362, 8
        %v379 = vsel %vm363, %v120, 0.0
        %v380 = vsel %vm364, %v121, 0.0
        %v381 = vsel %vm365, %v122, 0.0
        %v382 = vsel %vm366, %v123, 0.0
        %v383 = vsel %vm367, %v124, 0.0
        %v384 = vsel %vm368, %v125, 0.0
        %v385 = vsel %vm369, %v126, 0.0
        %v386 = vsel %vm370, %v127, 0.0
        %v387 = vsel %vm371, %v128, 0.0
        %v388 = vsel %vm372, %v129, 0.0
        %v389 = vsel %vm373, %v130, 0.0
        %v390 = vsel %vm374, %v131, 0.0
        %v391 = vsel %vm375, %v132, 0.0
        %v392 = vsel %vm376, %v133, 0.0
        %v393 = vsel %vm377, %v134, 0.0
        %v394 = vsel %vm378, %v135, 0.0
        %v395 = vld [vmem:[#allocation2] sm:$0xff]
        %396 = vmatpush.xpose.msra.mxu0 0.0
        %397 = vmatpush.xpose.msra.mxu0 0.0
        %398 = vmatpush.xpose.msra.mxu0 0.0
        %399 = vmatpush.xpose.msra.mxu0 0.0
        %400 = vmatpush.xpose.msra.mxu0 0.0
        %401 = vmatpush.xpose.msra.mxu0 0.0
        %402 = vmatpush.xpose.msra.mxu0 0.0
        %403 = vmatpush.xpose.msra.mxu0 0.0
        %404 = vmatpush.xpose.msra.mxu0 0.0
        %405 = vmatpush.xpose.msra.mxu0 0.0
        %406 = vmatpush.xpose.msra.mxu0 0.0
        %407 = vmatpush.xpose.msra.mxu0 0.0
        %408 = vmatpush.xpose.msra.mxu0 0.0
        %409 = vmatpush.xpose.msra.mxu0 0.0
        %410 = vmatpush.xpose.msra.mxu0 0.0
        %411 = vmatpush.xpose.msra.mxu0 %v120
        %412 = vmatmul.f32.gmra.mxu0 %v379
        %v413 = vpop.f32.mrf.mxu0
        %v414 = vadd.f32 0.0, %v413
        %415 = vdwg.mxu0
        %416 = vmatpush.xpose.msra.mxu0 0.0
        %417 = vmatpush.xpose.msra.mxu0 0.0
        %418 = vmatpush.xpose.msra.mxu0 0.0
        %419 = vmatpush.xpose.msra.mxu0 0.0
        %420 = vmatpush.xpose.msra.mxu0 0.0
        %421 = vmatpush.xpose.msra.mxu0 0.0
        %422 = vmatpush.xpose.msra.mxu0 0.0
        %423 = vmatpush.xpose.msra.mxu0 0.0
        %424 = vmatpush.xpose.msra.mxu0 0.0
        %425 = vmatpush.xpose.msra.mxu0 0.0
        %426 = vmatpush.xpose.msra.mxu0 0.0
        %427 = vmatpush.xpose.msra.mxu0 0.0
        %428 = vmatpush.xpose.msra.mxu0 0.0
        %429 = vmatpush.xpose.msra.mxu0 0.0
        %430 = vmatpush.xpose.msra.mxu0 0.0
        %431 = vmatpush.xpose.msra.mxu0 %v121
        %432 = vmatmul.f32.gmra.mxu0 %v380
        %v433 = vpop.f32.mrf.mxu0
        %v434 = vadd.f32 %v414, %v433
        %435 = vdwg.mxu0
        %436 = vmatpush.xpose.msra.mxu0 0.0
        %437 = vmatpush.xpose.msra.mxu0 0.0
        %438 = vmatpush.xpose.msra.mxu0 0.0
        %439 = vmatpush.xpose.msra.mxu0 0.0
        %440 = vmatpush.xpose.msra.mxu0 0.0
        %441 = vmatpush.xpose.msra.mxu0 0.0
        %442 = vmatpush.xpose.msra.mxu0 0.0
        %443 = vmatpush.xpose.msra.mxu0 0.0
        %444 = vmatpush.xpose.msra.mxu0 0.0
        %445 = vmatpush.xpose.msra.mxu0 0.0
        %446 = vmatpush.xpose.msra.mxu0 0.0
        %447 = vmatpush.xpose.msra.mxu0 0.0
        %448 = vmatpush.xpose.msra.mxu0 0.0
        %449 = vmatpush.xpose.msra.mxu0 0.0
        %450 = vmatpush.xpose.msra.mxu0 0.0
        %451 = vmatpush.xpose.msra.mxu0 %v122
        %452 = vmatmul.f32.gmra.mxu0 %v381
        %v453 = vpop.f32.mrf.mxu0
        %v454 = vadd.f32 %v434, %v453
        %455 = vdwg.mxu0
        %456 = vmatpush.xpose.msra.mxu0 0.0
        %457 = vmatpush.xpose.msra.mxu0 0.0
        %458 = vmatpush.xpose.msra.mxu0 0.0
        %459 = vmatpush.xpose.msra.mxu0 0.0
        %460 = vmatpush.xpose.msra.mxu0 0.0
        %461 = vmatpush.xpose.msra.mxu0 0.0
        %462 = vmatpush.xpose.msra.mxu0 0.0
        %463 = vmatpush.xpose.msra.mxu0 0.0
        %464 = vmatpush.xpose.msra.mxu0 0.0
        %465 = vmatpush.xpose.msra.mxu0 0.0
        %466 = vmatpush.xpose.msra.mxu0 0.0
        %467 = vmatpush.xpose.msra.mxu0 0.0
        %468 = vmatpush.xpose.msra.mxu0 0.0
        %469 = vmatpush.xpose.msra.mxu0 0.0
        %470 = vmatpush.xpose.msra.mxu0 0.0
        %471 = vmatpush.xpose.msra.mxu0 %v123
        %472 = vmatmul.f32.gmra.mxu0 %v382
        %v473 = vpop.f32.mrf.mxu0
        %v474 = vadd.f32 %v454, %v473
        %475 = vdwg.mxu0
        %476 = vmatpush.xpose.msra.mxu0 0.0
        %477 = vmatpush.xpose.msra.mxu0 0.0
        %478 = vmatpush.xpose.msra.mxu0 0.0
        %479 = vmatpush.xpose.msra.mxu0 0.0
        %480 = vmatpush.xpose.msra.mxu0 0.0
        %481 = vmatpush.xpose.msra.mxu0 0.0
        %482 = vmatpush.xpose.msra.mxu0 0.0
        %483 = vmatpush.xpose.msra.mxu0 0.0
        %484 = vmatpush.xpose.msra.mxu0 0.0
        %485 = vmatpush.xpose.msra.mxu0 0.0
        %486 = vmatpush.xpose.msra.mxu0 0.0
        %487 = vmatpush.xpose.msra.mxu0 0.0
        %488 = vmatpush.xpose.msra.mxu0 0.0
        %489 = vmatpush.xpose.msra.mxu0 0.0
        %490 = vmatpush.xpose.msra.mxu0 0.0
        %491 = vmatpush.xpose.msra.mxu0 %v124
        %492 = vmatmul.f32.gmra.mxu0 %v383
        %v493 = vpop.f32.mrf.mxu0
        %v494 = vadd.f32 %v474, %v493
        %495 = vdwg.mxu0
        %496 = vmatpush.xpose.msra.mxu0 0.0
        %497 = vmatpush.xpose.msra.mxu0 0.0
        %498 = vmatpush.xpose.msra.mxu0 0.0
        %499 = vmatpush.xpose.msra.mxu0 0.0
        %500 = vmatpush.xpose.msra.mxu0 0.0
        %501 = vmatpush.xpose.msra.mxu0 0.0
        %502 = vmatpush.xpose.msra.mxu0 0.0
        %503 = vmatpush.xpose.msra.mxu0 0.0
        %504 = vmatpush.xpose.msra.mxu0 0.0
        %505 = vmatpush.xpose.msra.mxu0 0.0
        %506 = vmatpush.xpose.msra.mxu0 0.0
        %507 = vmatpush.xpose.msra.mxu0 0.0
        %508 = vmatpush.xpose.msra.mxu0 0.0
        %509 = vmatpush.xpose.msra.mxu0 0.0
        %510 = vmatpush.xpose.msra.mxu0 0.0
        %511 = vmatpush.xpose.msra.mxu0 %v125
        %512 = vmatmul.f32.gmra.mxu0 %v384
        %v513 = vpop.f32.mrf.mxu0
        %v514 = vadd.f32 %v494, %v513
        %515 = vdwg.mxu0
        %516 = vmatpush.xpose.msra.mxu0 0.0
        %517 = vmatpush.xpose.msra.mxu0 0.0
        %518 = vmatpush.xpose.msra.mxu0 0.0
        %519 = vmatpush.xpose.msra.mxu0 0.0
        %520 = vmatpush.xpose.msra.mxu0 0.0
        %521 = vmatpush.xpose.msra.mxu0 0.0
        %522 = vmatpush.xpose.msra.mxu0 0.0
        %523 = vmatpush.xpose.msra.mxu0 0.0
        %524 = vmatpush.xpose.msra.mxu0 0.0
        %525 = vmatpush.xpose.msra.mxu0 0.0
        %526 = vmatpush.xpose.msra.mxu0 0.0
        %527 = vmatpush.xpose.msra.mxu0 0.0
        %528 = vmatpush.xpose.msra.mxu0 0.0
        %529 = vmatpush.xpose.msra.mxu0 0.0
        %530 = vmatpush.xpose.msra.mxu0 0.0
        %531 = vmatpush.xpose.msra.mxu0 %v126
        %532 = vmatmul.f32.gmra.mxu0 %v385
        %v533 = vpop.f32.mrf.mxu0
        %v534 = vadd.f32 %v514, %v533
        %535 = vdwg.mxu0
        %536 = vmatpush.xpose.msra.mxu0 0.0
        %537 = vmatpush.xpose.msra.mxu0 0.0
        %538 = vmatpush.xpose.msra.mxu0 0.0
        %539 = vmatpush.xpose.msra.mxu0 0.0
        %540 = vmatpush.xpose.msra.mxu0 0.0
        %541 = vmatpush.xpose.msra.mxu0 0.0
        %542 = vmatpush.xpose.msra.mxu0 0.0
        %543 = vmatpush.xpose.msra.mxu0 0.0
        %544 = vmatpush.xpose.msra.mxu0 0.0
        %545 = vmatpush.xpose.msra.mxu0 0.0
        %546 = vmatpush.xpose.msra.mxu0 0.0
        %547 = vmatpush.xpose.msra.mxu0 0.0
        %548 = vmatpush.xpose.msra.mxu0 0.0
        %549 = vmatpush.xpose.msra.mxu0 0.0
        %550 = vmatpush.xpose.msra.mxu0 0.0
        %551 = vmatpush.xpose.msra.mxu0 %v127
        %552 = vmatmul.f32.gmra.mxu0 %v386
        %v553 = vpop.f32.mrf.mxu0
        %v554 = vadd.f32 %v534, %v553
        %555 = vdwg.mxu0
        %556 = vmatpush.xpose.msra.mxu0 0.0
        %557 = vmatpush.xpose.msra.mxu0 0.0
        %558 = vmatpush.xpose.msra.mxu0 0.0
        %559 = vmatpush.xpose.msra.mxu0 0.0
        %560 = vmatpush.xpose.msra.mxu0 0.0
        %561 = vmatpush.xpose.msra.mxu0 0.0
        %562 = vmatpush.xpose.msra.mxu0 0.0
        %563 = vmatpush.xpose.msra.mxu0 0.0
        %564 = vmatpush.xpose.msra.mxu0 0.0
        %565 = vmatpush.xpose.msra.mxu0 0.0
        %566 = vmatpush.xpose.msra.mxu0 0.0
        %567 = vmatpush.xpose.msra.mxu0 0.0
        %568 = vmatpush.xpose.msra.mxu0 0.0
        %569 = vmatpush.xpose.msra.mxu0 0.0
        %570 = vmatpush.xpose.msra.mxu0 0.0
        %571 = vmatpush.xpose.msra.mxu0 %v128
        %572 = vmatmul.f32.gmra.mxu0 %v387
        %v573 = vpop.f32.mrf.mxu0
        %v574 = vadd.f32 %v554, %v573
        %575 = vdwg.mxu0
        %576 = vmatpush.xpose.msra.mxu0 0.0
        %577 = vmatpush.xpose.msra.mxu0 0.0
        %578 = vmatpush.xpose.msra.mxu0 0.0
        %579 = vmatpush.xpose.msra.mxu0 0.0
        %580 = vmatpush.xpose.msra.mxu0 0.0
        %581 = vmatpush.xpose.msra.mxu0 0.0
        %582 = vmatpush.xpose.msra.mxu0 0.0
        %583 = vmatpush.xpose.msra.mxu0 0.0
        %584 = vmatpush.xpose.msra.mxu0 0.0
        %585 = vmatpush.xpose.msra.mxu0 0.0
        %586 = vmatpush.xpose.msra.mxu0 0.0
        %587 = vmatpush.xpose.msra.mxu0 0.0
        %588 = vmatpush.xpose.msra.mxu0 0.0
        %589 = vmatpush.xpose.msra.mxu0 0.0
        %590 = vmatpush.xpose.msra.mxu0 0.0
        %591 = vmatpush.xpose.msra.mxu0 %v129
        %592 = vmatmul.f32.gmra.mxu0 %v388
        %v593 = vpop.f32.mrf.mxu0
        %v594 = vadd.f32 %v574, %v593
        %595 = vdwg.mxu0
        %596 = vmatpush.xpose.msra.mxu0 0.0
        %597 = vmatpush.xpose.msra.mxu0 0.0
        %598 = vmatpush.xpose.msra.mxu0 0.0
        %599 = vmatpush.xpose.msra.mxu0 0.0
        %600 = vmatpush.xpose.msra.mxu0 0.0
        %601 = vmatpush.xpose.msra.mxu0 0.0
        %602 = vmatpush.xpose.msra.mxu0 0.0
        %603 = vmatpush.xpose.msra.mxu0 0.0
        %604 = vmatpush.xpose.msra.mxu0 0.0
        %605 = vmatpush.xpose.msra.mxu0 0.0
        %606 = vmatpush.xpose.msra.mxu0 0.0
        %607 = vmatpush.xpose.msra.mxu0 0.0
        %608 = vmatpush.xpose.msra.mxu0 0.0
        %609 = vmatpush.xpose.msra.mxu0 0.0
        %610 = vmatpush.xpose.msra.mxu0 0.0
        %611 = vmatpush.xpose.msra.mxu0 %v130
        %612 = vmatmul.f32.gmra.mxu0 %v389
        %v613 = vpop.f32.mrf.mxu0
        %v614 = vadd.f32 %v594, %v613
        %615 = vdwg.mxu0
        %616 = vmatpush.xpose.msra.mxu0 0.0
        %617 = vmatpush.xpose.msra.mxu0 0.0
        %618 = vmatpush.xpose.msra.mxu0 0.0
        %619 = vmatpush.xpose.msra.mxu0 0.0
        %620 = vmatpush.xpose.msra.mxu0 0.0
        %621 = vmatpush.xpose.msra.mxu0 0.0
        %622 = vmatpush.xpose.msra.mxu0 0.0
        %623 = vmatpush.xpose.msra.mxu0 0.0
        %624 = vmatpush.xpose.msra.mxu0 0.0
        %625 = vmatpush.xpose.msra.mxu0 0.0
        %626 = vmatpush.xpose.msra.mxu0 0.0
        %627 = vmatpush.xpose.msra.mxu0 0.0
        %628 = vmatpush.xpose.msra.mxu0 0.0
        %629 = vmatpush.xpose.msra.mxu0 0.0
        %630 = vmatpush.xpose.msra.mxu0 0.0
        %631 = vmatpush.xpose.msra.mxu0 %v131
        %632 = vmatmul.f32.gmra.mxu0 %v390
        %v633 = vpop.f32.mrf.mxu0
        %v634 = vadd.f32 %v614, %v633
        %635 = vdwg.mxu0
        %636 = vmatpush.xpose.msra.mxu0 0.0
        %637 = vmatpush.xpose.msra.mxu0 0.0
        %638 = vmatpush.xpose.msra.mxu0 0.0
        %639 = vmatpush.xpose.msra.mxu0 0.0
        %640 = vmatpush.xpose.msra.mxu0 0.0
        %641 = vmatpush.xpose.msra.mxu0 0.0
        %642 = vmatpush.xpose.msra.mxu0 0.0
        %643 = vmatpush.xpose.msra.mxu0 0.0
        %644 = vmatpush.xpose.msra.mxu0 0.0
        %645 = vmatpush.xpose.msra.mxu0 0.0
        %646 = vmatpush.xpose.msra.mxu0 0.0
        %647 = vmatpush.xpose.msra.mxu0 0.0
        %648 = vmatpush.xpose.msra.mxu0 0.0
        %649 = vmatpush.xpose.msra.mxu0 0.0
        %650 = vmatpush.xpose.msra.mxu0 0.0
        %651 = vmatpush.xpose.msra.mxu0 %v132
        %652 = vmatmul.f32.gmra.mxu0 %v391
        %v653 = vpop.f32.mrf.mxu0
        %v654 = vadd.f32 %v634, %v653
        %655 = vdwg.mxu0
        %656 = vmatpush.xpose.msra.mxu0 0.0
        %657 = vmatpush.xpose.msra.mxu0 0.0
        %658 = vmatpush.xpose.msra.mxu0 0.0
        %659 = vmatpush.xpose.msra.mxu0 0.0
        %660 = vmatpush.xpose.msra.mxu0 0.0
        %661 = vmatpush.xpose.msra.mxu0 0.0
        %662 = vmatpush.xpose.msra.mxu0 0.0
        %663 = vmatpush.xpose.msra.mxu0 0.0
        %664 = vmatpush.xpose.msra.mxu0 0.0
        %665 = vmatpush.xpose.msra.mxu0 0.0
        %666 = vmatpush.xpose.msra.mxu0 0.0
        %667 = vmatpush.xpose.msra.mxu0 0.0
        %668 = vmatpush.xpose.msra.mxu0 0.0
        %669 = vmatpush.xpose.msra.mxu0 0.0
        %670 = vmatpush.xpose.msra.mxu0 0.0
        %671 = vmatpush.xpose.msra.mxu0 %v133
        %672 = vmatmul.f32.gmra.mxu0 %v392
        %v673 = vpop.f32.mrf.mxu0
        %v674 = vadd.f32 %v654, %v673
        %675 = vdwg.mxu0
        %676 = vmatpush.xpose.msra.mxu0 0.0
        %677 = vmatpush.xpose.msra.mxu0 0.0
        %678 = vmatpush.xpose.msra.mxu0 0.0
        %679 = vmatpush.xpose.msra.mxu0 0.0
        %680 = vmatpush.xpose.msra.mxu0 0.0
        %681 = vmatpush.xpose.msra.mxu0 0.0
        %682 = vmatpush.xpose.msra.mxu0 0.0
        %683 = vmatpush.xpose.msra.mxu0 0.0
        %684 = vmatpush.xpose.msra.mxu0 0.0
        %685 = vmatpush.xpose.msra.mxu0 0.0
        %686 = vmatpush.xpose.msra.mxu0 0.0
        %687 = vmatpush.xpose.msra.mxu0 0.0
        %688 = vmatpush.xpose.msra.mxu0 0.0
        %689 = vmatpush.xpose.msra.mxu0 0.0
        %690 = vmatpush.xpose.msra.mxu0 0.0
        %691 = vmatpush.xpose.msra.mxu0 %v134
        %692 = vmatmul.f32.gmra.mxu0 %v393
        %v693 = vpop.f32.mrf.mxu0
        %v694 = vadd.f32 %v674, %v693
        %695 = vdwg.mxu0
        %696 = vmatpush.xpose.msra.mxu0 0.0
        %697 = vmatpush.xpose.msra.mxu0 0.0
        %698 = vmatpush.xpose.msra.mxu0 0.0
        %699 = vmatpush.xpose.msra.mxu0 0.0
        %700 = vmatpush.xpose.msra.mxu0 0.0
        %701 = vmatpush.xpose.msra.mxu0 0.0
        %702 = vmatpush.xpose.msra.mxu0 0.0
        %703 = vmatpush.xpose.msra.mxu0 0.0
        %704 = vmatpush.xpose.msra.mxu0 0.0
        %705 = vmatpush.xpose.msra.mxu0 0.0
        %706 = vmatpush.xpose.msra.mxu0 0.0
        %707 = vmatpush.xpose.msra.mxu0 0.0
        %708 = vmatpush.xpose.msra.mxu0 0.0
        %709 = vmatpush.xpose.msra.mxu0 0.0
        %710 = vmatpush.xpose.msra.mxu0 0.0
        %711 = vmatpush.xpose.msra.mxu0 %v135
        %712 = vmatmul.f32.gmra.mxu0 %v394
        %v713 = vpop.f32.mrf.mxu0
        %v714 = vadd.f32 %v694, %v713
        %715 = vdwg.mxu0
        %v716 = vadd.f32 %v395, %v714
        %vm717 = vcmask 64512
        %718 = vst.msk [vmem:[#allocation2] sm:$0xff] %vm717, %v716
        %v719 = vld [vmem:[#allocation3] sm:$0xff]
        %v720 = vsub.f32 %v120, %v379
        %v721 = vsub.f32 %v121, %v380
        %v722 = vsub.f32 %v122, %v381
        %v723 = vsub.f32 %v123, %v382
        %v724 = vsub.f32 %v124, %v383
        %v725 = vsub.f32 %v125, %v384
        %v726 = vsub.f32 %v126, %v385
        %v727 = vsub.f32 %v127, %v386
        %v728 = vsub.f32 %v128, %v387
        %v729 = vsub.f32 %v129, %v388
        %v730 = vsub.f32 %v130, %v389
        %v731 = vsub.f32 %v131, %v390
        %v732 = vsub.f32 %v132, %v391
        %v733 = vsub.f32 %v133, %v392
        %v734 = vsub.f32 %v134, %v393
        %v735 = vsub.f32 %v135, %v394
        %736 = vmatpush.xpose.msra.mxu0 0.0
        %737 = vmatpush.xpose.msra.mxu0 0.0
        %738 = vmatpush.xpose.msra.mxu0 0.0
        %739 = vmatpush.xpose.msra.mxu0 0.0
        %740 = vmatpush.xpose.msra.mxu0 0.0
        %741 = vmatpush.xpose.msra.mxu0 0.0
        %742 = vmatpush.xpose.msra.mxu0 0.0
        %743 = vmatpush.xpose.msra.mxu0 0.0
        %744 = vmatpush.xpose.msra.mxu0 0.0
        %745 = vmatpush.xpose.msra.mxu0 0.0
        %746 = vmatpush.xpose.msra.mxu0 0.0
        %747 = vmatpush.xpose.msra.mxu0 0.0
        %748 = vmatpush.xpose.msra.mxu0 0.0
        %749 = vmatpush.xpose.msra.mxu0 0.0
        %750 = vmatpush.xpose.msra.mxu0 0.0
        %751 = vmatpush.xpose.msra.mxu0 %v120
        %752 = vmatmul.f32.gmra.mxu0 %v720
        %v753 = vpop.f32.mrf.mxu0
        %v754 = vadd.f32 0.0, %v753
        %755 = vdwg.mxu0
        %756 = vmatpush.xpose.msra.mxu0 0.0
        %757 = vmatpush.xpose.msra.mxu0 0.0
        %758 = vmatpush.xpose.msra.mxu0 0.0
        %759 = vmatpush.xpose.msra.mxu0 0.0
        %760 = vmatpush.xpose.msra.mxu0 0.0
        %761 = vmatpush.xpose.msra.mxu0 0.0
        %762 = vmatpush.xpose.msra.mxu0 0.0
        %763 = vmatpush.xpose.msra.mxu0 0.0
        %764 = vmatpush.xpose.msra.mxu0 0.0
        %765 = vmatpush.xpose.msra.mxu0 0.0
        %766 = vmatpush.xpose.msra.mxu0 0.0
        %767 = vmatpush.xpose.msra.mxu0 0.0
        %768 = vmatpush.xpose.msra.mxu0 0.0
        %769 = vmatpush.xpose.msra.mxu0 0.0
        %770 = vmatpush.xpose.msra.mxu0 0.0
        %771 = vmatpush.xpose.msra.mxu0 %v121
        %772 = vmatmul.f32.gmra.mxu0 %v721
        %v773 = vpop.f32.mrf.mxu0
        %v774 = vadd.f32 %v754, %v773
        %775 = vdwg.mxu0
        %776 = vmatpush.xpose.msra.mxu0 0.0
        %777 = vmatpush.xpose.msra.mxu0 0.0
        %778 = vmatpush.xpose.msra.mxu0 0.0
        %779 = vmatpush.xpose.msra.mxu0 0.0
        %780 = vmatpush.xpose.msra.mxu0 0.0
        %781 = vmatpush.xpose.msra.mxu0 0.0
        %782 = vmatpush.xpose.msra.mxu0 0.0
        %783 = vmatpush.xpose.msra.mxu0 0.0
        %784 = vmatpush.xpose.msra.mxu0 0.0
        %785 = vmatpush.xpose.msra.mxu0 0.0
        %786 = vmatpush.xpose.msra.mxu0 0.0
        %787 = vmatpush.xpose.msra.mxu0 0.0
        %788 = vmatpush.xpose.msra.mxu0 0.0
        %789 = vmatpush.xpose.msra.mxu0 0.0
        %790 = vmatpush.xpose.msra.mxu0 0.0
        %791 = vmatpush.xpose.msra.mxu0 %v122
        %792 = vmatmul.f32.gmra.mxu0 %v722
        %v793 = vpop.f32.mrf.mxu0
        %v794 = vadd.f32 %v774, %v793
        %795 = vdwg.mxu0
        %796 = vmatpush.xpose.msra.mxu0 0.0
        %797 = vmatpush.xpose.msra.mxu0 0.0
        %798 = vmatpush.xpose.msra.mxu0 0.0
        %799 = vmatpush.xpose.msra.mxu0 0.0
        %800 = vmatpush.xpose.msra.mxu0 0.0
        %801 = vmatpush.xpose.msra.mxu0 0.0
        %802 = vmatpush.xpose.msra.mxu0 0.0
        %803 = vmatpush.xpose.msra.mxu0 0.0
        %804 = vmatpush.xpose.msra.mxu0 0.0
        %805 = vmatpush.xpose.msra.mxu0 0.0
        %806 = vmatpush.xpose.msra.mxu0 0.0
        %807 = vmatpush.xpose.msra.mxu0 0.0
        %808 = vmatpush.xpose.msra.mxu0 0.0
        %809 = vmatpush.xpose.msra.mxu0 0.0
        %810 = vmatpush.xpose.msra.mxu0 0.0
        %811 = vmatpush.xpose.msra.mxu0 %v123
        %812 = vmatmul.f32.gmra.mxu0 %v723
        %v813 = vpop.f32.mrf.mxu0
        %v814 = vadd.f32 %v794, %v813
        %815 = vdwg.mxu0
        %816 = vmatpush.xpose.msra.mxu0 0.0
        %817 = vmatpush.xpose.msra.mxu0 0.0
        %818 = vmatpush.xpose.msra.mxu0 0.0
        %819 = vmatpush.xpose.msra.mxu0 0.0
        %820 = vmatpush.xpose.msra.mxu0 0.0
        %821 = vmatpush.xpose.msra.mxu0 0.0
        %822 = vmatpush.xpose.msra.mxu0 0.0
        %823 = vmatpush.xpose.msra.mxu0 0.0
        %824 = vmatpush.xpose.msra.mxu0 0.0
        %825 = vmatpush.xpose.msra.mxu0 0.0
        %826 = vmatpush.xpose.msra.mxu0 0.0
        %827 = vmatpush.xpose.msra.mxu0 0.0
        %828 = vmatpush.xpose.msra.mxu0 0.0
        %829 = vmatpush.xpose.msra.mxu0 0.0
        %830 = vmatpush.xpose.msra.mxu0 0.0
        %831 = vmatpush.xpose.msra.mxu0 %v124
        %832 = vmatmul.f32.gmra.mxu0 %v724
        %v833 = vpop.f32.mrf.mxu0
        %v834 = vadd.f32 %v814, %v833
        %835 = vdwg.mxu0
        %836 = vmatpush.xpose.msra.mxu0 0.0
        %837 = vmatpush.xpose.msra.mxu0 0.0
        %838 = vmatpush.xpose.msra.mxu0 0.0
        %839 = vmatpush.xpose.msra.mxu0 0.0
        %840 = vmatpush.xpose.msra.mxu0 0.0
        %841 = vmatpush.xpose.msra.mxu0 0.0
        %842 = vmatpush.xpose.msra.mxu0 0.0
        %843 = vmatpush.xpose.msra.mxu0 0.0
        %844 = vmatpush.xpose.msra.mxu0 0.0
        %845 = vmatpush.xpose.msra.mxu0 0.0
        %846 = vmatpush.xpose.msra.mxu0 0.0
        %847 = vmatpush.xpose.msra.mxu0 0.0
        %848 = vmatpush.xpose.msra.mxu0 0.0
        %849 = vmatpush.xpose.msra.mxu0 0.0
        %850 = vmatpush.xpose.msra.mxu0 0.0
        %851 = vmatpush.xpose.msra.mxu0 %v125
        %852 = vmatmul.f32.gmra.mxu0 %v725
        %v853 = vpop.f32.mrf.mxu0
        %v854 = vadd.f32 %v834, %v853
        %855 = vdwg.mxu0
        %856 = vmatpush.xpose.msra.mxu0 0.0
        %857 = vmatpush.xpose.msra.mxu0 0.0
        %858 = vmatpush.xpose.msra.mxu0 0.0
        %859 = vmatpush.xpose.msra.mxu0 0.0
        %860 = vmatpush.xpose.msra.mxu0 0.0
        %861 = vmatpush.xpose.msra.mxu0 0.0
        %862 = vmatpush.xpose.msra.mxu0 0.0
        %863 = vmatpush.xpose.msra.mxu0 0.0
        %864 = vmatpush.xpose.msra.mxu0 0.0
        %865 = vmatpush.xpose.msra.mxu0 0.0
        %866 = vmatpush.xpose.msra.mxu0 0.0
        %867 = vmatpush.xpose.msra.mxu0 0.0
        %868 = vmatpush.xpose.msra.mxu0 0.0
        %869 = vmatpush.xpose.msra.mxu0 0.0
        %870 = vmatpush.xpose.msra.mxu0 0.0
        %871 = vmatpush.xpose.msra.mxu0 %v126
        %872 = vmatmul.f32.gmra.mxu0 %v726
        %v873 = vpop.f32.mrf.mxu0
        %v874 = vadd.f32 %v854, %v873
        %875 = vdwg.mxu0
        %876 = vmatpush.xpose.msra.mxu0 0.0
        %877 = vmatpush.xpose.msra.mxu0 0.0
        %878 = vmatpush.xpose.msra.mxu0 0.0
        %879 = vmatpush.xpose.msra.mxu0 0.0
        %880 = vmatpush.xpose.msra.mxu0 0.0
        %881 = vmatpush.xpose.msra.mxu0 0.0
        %882 = vmatpush.xpose.msra.mxu0 0.0
        %883 = vmatpush.xpose.msra.mxu0 0.0
        %884 = vmatpush.xpose.msra.mxu0 0.0
        %885 = vmatpush.xpose.msra.mxu0 0.0
        %886 = vmatpush.xpose.msra.mxu0 0.0
        %887 = vmatpush.xpose.msra.mxu0 0.0
        %888 = vmatpush.xpose.msra.mxu0 0.0
        %889 = vmatpush.xpose.msra.mxu0 0.0
        %890 = vmatpush.xpose.msra.mxu0 0.0
        %891 = vmatpush.xpose.msra.mxu0 %v127
        %892 = vmatmul.f32.gmra.mxu0 %v727
        %v893 = vpop.f32.mrf.mxu0
        %v894 = vadd.f32 %v874, %v893
        %895 = vdwg.mxu0
        %896 = vmatpush.xpose.msra.mxu0 0.0
        %897 = vmatpush.xpose.msra.mxu0 0.0
        %898 = vmatpush.xpose.msra.mxu0 0.0
        %899 = vmatpush.xpose.msra.mxu0 0.0
        %900 = vmatpush.xpose.msra.mxu0 0.0
        %901 = vmatpush.xpose.msra.mxu0 0.0
        %902 = vmatpush.xpose.msra.mxu0 0.0
        %903 = vmatpush.xpose.msra.mxu0 0.0
        %904 = vmatpush.xpose.msra.mxu0 0.0
        %905 = vmatpush.xpose.msra.mxu0 0.0
        %906 = vmatpush.xpose.msra.mxu0 0.0
        %907 = vmatpush.xpose.msra.mxu0 0.0
        %908 = vmatpush.xpose.msra.mxu0 0.0
        %909 = vmatpush.xpose.msra.mxu0 0.0
        %910 = vmatpush.xpose.msra.mxu0 0.0
        %911 = vmatpush.xpose.msra.mxu0 %v128
        %912 = vmatmul.f32.gmra.mxu0 %v728
        %v913 = vpop.f32.mrf.mxu0
        %v914 = vadd.f32 %v894, %v913
        %915 = vdwg.mxu0
        %916 = vmatpush.xpose.msra.mxu0 0.0
        %917 = vmatpush.xpose.msra.mxu0 0.0
        %918 = vmatpush.xpose.msra.mxu0 0.0
        %919 = vmatpush.xpose.msra.mxu0 0.0
        %920 = vmatpush.xpose.msra.mxu0 0.0
        %921 = vmatpush.xpose.msra.mxu0 0.0
        %922 = vmatpush.xpose.msra.mxu0 0.0
        %923 = vmatpush.xpose.msra.mxu0 0.0
        %924 = vmatpush.xpose.msra.mxu0 0.0
        %925 = vmatpush.xpose.msra.mxu0 0.0
        %926 = vmatpush.xpose.msra.mxu0 0.0
        %927 = vmatpush.xpose.msra.mxu0 0.0
        %928 = vmatpush.xpose.msra.mxu0 0.0
        %929 = vmatpush.xpose.msra.mxu0 0.0
        %930 = vmatpush.xpose.msra.mxu0 0.0
        %931 = vmatpush.xpose.msra.mxu0 %v129
        %932 = vmatmul.f32.gmra.mxu0 %v729
        %v933 = vpop.f32.mrf.mxu0
        %v934 = vadd.f32 %v914, %v933
        %935 = vdwg.mxu0
        %936 = vmatpush.xpose.msra.mxu0 0.0
        %937 = vmatpush.xpose.msra.mxu0 0.0
        %938 = vmatpush.xpose.msra.mxu0 0.0
        %939 = vmatpush.xpose.msra.mxu0 0.0
        %940 = vmatpush.xpose.msra.mxu0 0.0
        %941 = vmatpush.xpose.msra.mxu0 0.0
        %942 = vmatpush.xpose.msra.mxu0 0.0
        %943 = vmatpush.xpose.msra.mxu0 0.0
        %944 = vmatpush.xpose.msra.mxu0 0.0
        %945 = vmatpush.xpose.msra.mxu0 0.0
        %946 = vmatpush.xpose.msra.mxu0 0.0
        %947 = vmatpush.xpose.msra.mxu0 0.0
        %948 = vmatpush.xpose.msra.mxu0 0.0
        %949 = vmatpush.xpose.msra.mxu0 0.0
        %950 = vmatpush.xpose.msra.mxu0 0.0
        %951 = vmatpush.xpose.msra.mxu0 %v130
        %952 = vmatmul.f32.gmra.mxu0 %v730
        %v953 = vpop.f32.mrf.mxu0
        %v954 = vadd.f32 %v934, %v953
        %955 = vdwg.mxu0
        %956 = vmatpush.xpose.msra.mxu0 0.0
        %957 = vmatpush.xpose.msra.mxu0 0.0
        %958 = vmatpush.xpose.msra.mxu0 0.0
        %959 = vmatpush.xpose.msra.mxu0 0.0
        %960 = vmatpush.xpose.msra.mxu0 0.0
        %961 = vmatpush.xpose.msra.mxu0 0.0
        %962 = vmatpush.xpose.msra.mxu0 0.0
        %963 = vmatpush.xpose.msra.mxu0 0.0
        %964 = vmatpush.xpose.msra.mxu0 0.0
        %965 = vmatpush.xpose.msra.mxu0 0.0
        %966 = vmatpush.xpose.msra.mxu0 0.0
        %967 = vmatpush.xpose.msra.mxu0 0.0
        %968 = vmatpush.xpose.msra.mxu0 0.0
        %969 = vmatpush.xpose.msra.mxu0 0.0
        %970 = vmatpush.xpose.msra.mxu0 0.0
        %971 = vmatpush.xpose.msra.mxu0 %v131
        %972 = vmatmul.f32.gmra.mxu0 %v731
        %v973 = vpop.f32.mrf.mxu0
        %v974 = vadd.f32 %v954, %v973
        %975 = vdwg.mxu0
        %976 = vmatpush.xpose.msra.mxu0 0.0
        %977 = vmatpush.xpose.msra.mxu0 0.0
        %978 = vmatpush.xpose.msra.mxu0 0.0
        %979 = vmatpush.xpose.msra.mxu0 0.0
        %980 = vmatpush.xpose.msra.mxu0 0.0
        %981 = vmatpush.xpose.msra.mxu0 0.0
        %982 = vmatpush.xpose.msra.mxu0 0.0
        %983 = vmatpush.xpose.msra.mxu0 0.0
        %984 = vmatpush.xpose.msra.mxu0 0.0
        %985 = vmatpush.xpose.msra.mxu0 0.0
        %986 = vmatpush.xpose.msra.mxu0 0.0
        %987 = vmatpush.xpose.msra.mxu0 0.0
        %988 = vmatpush.xpose.msra.mxu0 0.0
        %989 = vmatpush.xpose.msra.mxu0 0.0
        %990 = vmatpush.xpose.msra.mxu0 0.0
        %991 = vmatpush.xpose.msra.mxu0 %v132
        %992 = vmatmul.f32.gmra.mxu0 %v732
        %v993 = vpop.f32.mrf.mxu0
        %v994 = vadd.f32 %v974, %v993
        %995 = vdwg.mxu0
        %996 = vmatpush.xpose.msra.mxu0 0.0
        %997 = vmatpush.xpose.msra.mxu0 0.0
        %998 = vmatpush.xpose.msra.mxu0 0.0
        %999 = vmatpush.xpose.msra.mxu0 0.0
        %1000 = vmatpush.xpose.msra.mxu0 0.0
        %1001 = vmatpush.xpose.msra.mxu0 0.0
        %1002 = vmatpush.xpose.msra.mxu0 0.0
        %1003 = vmatpush.xpose.msra.mxu0 0.0
        %1004 = vmatpush.xpose.msra.mxu0 0.0
        %1005 = vmatpush.xpose.msra.mxu0 0.0
        %1006 = vmatpush.xpose.msra.mxu0 0.0
        %1007 = vmatpush.xpose.msra.mxu0 0.0
        %1008 = vmatpush.xpose.msra.mxu0 0.0
        %1009 = vmatpush.xpose.msra.mxu0 0.0
        %1010 = vmatpush.xpose.msra.mxu0 0.0
        %1011 = vmatpush.xpose.msra.mxu0 %v133
        %1012 = vmatmul.f32.gmra.mxu0 %v733
        %v1013 = vpop.f32.mrf.mxu0
        %v1014 = vadd.f32 %v994, %v1013
        %1015 = vdwg.mxu0
        %1016 = vmatpush.xpose.msra.mxu0 0.0
        %1017 = vmatpush.xpose.msra.mxu0 0.0
        %1018 = vmatpush.xpose.msra.mxu0 0.0
        %1019 = vmatpush.xpose.msra.mxu0 0.0
        %1020 = vmatpush.xpose.msra.mxu0 0.0
        %1021 = vmatpush.xpose.msra.mxu0 0.0
        %1022 = vmatpush.xpose.msra.mxu0 0.0
        %1023 = vmatpush.xpose.msra.mxu0 0.0
        %1024 = vmatpush.xpose.msra.mxu0 0.0
        %1025 = vmatpush.xpose.msra.mxu0 0.0
        %1026 = vmatpush.xpose.msra.mxu0 0.0
        %1027 = vmatpush.xpose.msra.mxu0 0.0
        %1028 = vmatpush.xpose.msra.mxu0 0.0
        %1029 = vmatpush.xpose.msra.mxu0 0.0
        %1030 = vmatpush.xpose.msra.mxu0 0.0
        %1031 = vmatpush.xpose.msra.mxu0 %v134
        %1032 = vmatmul.f32.gmra.mxu0 %v734
        %v1033 = vpop.f32.mrf.mxu0
        %v1034 = vadd.f32 %v1014, %v1033
        %1035 = vdwg.mxu0
        %1036 = vmatpush.xpose.msra.mxu0 0.0
        %1037 = vmatpush.xpose.msra.mxu0 0.0
        %1038 = vmatpush.xpose.msra.mxu0 0.0
        %1039 = vmatpush.xpose.msra.mxu0 0.0
        %1040 = vmatpush.xpose.msra.mxu0 0.0
        %1041 = vmatpush.xpose.msra.mxu0 0.0
        %1042 = vmatpush.xpose.msra.mxu0 0.0
        %1043 = vmatpush.xpose.msra.mxu0 0.0
        %1044 = vmatpush.xpose.msra.mxu0 0.0
        %1045 = vmatpush.xpose.msra.mxu0 0.0
        %1046 = vmatpush.xpose.msra.mxu0 0.0
        %1047 = vmatpush.xpose.msra.mxu0 0.0
        %1048 = vmatpush.xpose.msra.mxu0 0.0
        %1049 = vmatpush.xpose.msra.mxu0 0.0
        %1050 = vmatpush.xpose.msra.mxu0 0.0
        %1051 = vmatpush.xpose.msra.mxu0 %v135
        %1052 = vmatmul.f32.gmra.mxu0 %v735
        %v1053 = vpop.f32.mrf.mxu0
        %v1054 = vadd.f32 %v1034, %v1053
        %1055 = vdwg.mxu0
        %v1056 = vadd.f32 %v719, %v1054
        %1057 = vst.msk [vmem:[#allocation3] sm:$0xff] %vm717, %v1056
        %p1058 = scmp.eq.s32.totalorder %s13, 1
        // Predicated region
        $region29: #{pdc_model_forward.3} parent=23 // pred_check
          %p1059 = pneg %p1058
        $region30: #{pdc_model_forward.3} parent=23 // pred_check_branch
          %1061 = sbr.rel (%p1059) target = $region32
        $region31: #{pdc_model_forward.3} parent=23 // pred_region
          %v1062 = vlaneseq
          %v1063 = vshrl.u32 %v1062, 7
          %vm1064 = vcmp.eq.s32.totalorder %v1063, %v137
          %v1065 = vld [vmem:[#allocation2] sm:$0xff]
          %v1066 = vsel %vm1064, %v1065, 0.0
          %v1067 = vsel %vm717, %v1066, 0.0
          %1068 = vadd.xlane.f32.xlu0 %v1067
          %v1069 = vpop.xlane.xlu0 %1068
          %v1070 = vrot.slane %v1067, 4
          %v1071 = vadd.f32 %v1067, %v1070
          %v1072 = vrot.slane %v1071, 2
          %v1073 = vadd.f32 %v1071, %v1072
          %v1074 = vrot.slane %v1073, 1
          %v1075 = vadd.f32 %v1073, %v1074
          %v1076 = vadd.f32 %v1069, %v1075
          %v1077 = vmul.f32 %v1065, 2.0
          %v1078 = vsub.f32 %v1076, %v1077
          %v1079 = vmax.f32 %v1078, 0.0
          %v1080 = vadd.f32 %v1079, 1e-18
          %v1081 = vrsqrt.pop %v1080
          %v1082 = vmul.f32 %v1081, %v1080
          %v1083 = vmul.f32 %v1082, %v1081
          %v1084 = vmul.f32 0.5, %v1083
          %v1085 = vsub.f32 1.5, %v1084
          %v1086 = vmul.f32 %v1081, %v1085
          %v1087 = vmul.f32 %v1080, %v1086
          %vm1088 = vcmp.eq.f32.partialorder %v1080, inf
          %v1089 = vsel %vm1088, %v1080, %v1087
          %vm1090 = vcmp.eq.f32.partialorder %v1080, 0.0
          %v1091 = vand.u32 %v1080, 2147483648
          %v1092 = vsel %vm1090, %v1091, %v1089
          %v1093 = vsel %vm717, %v1092, 0.0
          %v1094 = vrot.slane %v1093, 4
          %v1095 = vadd.f32 %v1093, %v1094
          %v1096 = vrot.slane %v1095, 2
          %v1097 = vadd.f32 %v1095, %v1096
          %v1098 = vrot.slane %v1097, 1
          %v1099 = vadd.f32 %v1097, %v1098
          %1100 = vadd.xlane.f32.xlu0 %v1093
          %v1101 = vpop.xlane.xlu0 %1100
          %v1102 = vrot.slane %v1101, 4
          %v1103 = vadd.f32 %v1101, %v1102
          %v1104 = vrot.slane %v1103, 2
          %v1105 = vadd.f32 %v1103, %v1104
          %v1106 = vrot.slane %v1105, 1
          %v1107 = vadd.f32 %v1105, %v1106
          %s1108 = vtos %v1107
          %v1109 = vrcp.pop 6.0
          %v1110 = vmul.f32 6.0, %v1109
          %v1111 = vsub.f32 1.0, %v1110
          %v1112 = vmul.f32 %v1109, %v1111
          %v1113 = vadd.f32 %v1109, %v1112
          %vm1114 = vweird.f32 %v1109
          %v1115 = vsel %vm1114, %v1109, %v1113
          %v1116 = vmul.f32 %v1099, %v1115
          %v1117 = vsub.f32 %v1092, %v1116
          %v1118 = vmul.f32 %v1101, %v1115
          %v1119 = vsub.f32 %v1117, %v1118
          %v1120 = vrcp.pop 42.0
          %v1121 = vmul.f32 42.0, %v1120
          %v1122 = vsub.f32 1.0, %v1121
          %v1123 = vmul.f32 %v1120, %v1122
          %v1124 = vadd.f32 %v1120, %v1123
          %vm1125 = vweird.f32 %v1120
          %v1126 = vsel %vm1125, %v1120, %v1124
          %s1127 = vtos %v1126
          %s1128 = smul.f32 %s1108, %s1127
          %v1129 = vstv %s1128
          %v1130 = vadd.f32 %v1119, %v1129
          %v1131 = vsel %vm1064, 0.0, %v1130
          %v1132 = vld [vmem:[#allocation3] sm:$0xff]
          %v1133 = vsel %vm1064, %v1132, 0.0
          %v1134 = vsel %vm717, %v1133, 0.0
          %1135 = vadd.xlane.f32.xlu0 %v1134
          %v1136 = vpop.xlane.xlu0 %1135
          %v1137 = vrot.slane %v1134, 4
          %v1138 = vadd.f32 %v1134, %v1137
          %v1139 = vrot.slane %v1138, 2
          %v1140 = vadd.f32 %v1138, %v1139
          %v1141 = vrot.slane %v1140, 1
          %v1142 = vadd.f32 %v1140, %v1141
          %v1143 = vadd.f32 %v1136, %v1142
          %v1144 = vmul.f32 %v1132, 2.0
          %v1145 = vsub.f32 %v1143, %v1144
          %v1146 = vmax.f32 %v1145, 0.0
          %v1147 = vadd.f32 %v1146, 1e-18
          %v1148 = vrsqrt.pop %v1147
          %v1149 = vmul.f32 %v1148, %v1147
          %v1150 = vmul.f32 %v1149, %v1148
          %v1151 = vmul.f32 0.5, %v1150
          %v1152 = vsub.f32 1.5, %v1151
          %v1153 = vmul.f32 %v1148, %v1152
          %v1154 = vmul.f32 %v1147, %v1153
          %vm1155 = vcmp.eq.f32.partialorder %v1147, inf
          %v1156 = vsel %vm1155, %v1147, %v1154
          %vm1157 = vcmp.eq.f32.partialorder %v1147, 0.0
          %v1158 = vand.u32 %v1147, 2147483648
          %v1159 = vsel %vm1157, %v1158, %v1156
          %v1160 = vsel %vm717, %v1159, 0.0
          %v1161 = vrot.slane %v1160, 4
          %v1162 = vadd.f32 %v1160, %v1161
          %v1163 = vrot.slane %v1162, 2
          %v1164 = vadd.f32 %v1162, %v1163
          %v1165 = vrot.slane %v1164, 1
          %v1166 = vadd.f32 %v1164, %v1165
          %1167 = vadd.xlane.f32.xlu0 %v1160
          %v1168 = vpop.xlane.xlu0 %1167
          %v1169 = vrot.slane %v1168, 4
          %v1170 = vadd.f32 %v1168, %v1169
          %v1171 = vrot.slane %v1170, 2
          %v1172 = vadd.f32 %v1170, %v1171
          %v1173 = vrot.slane %v1172, 1
          %v1174 = vadd.f32 %v1172, %v1173
          %s1175 = vtos %v1174
          %v1176 = vmul.f32 %v1166, %v1115
          %v1177 = vsub.f32 %v1159, %v1176
          %v1178 = vmul.f32 %v1168, %v1115
          %v1179 = vsub.f32 %v1177, %v1178
          %v1180 = vrcp.pop 42.0
          %v1181 = vmul.f32 42.0, %v1180
          %v1182 = vsub.f32 1.0, %v1181
          %v1183 = vmul.f32 %v1180, %v1182
          %v1184 = vadd.f32 %v1180, %v1183
          %vm1185 = vweird.f32 %v1180
          %v1186 = vsel %vm1185, %v1180, %v1184
          %s1187 = vtos %v1186
          %s1188 = smul.f32 %s1175, %s1187
          %v1189 = vstv %s1188
          %v1190 = vadd.f32 %v1179, %v1189
          %v1191 = vsel %vm1064, 0.0, %v1190
          %v1192 = vmul.f32 %v1131, %v1191
          %v1193 = vsel %vm717, %v1192, 0.0
          %1194 = vadd.xlane.f32.xlu0 %v1193
          %v1195 = vpop.xlane.xlu0 %1194
          %v1196 = vrot.slane %v1195, 4
          %v1197 = vadd.f32 %v1195, %v1196
          %v1198 = vrot.slane %v1197, 2
          %v1199 = vadd.f32 %v1197, %v1198
          %v1200 = vrot.slane %v1199, 1
          %v1201 = vadd.f32 %v1199, %v1200
          %s1202 = vtos %v1201
          %v1203 = vmul.f32 %v1191, %v1191
          %v1204 = vsel %vm717, %v1203, 0.0
          %1205 = vadd.xlane.f32.xlu0 %v1204
          %v1206 = vpop.xlane.xlu0 %1205
          %v1207 = vrot.slane %v1206, 4
          %v1208 = vadd.f32 %v1206, %v1207
          %v1209 = vrot.slane %v1208, 2
          %v1210 = vadd.f32 %v1208, %v1209
          %v1211 = vrot.slane %v1210, 1
          %v1212 = vadd.f32 %v1210, %v1211
          %s1213 = vtos %v1212
          %v1214 = vstv %s1213
          %v1215 = vrcp.pop %v1214
          %v1216 = vmul.f32 %v1214, %v1215
          %v1217 = vsub.f32 1.0, %v1216
          %v1218 = vmul.f32 %v1215, %v1217
          %v1219 = vadd.f32 %v1215, %v1218
          %vm1220 = vweird.f32 %v1214
          %vm1221 = vweird.f32 %v1215
          %vm1222 = vmor %vm1220, %vm1221
          %v1223 = vsel %vm1222, %v1215, %v1219
          %v1224 = vand.u32 2147483647, %v1214
          %vm1225 = vcmp.eq.f32.partialorder %v1224, 8.507059e+37
          %v1226 = vand.u32 %v1214, 2147483648
          %v1227 = vor.u32 1.1754944e-38, %v1226
          %v1228 = vsel %vm1225, %v1227, %v1223
          %s1229 = vtos %v1228
          %s1230 = smul.f32 %s1202, %s1229
          %v1231 = vstv %s1230
          %v1232 = vmul.f32 %v1231, %v1191
          %v1233 = vsub.f32 %v1131, %v1232
          %1234 = vst.msk [vmem:[#allocation4] sm:$0xff] %vm717, %v1233
        $region32: #{pdc_model_forward.3} parent=23 // pred_fallthru
          _
        // Predicated region
        $region33: #{pdc_model_forward.3} parent=23 // pred_check
          %p1235 = pneg %p52
        $region34: #{pdc_model_forward.3} parent=23 // pred_check_branch
          %1237 = sbr.rel (%p1235) target = $region36
        $region35: #{pdc_model_forward.3} parent=23 // pred_region
          %1239 = vsyncadd [#allocation5], 0
          %s1241 = sshll.u32 [#allocation4], 4
          %s1242 = int_to_ptr.vmem [resolvable:$true] %s1241
          %s1243 = sshll.u32 %s1, 4
          %s1244 = int_to_ptr.hbm [resolvable:$true] %s1243
          %1246 = dma.vmem_to_hbm [thread:$0]  %s1242, 128, %s1244, [#allocation5]
        $region36: #{pdc_model_forward.3} parent=23 // pred_fallthru
          _
        // Predicated region
        $region37: #{pdc_model_forward.3} parent=23 // pred_check
          %p1247 = pneg %p52
        $region38: #{pdc_model_forward.3} parent=23 // pred_check_branch
          %1249 = sbr.rel (%p1247) target = $region40
        $region39: #{pdc_model_forward.3} parent=23 // pred_region
          %1251 = dma.done [#allocation5], 128
        $region40: #{pdc_model_forward.3} parent=23 // pred_fallthru
          _
      $region24: #{pdc_model_forward.3} parent=5 // pred_fallthru
        _
      %p1252 = scmp.le.s32.totalorder 2, %s8
      // Predicated region
      $region41: #{pdc_model_forward.3} parent=5 // pred_check
        %p1253 = pneg %p1252
      $region42: #{pdc_model_forward.3} parent=5 // pred_check_branch
        %1255 = sbr.rel (%p1253) target = $region44
      $region43: #{pdc_model_forward.3} parent=5 // pred_region
        %s1256 = ssub.s32 %s8, 2
      $region44: #{pdc_model_forward.3} parent=5 // pred_fallthru
        _
    $region6: #{pdc_model_forward.3} parent=1 // loop_footer
      %s12 = sadd.s32 1, %s8
    $region7: #{pdc_model_forward.3} parent=1 // loop_footer_branch
      %7 = sbr.rel target = $region3
    $region8: #{pdc_model_forward.3} parent=1 // loop_exit
      _
    %1257 = vsyncpa [#allocation5], 1
    %s1258 = scalar_lea.sflag [#allocation5], 1
    %1259 = vsyncpa %s1258, 1

// kernel: pdc_model_forward.2
$region0: #{pdc_model_forward.2}
  #allocation0 [shape = 'u32[]', space=smem, size = 0x4, offset = 0x4, fixed_abs, tag = 'smem constant byte address 0x4 - core index']
  #allocation1 [shape = 'u32[72,128]{1,0:T(1,128)}', space=vmem, size = 0x9000, scoped, tag = 'internal scratch']
  %s0 = inlined_call_operand.vmem [shape: bf16[2048,36], index: 0, kind: input, shape index: {}]
  %s1 = inlined_call_operand.vmem [shape: bf16[36,16], index: 1, kind: input, shape index: {}]
  %s2 = inlined_call_operand.vmem [shape: f32[1,16], index: 2, kind: input, shape index: {}]
  %s3 = inlined_call_operand.vmem [shape: bf16[2048,16], index: 3, kind: output, shape index: {}]
  %s4 = sld [smem:[#allocation0]]
  $region45: #{pdc_model_forward.2} parent=0
    _
  %s6 = ssub.s32 1, %s4
  %s7 = scalar_select 0, %s6, %s4
  loop: start=0, step=1, limit=4
  $region2: #{pdc_model_forward.2} parent=0 // loop_pre_header
    _
  $region3: #{pdc_model_forward.2} parent=0 // loop_header
    %s9 = sphi 0, %s13
    %p10 = scmp.ge.s32.totalorder %s9, 4
    %s19 = sphi 0, %s21
    %s22 = sphi 0, %s19
    %s23 = sphi 0, %s22
    %s39 = sphi 0, %s23
    %s43 = sphi 0, %s43
    %s45 = sphi 0, %s43
    %s46 = sphi 0, %s45
    %s60 = sphi 0, %s46
    %s64 = sphi 0, %s64
    %s66 = sphi 0, %s64
    %s67 = sphi 0, %s66
    %s81 = sphi 0, %s67
    %s87 = sphi 0, %s89
    %s90 = sphi 0, %s87
    %s91 = sphi 0, %s90
    %s107 = sphi 0, %s91
  $region4: #{pdc_model_forward.2} parent=0 // loop_header_branch
    %12 = sbr.rel (%p10) target = $region8
  $region5: #{pdc_model_forward.2} parent=0 // loop_body
    %s14 = ssub.s32 %s9, 1
    %s15 = ssub.s32 %s9, 2
    %s16 = sadd.s32 %s9, 1
    %s17 = ssub.s32 %s9, %s16
    %p18 = scmp.eq.s32.totalorder %s17, 0
    %s20 = sadd.s32 %s19, 1
    %s21 = scalar_select %p18, %s19, %s20
    %p24 = pneg %p18
    %p25 = scmp.eq.s32.totalorder %s9, 1
    %p26 = por %p24, %p25
    %p27 = scmp.ne.s32.totalorder %s19, %s22
    %p28 = scmp.eq.s32.totalorder %s9, 0
    %p29 = por %p27, %p28
    %p30 = scmp.ne.s32.totalorder %s19, %s22
    %p31 = scmp.eq.s32.totalorder %s14, 1
    %p32 = por %p30, %p31
    %p33 = scmp.ne.s32.totalorder %s22, %s23
    %p34 = scmp.eq.s32.totalorder %s14, 0
    %p35 = por %p33, %p34
    %p36 = scmp.ne.s32.totalorder %s22, %s23
    %p37 = scmp.eq.s32.totalorder %s15, 1
    %p38 = por %p36, %p37
    %p40 = scmp.ne.s32.totalorder %s23, %s39
    %p41 = scmp.eq.s32.totalorder %s15, 0
    %p42 = por %p40, %p41
    %s44 = sadd.s32 %s43, 1
    %p47 = scmp.eq.s32.totalorder %s9, 1
    %p48 = scmp.ne.s32.totalorder %s43, %s45
    %p49 = scmp.eq.s32.totalorder %s9, 0
    %p50 = por %p48, %p49
    %p51 = scmp.ne.s32.totalorder %s43, %s45
    %p52 = scmp.eq.s32.totalorder %s14, 1
    %p53 = por %p51, %p52
    %p54 = scmp.ne.s32.totalorder %s45, %s46
    %p55 = scmp.eq.s32.totalorder %s14, 0
    %p56 = por %p54, %p55
    %p57 = scmp.ne.s32.totalorder %s45, %s46
    %p58 = scmp.eq.s32.totalorder %s15, 1
    %p59 = por %p57, %p58
    %p61 = scmp.ne.s32.totalorder %s46, %s60
    %p62 = scmp.eq.s32.totalorder %s15, 0
    %p63 = por %p61, %p62
    %s65 = sadd.s32 %s64, 1
    %p68 = scmp.eq.s32.totalorder %s9, 1
    %p69 = scmp.ne.s32.totalorder %s64, %s66
    %p70 = scmp.eq.s32.totalorder %s9, 0
    %p71 = por %p69, %p70
    %p72 = scmp.ne.s32.totalorder %s64, %s66
    %p73 = scmp.eq.s32.totalorder %s14, 1
    %p74 = por %p72, %p73
    %p75 = scmp.ne.s32.totalorder %s66, %s67
    %p76 = scmp.eq.s32.totalorder %s14, 0
    %p77 = por %p75, %p76
    %p78 = scmp.ne.s32.totalorder %s66, %s67
    %p79 = scmp.eq.s32.totalorder %s15, 1
    %p80 = por %p78, %p79
    %p82 = scmp.ne.s32.totalorder %s67, %s81
    %p83 = scmp.eq.s32.totalorder %s15, 0
    %p84 = por %p82, %p83
    %s85 = ssub.s32 %s9, %s16
    %p86 = scmp.eq.s32.totalorder %s85, 0
    %s88 = sadd.s32 %s87, 1
    %s89 = scalar_select %p86, %s87, %s88
    %p92 = pneg %p86
    %p93 = scmp.eq.s32.totalorder %s9, 1
    %p94 = por %p92, %p93
    %p95 = scmp.ne.s32.totalorder %s87, %s90
    %p96 = scmp.eq.s32.totalorder %s9, 0
    %p97 = por %p95, %p96
    %p98 = scmp.ne.s32.totalorder %s87, %s90
    %p99 = scmp.eq.s32.totalorder %s14, 1
    %p100 = por %p98, %p99
    %p101 = scmp.ne.s32.totalorder %s90, %s91
    %p102 = scmp.eq.s32.totalorder %s14, 0
    %p103 = por %p101, %p102
    %p104 = scmp.ne.s32.totalorder %s90, %s91
    %p105 = scmp.eq.s32.totalorder %s15, 1
    %p106 = por %p104, %p105
    %p108 = scmp.ne.s32.totalorder %s91, %s107
    %p109 = scmp.eq.s32.totalorder %s15, 0
    %p110 = por %p108, %p109
    %p111 = scmp.le.s32.totalorder 1, %s9
    %p112 = scmp.lt.s32.totalorder %s9, 3
    %p113 = pnand %p111, %p112
    %p114 = pneg %p113
    // Predicated region
    $region9: #{pdc_model_forward.2} parent=5 // pred_check
      _
    $region10: #{pdc_model_forward.2} parent=5 // pred_check_branch
      %116 = sbr.rel (%p113) target = $region12
    $region11: #{pdc_model_forward.2} parent=5 // pred_region
      %s117 = ssub.s32 %s9, 1
      // Predicated region
      $region13: #{pdc_model_forward.2} parent=11 // pred_check
        %p118 = pneg %p56
      $region14: #{pdc_model_forward.2} parent=11 // pred_check_branch
        %120 = sbr.rel (%p118) target = $region16
      $region15: #{pdc_model_forward.2} parent=11 // pred_region
        _
      $region16: #{pdc_model_forward.2} parent=11 // pred_fallthru
        _
      // Predicated region
      $region17: #{pdc_model_forward.2} parent=11 // pred_check
        %p121 = pneg %p77
      $region18: #{pdc_model_forward.2} parent=11 // pred_check_branch
        %123 = sbr.rel (%p121) target = $region20
      $region19: #{pdc_model_forward.2} parent=11 // pred_region
        _
      $region20: #{pdc_model_forward.2} parent=11 // pred_fallthru
        _
    $region12: #{pdc_model_forward.2} parent=5 // pred_fallthru
      _
    %p124 = scmp.lt.s32.totalorder %s9, 2
    // Predicated region
    $region21: #{pdc_model_forward.2} parent=5 // pred_check
      %p125 = pneg %p124
    $region22: #{pdc_model_forward.2} parent=5 // pred_check_branch
      %127 = sbr.rel (%p125) target = $region24
    $region23: #{pdc_model_forward.2} parent=5 // pred_region
      // Predicated region
      $region25: #{pdc_model_forward.2} parent=23 // pred_check
        %p128 = pneg %p29
      $region26: #{pdc_model_forward.2} parent=23 // pred_check_branch
        %130 = sbr.rel (%p128) target = $region28
      $region27: #{pdc_model_forward.2} parent=23 // pred_region
        %s131 = smul.u32 128, %s9
        %p132 = scmp.lt.s32.totalorder %s131, 255
        %s133 = scalar_select %p132, %s131, 255
        %s134 = smul.addr %s133, 4
        %s135 = scalar_lea.vmem %s0, %s134
        %s136 = smul.u32 128, %s9
      $region28: #{pdc_model_forward.2} parent=23 // pred_fallthru
        _
    $region24: #{pdc_model_forward.2} parent=5 // pred_fallthru
      _
    %p137 = scmp.le.s32.totalorder 1, %s9
    %p138 = scmp.lt.s32.totalorder %s9, 3
    %p139 = pnand %p137, %p138
    %p140 = pneg %p139
    // Predicated region
    $region29: #{pdc_model_forward.2} parent=5 // pred_check
      _
    $region30: #{pdc_model_forward.2} parent=5 // pred_check_branch
      %142 = sbr.rel (%p139) target = $region32
    $region31: #{pdc_model_forward.2} parent=5 // pred_region
      %s143 = ssub.s32 %s9, 1
      %s144 = smul.u32 128, %s14
      %p145 = scmp.lt.s32.totalorder %s144, 255
      %s146 = scalar_select %p145, %s144, 255
      %s147 = smul.addr %s146, 4
      %s148 = scalar_lea.vmem %s0, %s147
      %p149 = pneg %p35
      %p150 = pneg %p32
      %p151 = pneg %p56
      %p152 = pneg %p53
      %p153 = pneg %p77
      %p154 = pneg %p74
      %p155 = pneg %p103
      %p156 = pneg %p100
      %s157 = smul.u32 128, %s14
      %p158 = scmp.lt.s32.totalorder %s157, 255
      %s159 = scalar_select %p158, %s157, 255
      %s160 = smul.addr %s159, 4
      %s161 = scalar_lea.vmem %s3, %s160
      %s162 = smul.u32 128, %s14
      %p163 = scmp.lt.s32.totalorder %s162, 255
      %s164 = scalar_select %p163, %s162, 255
      %s165 = smul.addr %s164, 4
      %s166 = scalar_lea.vmem %s0, %s165
      %s167 = smul.u32 128, %s14
      %s168 = smul.u32 128, %s14
      %p169 = scmp.lt.s32.totalorder %s168, 255
      %s170 = scalar_select %p169, %s168, 255
      %s171 = smul.addr %s170, 4
      %s172 = scalar_lea.vmem %s3, %s171
      %s173 = smul.u32 128, %s14
      %v175 = vld [vmem:[%s166] sm:$0xf]
      %v176 = vld [vmem:[%s166 + $0x4] sm:$0xf]
      %v177 = vld [vmem:[%s166 + $0x8] sm:$0xf]
      %v178 = vld [vmem:[%s166 + $0xc] sm:$0xf]
      %v179 = vld [vmem:[%s166 + $0x10] sm:$0xf]
      %v180 = vld [vmem:[%s166 + $0x14] sm:$0xf]
      %v181 = vld [vmem:[%s166 + $0x18] sm:$0xf]
      %v182 = vld [vmem:[%s166 + $0x1c] sm:$0xf]
      %v183 = vld [vmem:[%s166 + $0x20] sm:$0xf]
      %v184 = vld [vmem:[%s166 + $0x24] sm:$0xf]
      %v185 = vld [vmem:[%s166 + $0x28] sm:$0xf]
      %v186 = vld [vmem:[%s166 + $0x2c] sm:$0xf]
      %v187 = vld [vmem:[%s166 + $0x30] sm:$0xf]
      %v188 = vld [vmem:[%s166 + $0x34] sm:$0xf]
      %v189 = vld [vmem:[%s166 + $0x38] sm:$0xf]
      %v190 = vld [vmem:[%s166 + $0x3c] sm:$0xf]
      %v191 = vld [vmem:[%s166 + $0x40] sm:$0xf]
      %v192 = vld [vmem:[%s166 + $0x44] sm:$0xf]
      %v193 = vld [vmem:[%s166 + $0x48] sm:$0xf]
      %v194 = vld [vmem:[%s166 + $0x4c] sm:$0xf]
      %v195 = vld [vmem:[%s166 + $0x50] sm:$0xf]
      %v196 = vld [vmem:[%s166 + $0x54] sm:$0xf]
      %v197 = vld [vmem:[%s166 + $0x58] sm:$0xf]
      %v198 = vld [vmem:[%s166 + $0x5c] sm:$0xf]
      %v199 = vld [vmem:[%s166 + $0x60] sm:$0xf]
      %v200 = vld [vmem:[%s166 + $0x64] sm:$0xf]
      %v201 = vld [vmem:[%s166 + $0x68] sm:$0xf]
      %v202 = vld [vmem:[%s166 + $0x6c] sm:$0xf]
      %v203 = vld [vmem:[%s166 + $0x70] sm:$0xf]
      %v204 = vld [vmem:[%s166 + $0x74] sm:$0xf]
      %v205 = vld [vmem:[%s166 + $0x78] sm:$0xf]
      %v206 = vld [vmem:[%s166 + $0x7c] sm:$0xf]
      %v207 = vld [vmem:[%s166 + $0x80] sm:$0xf]
      %v208 = vld [vmem:[%s166 + $0x84] sm:$0xf]
      %v209 = vld [vmem:[%s166 + $0x88] sm:$0xf]
      %v210 = vld [vmem:[%s166 + $0x8c] sm:$0xf]
      %v211 = vld [vmem:[%s166 + $0x90] sm:$0xf]
      %v212 = vld [vmem:[%s166 + $0x94] sm:$0xf]
      %v213 = vld [vmem:[%s166 + $0x98] sm:$0xf]
      %v214 = vld [vmem:[%s166 + $0x9c] sm:$0xf]
      %v215 = vld [vmem:[%s166 + $0xa0] sm:$0xf]
      %v216 = vld [vmem:[%s166 + $0xa4] sm:$0xf]
      %v217 = vld [vmem:[%s166 + $0xa8] sm:$0xf]
      %v218 = vld [vmem:[%s166 + $0xac] sm:$0xf]
      %v219 = vld [vmem:[%s166 + $0xb0] sm:$0xf]
      %v220 = vld [vmem:[%s166 + $0xb4] sm:$0xf]
      %v221 = vld [vmem:[%s166 + $0xb8] sm:$0xf]
      %v222 = vld [vmem:[%s166 + $0xbc] sm:$0xf]
      %v223 = vld [vmem:[%s166 + $0xc0] sm:$0xf]
      %v224 = vld [vmem:[%s166 + $0xc4] sm:$0xf]
      %v225 = vld [vmem:[%s166 + $0xc8] sm:$0xf]
      %v226 = vld [vmem:[%s166 + $0xcc] sm:$0xf]
      %v227 = vld [vmem:[%s166 + $0xd0] sm:$0xf]
      %v228 = vld [vmem:[%s166 + $0xd4] sm:$0xf]
      %v229 = vld [vmem:[%s166 + $0xd8] sm:$0xf]
      %v230 = vld [vmem:[%s166 + $0xdc] sm:$0xf]
      %v231 = vld [vmem:[%s166 + $0xe0] sm:$0xf]
      %v232 = vld [vmem:[%s166 + $0xe4] sm:$0xf]
      %v233 = vld [vmem:[%s166 + $0xe8] sm:$0xf]
      %v234 = vld [vmem:[%s166 + $0xec] sm:$0xf]
      %v235 = vld [vmem:[%s166 + $0xf0] sm:$0xf]
      %v236 = vld [vmem:[%s166 + $0xf4] sm:$0xf]
      %v237 = vld [vmem:[%s166 + $0xf8] sm:$0xf]
      %v238 = vld [vmem:[%s166 + $0xfc] sm:$0xf]
      %v239 = vld [vmem:[%s166 + $0x100] sm:$0xf]
      %v240 = vld [vmem:[%s166 + $0x104] sm:$0xf]
      %v241 = vld [vmem:[%s166 + $0x108] sm:$0xf]
      %v242 = vld [vmem:[%s166 + $0x10c] sm:$0xf]
      %v243 = vld [vmem:[%s166 + $0x110] sm:$0xf]
      %v244 = vld [vmem:[%s166 + $0x114] sm:$0xf]
      %v245 = vld [vmem:[%s166 + $0x118] sm:$0xf]
      %v246 = vld [vmem:[%s166 + $0x11c] sm:$0xf]
      %v247 = vld [vmem:[%s166 + $0x120] sm:$0xf]
      %v248 = vld [vmem:[%s166 + $0x124] sm:$0xf]
      %v249 = vld [vmem:[%s166 + $0x128] sm:$0xf]
      %v250 = vld [vmem:[%s166 + $0x12c] sm:$0xf]
      %v251 = vld [vmem:[%s166 + $0x130] sm:$0xf]
      %v252 = vld [vmem:[%s166 + $0x134] sm:$0xf]
      %v253 = vld [vmem:[%s166 + $0x138] sm:$0xf]
      %v254 = vld [vmem:[%s166 + $0x13c] sm:$0xf]
      %v255 = vld [vmem:[%s166 + $0x140] sm:$0xf]
      %v256 = vld [vmem:[%s166 + $0x144] sm:$0xf]
      %v257 = vld [vmem:[%s166 + $0x148] sm:$0xf]
      %v258 = vld [vmem:[%s166 + $0x14c] sm:$0xf]
      %v259 = vld [vmem:[%s166 + $0x150] sm:$0xf]
      %v260 = vld [vmem:[%s166 + $0x154] sm:$0xf]
      %v261 = vld [vmem:[%s166 + $0x158] sm:$0xf]
      %v262 = vld [vmem:[%s166 + $0x15c] sm:$0xf]
      %v263 = vld [vmem:[%s166 + $0x160] sm:$0xf]
      %v264 = vld [vmem:[%s166 + $0x164] sm:$0xf]
      %v265 = vld [vmem:[%s166 + $0x168] sm:$0xf]
      %v266 = vld [vmem:[%s166 + $0x16c] sm:$0xf]
      %v267 = vld [vmem:[%s166 + $0x170] sm:$0xf]
      %v268 = vld [vmem:[%s166 + $0x174] sm:$0xf]
      %v269 = vld [vmem:[%s166 + $0x178] sm:$0xf]
      %v270 = vld [vmem:[%s166 + $0x17c] sm:$0xf]
      %v271 = vld [vmem:[%s166 + $0x180] sm:$0xf]
      %v272 = vld [vmem:[%s166 + $0x184] sm:$0xf]
      %v273 = vld [vmem:[%s166 + $0x188] sm:$0xf]
      %v274 = vld [vmem:[%s166 + $0x18c] sm:$0xf]
      %v275 = vld [vmem:[%s166 + $0x190] sm:$0xf]
      %v276 = vld [vmem:[%s166 + $0x194] sm:$0xf]
      %v277 = vld [vmem:[%s166 + $0x198] sm:$0xf]
      %v278 = vld [vmem:[%s166 + $0x19c] sm:$0xf]
      %v279 = vld [vmem:[%s166 + $0x1a0] sm:$0xf]
      %v280 = vld [vmem:[%s166 + $0x1a4] sm:$0xf]
      %v281 = vld [vmem:[%s166 + $0x1a8] sm:$0xf]
      %v282 = vld [vmem:[%s166 + $0x1ac] sm:$0xf]
      %v283 = vld [vmem:[%s166 + $0x1b0] sm:$0xf]
      %v284 = vld [vmem:[%s166 + $0x1b4] sm:$0xf]
      %v285 = vld [vmem:[%s166 + $0x1b8] sm:$0xf]
      %v286 = vld [vmem:[%s166 + $0x1bc] sm:$0xf]
      %v287 = vld [vmem:[%s166 + $0x1c0] sm:$0xf]
      %v288 = vld [vmem:[%s166 + $0x1c4] sm:$0xf]
      %v289 = vld [vmem:[%s166 + $0x1c8] sm:$0xf]
      %v290 = vld [vmem:[%s166 + $0x1cc] sm:$0xf]
      %v291 = vld [vmem:[%s166 + $0x1d0] sm:$0xf]
      %v292 = vld [vmem:[%s166 + $0x1d4] sm:$0xf]
      %v293 = vld [vmem:[%s166 + $0x1d8] sm:$0xf]
      %v294 = vld [vmem:[%s166 + $0x1dc] sm:$0xf]
      %v295 = vld [vmem:[%s166 + $0x1e0] sm:$0xf]
      %v296 = vld [vmem:[%s166 + $0x1e4] sm:$0xf]
      %v297 = vld [vmem:[%s166 + $0x1e8] sm:$0xf]
      %v298 = vld [vmem:[%s166 + $0x1ec] sm:$0xf]
      %v299 = vld [vmem:[%s166 + $0x1f0] sm:$0xf]
      %v300 = vld [vmem:[%s166 + $0x1f4] sm:$0xf]
      %v301 = vld [vmem:[%s166 + $0x1f8] sm:$0xf]
      %v302 = vld [vmem:[%s166 + $0x1fc] sm:$0xf]
      %v303 = vld [vmem:[%s1] sm:$0xf]
      %v304 = vld [vmem:[%s1 + $0x4] sm:$0xf]
      %v305 = vld [vmem:[%s1 + $0x8] sm:$0xf]
      %v306 = vld [vmem:[%s1 + $0xc] sm:$0xf]
      %v307 = vld [vmem:[%s1 + $0x10] sm:$0x3]
      %v308 = vld [vmem:[%s2] sm:$0x1]
      %v310 = vperm.slane %v308, 0
      %v440 = vunpack.c.l.b16 %v175
      %v441 = vunpack.c.l.b16 %v176
      %v442 = vunpack.c.l.b16 %v177
      %v443 = vunpack.c.l.b16 %v178
      %v444 = vunpack.c.l.b16 %v179
      %v445 = vunpack.c.l.b16 %v180
      %v446 = vunpack.c.l.b16 %v181
      %v447 = vunpack.c.l.b16 %v182
      %v448 = vunpack.c.l.b16 %v183
      %v449 = vunpack.c.l.b16 %v184
      %v450 = vunpack.c.l.b16 %v185
      %v451 = vunpack.c.l.b16 %v186
      %v452 = vunpack.c.l.b16 %v187
      %v453 = vunpack.c.l.b16 %v188
      %v454 = vunpack.c.l.b16 %v189
      %v455 = vunpack.c.l.b16 %v190
      %v456 = vunpack.c.l.b16 %v191
      %v457 = vunpack.c.l.b16 %v192
      %v458 = vunpack.c.l.b16 %v193
      %v459 = vunpack.c.l.b16 %v194
      %v460 = vunpack.c.l.b16 %v195
      %v461 = vunpack.c.l.b16 %v196
      %v462 = vunpack.c.l.b16 %v197
      %v463 = vunpack.c.l.b16 %v198
      %v464 = vunpack.c.l.b16 %v199
      %v465 = vunpack.c.l.b16 %v200
      %v466 = vunpack.c.l.b16 %v201
      %v467 = vunpack.c.l.b16 %v202
      %v468 = vunpack.c.l.b16 %v203
      %v469 = vunpack.c.l.b16 %v204
      %v470 = vunpack.c.l.b16 %v205
      %v471 = vunpack.c.l.b16 %v206
      %v472 = vunpack.c.l.b16 %v207
      %v473 = vunpack.c.l.b16 %v208
      %v474 = vunpack.c.l.b16 %v209
      %v475 = vunpack.c.l.b16 %v210
      %v476 = vunpack.c.l.b16 %v211
      %v477 = vunpack.c.l.b16 %v212
      %v478 = vunpack.c.l.b16 %v213
      %v479 = vunpack.c.l.b16 %v214
      %v480 = vunpack.c.l.b16 %v215
      %v481 = vunpack.c.l.b16 %v216
      %v482 = vunpack.c.l.b16 %v217
      %v483 = vunpack.c.l.b16 %v218
      %v484 = vunpack.c.l.b16 %v219
      %v485 = vunpack.c.l.b16 %v220
      %v486 = vunpack.c.l.b16 %v221
      %v487 = vunpack.c.l.b16 %v222
      %v488 = vunpack.c.l.b16 %v223
      %v489 = vunpack.c.l.b16 %v224
      %v490 = vunpack.c.l.b16 %v225
      %v491 = vunpack.c.l.b16 %v226
      %v492 = vunpack.c.l.b16 %v227
      %v493 = vunpack.c.l.b16 %v228
      %v494 = vunpack.c.l.b16 %v229
      %v495 = vunpack.c.l.b16 %v230
      %v496 = vunpack.c.l.b16 %v231
      %v497 = vunpack.c.l.b16 %v232
      %v498 = vunpack.c.l.b16 %v233
      %v499 = vunpack.c.l.b16 %v234
      %v500 = vunpack.c.l.b16 %v235
      %v501 = vunpack.c.l.b16 %v236
      %v502 = vunpack.c.l.b16 %v237
      %v503 = vunpack.c.l.b16 %v238
      %v504 = vunpack.c.l.b16 %v239
      %v505 = vunpack.c.l.b16 %v240
      %v506 = vunpack.c.l.b16 %v241
      %v507 = vunpack.c.l.b16 %v242
      %v508 = vunpack.c.l.b16 %v243
      %v509 = vunpack.c.l.b16 %v244
      %v510 = vunpack.c.l.b16 %v245
      %v511 = vunpack.c.l.b16 %v246
      %v512 = vunpack.c.l.b16 %v247
      %v513 = vunpack.c.l.b16 %v248
      %v514 = vunpack.c.l.b16 %v249
      %v515 = vunpack.c.l.b16 %v250
      %v516 = vunpack.c.l.b16 %v251
      %v517 = vunpack.c.l.b16 %v252
      %v518 = vunpack.c.l.b16 %v253
      %v519 = vunpack.c.l.b16 %v254
      %v520 = vunpack.c.l.b16 %v255
      %v521 = vunpack.c.l.b16 %v256
      %v522 = vunpack.c.l.b16 %v257
      %v523 = vunpack.c.l.b16 %v258
      %v524 = vunpack.c.l.b16 %v259
      %v525 = vunpack.c.l.b16 %v260
      %v526 = vunpack.c.l.b16 %v261
      %v527 = vunpack.c.l.b16 %v262
      %v528 = vunpack.c.l.b16 %v263
      %v529 = vunpack.c.l.b16 %v264
      %v530 = vunpack.c.l.b16 %v265
      %v531 = vunpack.c.l.b16 %v266
      %v532 = vunpack.c.l.b16 %v267
      %v533 = vunpack.c.l.b16 %v268
      %v534 = vunpack.c.l.b16 %v269
      %v535 = vunpack.c.l.b16 %v270
      %v536 = vunpack.c.l.b16 %v271
      %v537 = vunpack.c.l.b16 %v272
      %v538 = vunpack.c.l.b16 %v273
      %v539 = vunpack.c.l.b16 %v274
      %v540 = vunpack.c.l.b16 %v275
      %v541 = vunpack.c.l.b16 %v276
      %v542 = vunpack.c.l.b16 %v277
      %v543 = vunpack.c.l.b16 %v278
      %v544 = vunpack.c.l.b16 %v279
      %v545 = vunpack.c.l.b16 %v280
      %v546 = vunpack.c.l.b16 %v281
      %v547 = vunpack.c.l.b16 %v282
      %v548 = vunpack.c.l.b16 %v283
      %v549 = vunpack.c.l.b16 %v284
      %v550 = vunpack.c.l.b16 %v285
      %v551 = vunpack.c.l.b16 %v286
      %v552 = vunpack.c.l.b16 %v287
      %v553 = vunpack.c.l.b16 %v288
      %v554 = vunpack.c.l.b16 %v289
      %v555 = vunpack.c.l.b16 %v290
      %v556 = vunpack.c.l.b16 %v291
      %v557 = vunpack.c.l.b16 %v292
      %v558 = vunpack.c.l.b16 %v293
      %v559 = vunpack.c.l.b16 %v294
      %v560 = vunpack.c.l.b16 %v295
      %v561 = vunpack.c.l.b16 %v296
      %v562 = vunpack.c.l.b16 %v297
      %v563 = vunpack.c.l.b16 %v298
      %v564 = vunpack.c.l.b16 %v299
      %v565 = vunpack.c.l.b16 %v300
      %v566 = vunpack.c.l.b16 %v301
      %v567 = vunpack.c.l.b16 %v302
      %v568 = vpack.c.b16 %v441, %v440
      %v569 = vpack.c.b16 %v443, %v442
      %v570 = vpack.c.b16 %v445, %v444
      %v571 = vpack.c.b16 %v447, %v446
      %v572 = vpack.c.b16 %v449, %v448
      %v573 = vpack.c.b16 %v451, %v450
      %v574 = vpack.c.b16 %v453, %v452
      %v575 = vpack.c.b16 %v455, %v454
      %v576 = vpack.c.b16 %v457, %v456
      %v577 = vpack.c.b16 %v459, %v458
      %v578 = vpack.c.b16 %v461, %v460
      %v579 = vpack.c.b16 %v463, %v462
      %v580 = vpack.c.b16 %v465, %v464
      %v581 = vpack.c.b16 %v467, %v466
      %v582 = vpack.c.b16 %v469, %v468
      %v583 = vpack.c.b16 %v471, %v470
      %v584 = vpack.c.b16 %v473, %v472
      %v585 = vpack.c.b16 %v475, %v474
      %v586 = vpack.c.b16 %v477, %v476
      %v587 = vpack.c.b16 %v479, %v478
      %v588 = vpack.c.b16 %v481, %v480
      %v589 = vpack.c.b16 %v483, %v482
      %v590 = vpack.c.b16 %v485, %v484
      %v591 = vpack.c.b16 %v487, %v486
      %v592 = vpack.c.b16 %v489, %v488
      %v593 = vpack.c.b16 %v491, %v490
      %v594 = vpack.c.b16 %v493, %v492
      %v595 = vpack.c.b16 %v495, %v494
      %v596 = vpack.c.b16 %v497, %v496
      %v597 = vpack.c.b16 %v499, %v498
      %v598 = vpack.c.b16 %v501, %v500
      %v599 = vpack.c.b16 %v503, %v502
      %v600 = vpack.c.b16 %v505, %v504
      %v601 = vpack.c.b16 %v507, %v506
      %v602 = vpack.c.b16 %v509, %v508
      %v603 = vpack.c.b16 %v511, %v510
      %v604 = vpack.c.b16 %v513, %v512
      %v605 = vpack.c.b16 %v515, %v514
      %v606 = vpack.c.b16 %v517, %v516
      %v607 = vpack.c.b16 %v519, %v518
      %v608 = vpack.c.b16 %v521, %v520
      %v609 = vpack.c.b16 %v523, %v522
      %v610 = vpack.c.b16 %v525, %v524
      %v611 = vpack.c.b16 %v527, %v526
      %v612 = vpack.c.b16 %v529, %v528
      %v613 = vpack.c.b16 %v531, %v530
      %v614 = vpack.c.b16 %v533, %v532
      %v615 = vpack.c.b16 %v535, %v534
      %v616 = vpack.c.b16 %v537, %v536
      %v617 = vpack.c.b16 %v539, %v538
      %v618 = vpack.c.b16 %v541, %v540
      %v619 = vpack.c.b16 %v543, %v542
      %v620 = vpack.c.b16 %v545, %v544
      %v621 = vpack.c.b16 %v547, %v546
      %v622 = vpack.c.b16 %v549, %v548
      %v623 = vpack.c.b16 %v551, %v550
      %v624 = vpack.c.b16 %v553, %v552
      %v625 = vpack.c.b16 %v555, %v554
      %v626 = vpack.c.b16 %v557, %v556
      %v627 = vpack.c.b16 %v559, %v558
      %v628 = vpack.c.b16 %v561, %v560
      %v629 = vpack.c.b16 %v563, %v562
      %v630 = vpack.c.b16 %v565, %v564
      %v631 = vpack.c.b16 %v567, %v566
      %v637 = vunpack.c.l.b16 %v303
      %v638 = vunpack.c.l.b16 %v304
      %v639 = vunpack.c.l.b16 %v305
      %v640 = vunpack.c.l.b16 %v306
      %v641 = vunpack.c.l.b16 %v307
      %v642 = vpack.c.b16 %v638, %v637
      %v643 = vpack.c.b16 %v640, %v639
      %v644 = vpack.c.b16 %v641, %v641
      %vm647 = vcmask 293888
      %v649 = vsel %vm647, %v568, 0
      %v652 = vsel %vm647, %v569, 0
      %v655 = vsel %vm647, %v570, 0
      %v658 = vsel %vm647, %v571, 0
      %v661 = vsel %vm647, %v572, 0
      %v664 = vsel %vm647, %v573, 0
      %v667 = vsel %vm647, %v574, 0
      %v670 = vsel %vm647, %v575, 0
      %v673 = vsel %vm647, %v576, 0
      %v676 = vsel %vm647, %v577, 0
      %v679 = vsel %vm647, %v578, 0
      %v682 = vsel %vm647, %v579, 0
      %v685 = vsel %vm647, %v580, 0
      %v688 = vsel %vm647, %v581, 0
      %v691 = vsel %vm647, %v582, 0
      %v694 = vsel %vm647, %v583, 0
      %v697 = vsel %vm647, %v584, 0
      %v700 = vsel %vm647, %v585, 0
      %v703 = vsel %vm647, %v586, 0
      %v706 = vsel %vm647, %v587, 0
      %v709 = vsel %vm647, %v588, 0
      %v712 = vsel %vm647, %v589, 0
      %v715 = vsel %vm647, %v590, 0
      %v718 = vsel %vm647, %v591, 0
      %v721 = vsel %vm647, %v592, 0
      %v724 = vsel %vm647, %v593, 0
      %v727 = vsel %vm647, %v594, 0
      %v730 = vsel %vm647, %v595, 0
      %v733 = vsel %vm647, %v596, 0
      %v736 = vsel %vm647, %v597, 0
      %v739 = vsel %vm647, %v598, 0
      %v742 = vsel %vm647, %v599, 0
      %v745 = vsel %vm647, %v600, 0
      %v748 = vsel %vm647, %v601, 0
      %v751 = vsel %vm647, %v602, 0
      %v754 = vsel %vm647, %v603, 0
      %v757 = vsel %vm647, %v604, 0
      %v760 = vsel %vm647, %v605, 0
      %v763 = vsel %vm647, %v606, 0
      %v766 = vsel %vm647, %v607, 0
      %v769 = vsel %vm647, %v608, 0
      %v772 = vsel %vm647, %v609, 0
      %v775 = vsel %vm647, %v610, 0
      %v778 = vsel %vm647, %v611, 0
      %v781 = vsel %vm647, %v612, 0
      %v784 = vsel %vm647, %v613, 0
      %v787 = vsel %vm647, %v614, 0
      %v790 = vsel %vm647, %v615, 0
      %v793 = vsel %vm647, %v616, 0
      %v796 = vsel %vm647, %v617, 0
      %v799 = vsel %vm647, %v618, 0
      %v802 = vsel %vm647, %v619, 0
      %v805 = vsel %vm647, %v620, 0
      %v808 = vsel %vm647, %v621, 0
      %v811 = vsel %vm647, %v622, 0
      %v814 = vsel %vm647, %v623, 0
      %v817 = vsel %vm647, %v624, 0
      %v820 = vsel %vm647, %v625, 0
      %v823 = vsel %vm647, %v626, 0
      %v826 = vsel %vm647, %v627, 0
      %v829 = vsel %vm647, %v628, 0
      %v832 = vsel %vm647, %v629, 0
      %v835 = vsel %vm647, %v630, 0
      %v838 = vsel %vm647, %v631, 0
      %vm840 = vcmask 1041408
      %v842 = vsel %vm840, %v644, 0
      %844 = vmatpush.bf16.msra.mxu0 0
      %845 = vmatpush.bf16.msra.mxu0 0
      %846 = vmatpush.bf16.msra.mxu0 0
      %847 = vmatpush.bf16.msra.mxu0 0
      %848 = vmatpush.bf16.msra.mxu0 0
      %849 = vmatpush.bf16.msra.mxu0 %v842
      %850 = vmatpush.bf16.msra.mxu0 %v643
      %851 = vmatpush.bf16.msra.mxu0 %v642
      %852 = vmatmul.bf16.gmra.mxu0 %v649
      %v853 = vpop.f32.mrf.mxu0
      %v854 = vadd.f32 %v310, %v853
      %v855 = vpop.f32.mrf.mxu0
      %v856 = vadd.f32 %v310, %v855
      %857 = vmatmul.bf16.gmra.mxu0 %v652
      %v858 = vpop.f32.mrf.mxu0
      %v859 = vadd.f32 %v310, %v858
      %v860 = vpop.f32.mrf.mxu0
      %v861 = vadd.f32 %v310, %v860
      %862 = vmatmul.bf16.gmra.mxu0 %v655
      %v863 = vpop.f32.mrf.mxu0
      %v864 = vadd.f32 %v310, %v863
      %v865 = vpop.f32.mrf.mxu0
      %v866 = vadd.f32 %v310, %v865
      %867 = vmatmul.bf16.gmra.mxu0 %v658
      %v868 = vpop.f32.mrf.mxu0
      %v869 = vadd.f32 %v310, %v868
      %v870 = vpop.f32.mrf.mxu0
      %v871 = vadd.f32 %v310, %v870
      %872 = vmatmul.bf16.gmra.mxu0 %v661
      %v873 = vpop.f32.mrf.mxu0
      %v874 = vadd.f32 %v310, %v873
      %v875 = vpop.f32.mrf.mxu0
      %v876 = vadd.f32 %v310, %v875
      %877 = vmatmul.bf16.gmra.mxu0 %v664
      %v878 = vpop.f32.mrf.mxu0
      %v879 = vadd.f32 %v310, %v878
      %v880 = vpop.f32.mrf.mxu0
      %v881 = vadd.f32 %v310, %v880
      %882 = vmatmul.bf16.gmra.mxu0 %v667
      %v883 = vpop.f32.mrf.mxu0
      %v884 = vadd.f32 %v310, %v883
      %v885 = vpop.f32.mrf.mxu0
      %v886 = vadd.f32 %v310, %v885
      %887 = vmatmul.bf16.gmra.mxu0 %v670
      %v888 = vpop.f32.mrf.mxu0
      %v889 = vadd.f32 %v310, %v888
      %v890 = vpop.f32.mrf.mxu0
      %v891 = vadd.f32 %v310, %v890
      %892 = vmatmul.bf16.gmra.mxu0 %v673
      %v893 = vpop.f32.mrf.mxu0
      %v894 = vadd.f32 %v310, %v893
      %v895 = vpop.f32.mrf.mxu0
      %v896 = vadd.f32 %v310, %v895
      %897 = vmatmul.bf16.gmra.mxu0 %v676
      %v898 = vpop.f32.mrf.mxu0
      %v899 = vadd.f32 %v310, %v898
      %v900 = vpop.f32.mrf.mxu0
      %v901 = vadd.f32 %v310, %v900
      %902 = vmatmul.bf16.gmra.mxu0 %v679
      %v903 = vpop.f32.mrf.mxu0
      %v904 = vadd.f32 %v310, %v903
      %v905 = vpop.f32.mrf.mxu0
      %v906 = vadd.f32 %v310, %v905
      %907 = vmatmul.bf16.gmra.mxu0 %v682
      %v908 = vpop.f32.mrf.mxu0
      %v909 = vadd.f32 %v310, %v908
      %v910 = vpop.f32.mrf.mxu0
      %v911 = vadd.f32 %v310, %v910
      %912 = vmatmul.bf16.gmra.mxu0 %v685
      %v913 = vpop.f32.mrf.mxu0
      %v914 = vadd.f32 %v310, %v913
      %v915 = vpop.f32.mrf.mxu0
      %v916 = vadd.f32 %v310, %v915
      %917 = vmatmul.bf16.gmra.mxu0 %v688
      %v918 = vpop.f32.mrf.mxu0
      %v919 = vadd.f32 %v310, %v918
      %v920 = vpop.f32.mrf.mxu0
      %v921 = vadd.f32 %v310, %v920
      %922 = vmatmul.bf16.gmra.mxu0 %v691
      %v923 = vpop.f32.mrf.mxu0
      %v924 = vadd.f32 %v310, %v923
      %v925 = vpop.f32.mrf.mxu0
      %v926 = vadd.f32 %v310, %v925
      %927 = vmatmul.bf16.gmra.mxu0 %v694
      %v928 = vpop.f32.mrf.mxu0
      %v929 = vadd.f32 %v310, %v928
      %v930 = vpop.f32.mrf.mxu0
      %v931 = vadd.f32 %v310, %v930
      %932 = vmatmul.bf16.gmra.mxu0 %v697
      %v933 = vpop.f32.mrf.mxu0
      %v934 = vadd.f32 %v310, %v933
      %v935 = vpop.f32.mrf.mxu0
      %v936 = vadd.f32 %v310, %v935
      %937 = vmatmul.bf16.gmra.mxu0 %v700
      %v938 = vpop.f32.mrf.mxu0
      %v939 = vadd.f32 %v310, %v938
      %v940 = vpop.f32.mrf.mxu0
      %v941 = vadd.f32 %v310, %v940
      %942 = vmatmul.bf16.gmra.mxu0 %v703
      %v943 = vpop.f32.mrf.mxu0
      %v944 = vadd.f32 %v310, %v943
      %v945 = vpop.f32.mrf.mxu0
      %v946 = vadd.f32 %v310, %v945
      %947 = vmatmul.bf16.gmra.mxu0 %v706
      %v948 = vpop.f32.mrf.mxu0
      %v949 = vadd.f32 %v310, %v948
      %v950 = vpop.f32.mrf.mxu0
      %v951 = vadd.f32 %v310, %v950
      %952 = vmatmul.bf16.gmra.mxu0 %v709
      %v953 = vpop.f32.mrf.mxu0
      %v954 = vadd.f32 %v310, %v953
      %v955 = vpop.f32.mrf.mxu0
      %v956 = vadd.f32 %v310, %v955
      %957 = vmatmul.bf16.gmra.mxu0 %v712
      %v958 = vpop.f32.mrf.mxu0
      %v959 = vadd.f32 %v310, %v958
      %v960 = vpop.f32.mrf.mxu0
      %v961 = vadd.f32 %v310, %v960
      %962 = vmatmul.bf16.gmra.mxu0 %v715
      %v963 = vpop.f32.mrf.mxu0
      %v964 = vadd.f32 %v310, %v963
      %v965 = vpop.f32.mrf.mxu0
      %v966 = vadd.f32 %v310, %v965
      %967 = vmatmul.bf16.gmra.mxu0 %v718
      %v968 = vpop.f32.mrf.mxu0
      %v969 = vadd.f32 %v310, %v968
      %v970 = vpop.f32.mrf.mxu0
      %v971 = vadd.f32 %v310, %v970
      %972 = vmatmul.bf16.gmra.mxu0 %v721
      %v973 = vpop.f32.mrf.mxu0
      %v974 = vadd.f32 %v310, %v973
      %v975 = vpop.f32.mrf.mxu0
      %v976 = vadd.f32 %v310, %v975
      %977 = vmatmul.bf16.gmra.mxu0 %v724
      %v978 = vpop.f32.mrf.mxu0
      %v979 = vadd.f32 %v310, %v978
      %v980 = vpop.f32.mrf.mxu0
      %v981 = vadd.f32 %v310, %v980
      %982 = vmatmul.bf16.gmra.mxu0 %v727
      %v983 = vpop.f32.mrf.mxu0
      %v984 = vadd.f32 %v310, %v983
      %v985 = vpop.f32.mrf.mxu0
      %v986 = vadd.f32 %v310, %v985
      %987 = vmatmul.bf16.gmra.mxu0 %v730
      %v988 = vpop.f32.mrf.mxu0
      %v989 = vadd.f32 %v310, %v988
      %v990 = vpop.f32.mrf.mxu0
      %v991 = vadd.f32 %v310, %v990
      %992 = vmatmul.bf16.gmra.mxu0 %v733
      %v993 = vpop.f32.mrf.mxu0
      %v994 = vadd.f32 %v310, %v993
      %v995 = vpop.f32.mrf.mxu0
      %v996 = vadd.f32 %v310, %v995
      %997 = vmatmul.bf16.gmra.mxu0 %v736
      %v998 = vpop.f32.mrf.mxu0
      %v999 = vadd.f32 %v310, %v998
      %v1000 = vpop.f32.mrf.mxu0
      %v1001 = vadd.f32 %v310, %v1000
      %1002 = vmatmul.bf16.gmra.mxu0 %v739
      %v1003 = vpop.f32.mrf.mxu0
      %v1004 = vadd.f32 %v310, %v1003
      %v1005 = vpop.f32.mrf.mxu0
      %v1006 = vadd.f32 %v310, %v1005
      %1007 = vmatmul.bf16.gmra.mxu0 %v742
      %v1008 = vpop.f32.mrf.mxu0
      %v1009 = vadd.f32 %v310, %v1008
      %v1010 = vpop.f32.mrf.mxu0
      %v1011 = vadd.f32 %v310, %v1010
      %1012 = vmatmul.bf16.gmra.mxu0 %v745
      %v1013 = vpop.f32.mrf.mxu0
      %v1014 = vadd.f32 %v310, %v1013
      %v1015 = vpop.f32.mrf.mxu0
      %v1016 = vadd.f32 %v310, %v1015
      %1017 = vmatmul.bf16.gmra.mxu0 %v748
      %v1018 = vpop.f32.mrf.mxu0
      %v1019 = vadd.f32 %v310, %v1018
      %v1020 = vpop.f32.mrf.mxu0
      %v1021 = vadd.f32 %v310, %v1020
      %1022 = vmatmul.bf16.gmra.mxu0 %v751
      %v1023 = vpop.f32.mrf.mxu0
      %v1024 = vadd.f32 %v310, %v1023
      %v1025 = vpop.f32.mrf.mxu0
      %v1026 = vadd.f32 %v310, %v1025
      %1027 = vmatmul.bf16.gmra.mxu0 %v754
      %v1028 = vpop.f32.mrf.mxu0
      %v1029 = vadd.f32 %v310, %v1028
      %v1030 = vpop.f32.mrf.mxu0
      %v1031 = vadd.f32 %v310, %v1030
      %1032 = vmatmul.bf16.gmra.mxu0 %v757
      %v1033 = vpop.f32.mrf.mxu0
      %v1034 = vadd.f32 %v310, %v1033
      %v1035 = vpop.f32.mrf.mxu0
      %v1036 = vadd.f32 %v310, %v1035
      %1037 = vmatmul.bf16.gmra.mxu0 %v760
      %v1038 = vpop.f32.mrf.mxu0
      %v1039 = vadd.f32 %v310, %v1038
      %v1040 = vpop.f32.mrf.mxu0
      %v1041 = vadd.f32 %v310, %v1040
      %1042 = vmatmul.bf16.gmra.mxu0 %v763
      %v1043 = vpop.f32.mrf.mxu0
      %v1044 = vadd.f32 %v310, %v1043
      %v1045 = vpop.f32.mrf.mxu0
      %v1046 = vadd.f32 %v310, %v1045
      %1047 = vmatmul.bf16.gmra.mxu0 %v766
      %v1048 = vpop.f32.mrf.mxu0
      %v1049 = vadd.f32 %v310, %v1048
      %v1050 = vpop.f32.mrf.mxu0
      %v1051 = vadd.f32 %v310, %v1050
      %1052 = vmatmul.bf16.gmra.mxu0 %v769
      %v1053 = vpop.f32.mrf.mxu0
      %v1054 = vadd.f32 %v310, %v1053
      %v1055 = vpop.f32.mrf.mxu0
      %v1056 = vadd.f32 %v310, %v1055
      %1057 = vmatmul.bf16.gmra.mxu0 %v772
      %v1058 = vpop.f32.mrf.mxu0
      %v1059 = vadd.f32 %v310, %v1058
      %v1060 = vpop.f32.mrf.mxu0
      %v1061 = vadd.f32 %v310, %v1060
      %1062 = vmatmul.bf16.gmra.mxu0 %v775
      %v1063 = vpop.f32.mrf.mxu0
      %v1064 = vadd.f32 %v310, %v1063
      %v1065 = vpop.f32.mrf.mxu0
      %v1066 = vadd.f32 %v310, %v1065
      %1067 = vmatmul.bf16.gmra.mxu0 %v778
      %v1068 = vpop.f32.mrf.mxu0
      %v1069 = vadd.f32 %v310, %v1068
      %v1070 = vpop.f32.mrf.mxu0
      %v1071 = vadd.f32 %v310, %v1070
      %1072 = vmatmul.bf16.gmra.mxu0 %v781
      %v1073 = vpop.f32.mrf.mxu0
      %v1074 = vadd.f32 %v310, %v1073
      %v1075 = vpop.f32.mrf.mxu0
      %v1076 = vadd.f32 %v310, %v1075
      %1077 = vmatmul.bf16.gmra.mxu0 %v784
      %v1078 = vpop.f32.mrf.mxu0
      %v1079 = vadd.f32 %v310, %v1078
      %v1080 = vpop.f32.mrf.mxu0
      %v1081 = vadd.f32 %v310, %v1080
      %1082 = vmatmul.bf16.gmra.mxu0 %v787
      %v1083 = vpop.f32.mrf.mxu0
      %v1084 = vadd.f32 %v310, %v1083
      %v1085 = vpop.f32.mrf.mxu0
      %v1086 = vadd.f32 %v310, %v1085
      %1087 = vmatmul.bf16.gmra.mxu0 %v790
      %v1088 = vpop.f32.mrf.mxu0
      %v1089 = vadd.f32 %v310, %v1088
      %v1090 = vpop.f32.mrf.mxu0
      %v1091 = vadd.f32 %v310, %v1090
      %1092 = vmatmul.bf16.gmra.mxu0 %v793
      %v1093 = vpop.f32.mrf.mxu0
      %v1094 = vadd.f32 %v310, %v1093
      %v1095 = vpop.f32.mrf.mxu0
      %v1096 = vadd.f32 %v310, %v1095
      %1097 = vmatmul.bf16.gmra.mxu0 %v796
      %v1098 = vpop.f32.mrf.mxu0
      %v1099 = vadd.f32 %v310, %v1098
      %v1100 = vpop.f32.mrf.mxu0
      %v1101 = vadd.f32 %v310, %v1100
      %1102 = vmatmul.bf16.gmra.mxu0 %v799
      %v1103 = vpop.f32.mrf.mxu0
      %v1104 = vadd.f32 %v310, %v1103
      %v1105 = vpop.f32.mrf.mxu0
      %v1106 = vadd.f32 %v310, %v1105
      %1107 = vmatmul.bf16.gmra.mxu0 %v802
      %v1108 = vpop.f32.mrf.mxu0
      %v1109 = vadd.f32 %v310, %v1108
      %v1110 = vpop.f32.mrf.mxu0
      %v1111 = vadd.f32 %v310, %v1110
      %1112 = vmatmul.bf16.gmra.mxu0 %v805
      %v1113 = vpop.f32.mrf.mxu0
      %v1114 = vadd.f32 %v310, %v1113
      %v1115 = vpop.f32.mrf.mxu0
      %v1116 = vadd.f32 %v310, %v1115
      %1117 = vmatmul.bf16.gmra.mxu0 %v808
      %v1118 = vpop.f32.mrf.mxu0
      %v1119 = vadd.f32 %v310, %v1118
      %v1120 = vpop.f32.mrf.mxu0
      %v1121 = vadd.f32 %v310, %v1120
      %1122 = vmatmul.bf16.gmra.mxu0 %v811
      %v1123 = vpop.f32.mrf.mxu0
      %v1124 = vadd.f32 %v310, %v1123
      %v1125 = vpop.f32.mrf.mxu0
      %v1126 = vadd.f32 %v310, %v1125
      %1127 = vmatmul.bf16.gmra.mxu0 %v814
      %v1128 = vpop.f32.mrf.mxu0
      %v1129 = vadd.f32 %v310, %v1128
      %v1130 = vpop.f32.mrf.mxu0
      %v1131 = vadd.f32 %v310, %v1130
      %1132 = vmatmul.bf16.gmra.mxu0 %v817
      %v1133 = vpop.f32.mrf.mxu0
      %v1134 = vadd.f32 %v310, %v1133
      %v1135 = vpop.f32.mrf.mxu0
      %v1136 = vadd.f32 %v310, %v1135
      %1137 = vmatmul.bf16.gmra.mxu0 %v820
      %v1138 = vpop.f32.mrf.mxu0
      %v1139 = vadd.f32 %v310, %v1138
      %v1140 = vpop.f32.mrf.mxu0
      %v1141 = vadd.f32 %v310, %v1140
      %1142 = vmatmul.bf16.gmra.mxu0 %v823
      %v1143 = vpop.f32.mrf.mxu0
      %v1144 = vadd.f32 %v310, %v1143
      %v1145 = vpop.f32.mrf.mxu0
      %v1146 = vadd.f32 %v310, %v1145
      %1147 = vmatmul.bf16.gmra.mxu0 %v826
      %v1148 = vpop.f32.mrf.mxu0
      %v1149 = vadd.f32 %v310, %v1148
      %v1150 = vpop.f32.mrf.mxu0
      %v1151 = vadd.f32 %v310, %v1150
      %1152 = vmatmul.bf16.gmra.mxu0 %v829
      %v1153 = vpop.f32.mrf.mxu0
      %v1154 = vadd.f32 %v310, %v1153
      %v1155 = vpop.f32.mrf.mxu0
      %v1156 = vadd.f32 %v310, %v1155
      %1157 = vmatmul.bf16.gmra.mxu0 %v832
      %v1158 = vpop.f32.mrf.mxu0
      %v1159 = vadd.f32 %v310, %v1158
      %v1160 = vpop.f32.mrf.mxu0
      %v1161 = vadd.f32 %v310, %v1160
      %1162 = vmatmul.bf16.gmra.mxu0 %v835
      %v1163 = vpop.f32.mrf.mxu0
      %v1164 = vadd.f32 %v310, %v1163
      %v1165 = vpop.f32.mrf.mxu0
      %v1166 = vadd.f32 %v310, %v1165
      %1167 = vmatmul.bf16.gmra.mxu0 %v838
      %v1168 = vpop.f32.mrf.mxu0
      %v1169 = vadd.f32 %v310, %v1168
      %v1170 = vpop.f32.mrf.mxu0
      %v1171 = vadd.f32 %v310, %v1170
      %1172 = vdwg.mxu0
      %v1173 = vmax.f32 %v854, 0.0
      %v1174 = vmax.f32 %v856, 0.0
      %v1175 = vmax.f32 %v859, 0.0
      %v1176 = vmax.f32 %v861, 0.0
      %v1177 = vmax.f32 %v864, 0.0
      %v1178 = vmax.f32 %v866, 0.0
      %v1179 = vmax.f32 %v869, 0.0
      %v1180 = vmax.f32 %v871, 0.0
      %v1181 = vmax.f32 %v874, 0.0
      %v1182 = vmax.f32 %v876, 0.0
      %v1183 = vmax.f32 %v879, 0.0
      %v1184 = vmax.f32 %v881, 0.0
      %v1185 = vmax.f32 %v884, 0.0
      %v1186 = vmax.f32 %v886, 0.0
      %v1187 = vmax.f32 %v889, 0.0
      %v1188 = vmax.f32 %v891, 0.0
      %v1189 = vmax.f32 %v894, 0.0
      %v1190 = vmax.f32 %v896, 0.0
      %v1191 = vmax.f32 %v899, 0.0
      %v1192 = vmax.f32 %v901, 0.0
      %v1193 = vmax.f32 %v904, 0.0
      %v1194 = vmax.f32 %v906, 0.0
      %v1195 = vmax.f32 %v909, 0.0
      %v1196 = vmax.f32 %v911, 0.0
      %v1197 = vmax.f32 %v914, 0.0
      %v1198 = vmax.f32 %v916, 0.0
      %v1199 = vmax.f32 %v919, 0.0
      %v1200 = vmax.f32 %v921, 0.0
      %v1201 = vmax.f32 %v924, 0.0
      %v1202 = vmax.f32 %v926, 0.0
      %v1203 = vmax.f32 %v929, 0.0
      %v1204 = vmax.f32 %v931, 0.0
      %v1205 = vmax.f32 %v934, 0.0
      %v1206 = vmax.f32 %v936, 0.0
      %v1207 = vmax.f32 %v939, 0.0
      %v1208 = vmax.f32 %v941, 0.0
      %v1209 = vmax.f32 %v944, 0.0
      %v1210 = vmax.f32 %v946, 0.0
      %v1211 = vmax.f32 %v949, 0.0
      %v1212 = vmax.f32 %v951, 0.0
      %v1213 = vmax.f32 %v954, 0.0
      %v1214 = vmax.f32 %v956, 0.0
      %v1215 = vmax.f32 %v959, 0.0
      %v1216 = vmax.f32 %v961, 0.0
      %v1217 = vmax.f32 %v964, 0.0
      %v1218 = vmax.f32 %v966, 0.0
      %v1219 = vmax.f32 %v969, 0.0
      %v1220 = vmax.f32 %v971, 0.0
      %v1221 = vmax.f32 %v974, 0.0
      %v1222 = vmax.f32 %v976, 0.0
      %v1223 = vmax.f32 %v979, 0.0
      %v1224 = vmax.f32 %v981, 0.0
      %v1225 = vmax.f32 %v984, 0.0
      %v1226 = vmax.f32 %v986, 0.0
      %v1227 = vmax.f32 %v989, 0.0
      %v1228 = vmax.f32 %v991, 0.0
      %v1229 = vmax.f32 %v994, 0.0
      %v1230 = vmax.f32 %v996, 0.0
      %v1231 = vmax.f32 %v999, 0.0
      %v1232 = vmax.f32 %v1001, 0.0
      %v1233 = vmax.f32 %v1004, 0.0
      %v1234 = vmax.f32 %v1006, 0.0
      %v1235 = vmax.f32 %v1009, 0.0
      %v1236 = vmax.f32 %v1011, 0.0
      %v1237 = vmax.f32 %v1014, 0.0
      %v1238 = vmax.f32 %v1016, 0.0
      %v1239 = vmax.f32 %v1019, 0.0
      %v1240 = vmax.f32 %v1021, 0.0
      %v1241 = vmax.f32 %v1024, 0.0
      %v1242 = vmax.f32 %v1026, 0.0
      %v1243 = vmax.f32 %v1029, 0.0
      %v1244 = vmax.f32 %v1031, 0.0
      %v1245 = vmax.f32 %v1034, 0.0
      %v1246 = vmax.f32 %v1036, 0.0
      %v1247 = vmax.f32 %v1039, 0.0
      %v1248 = vmax.f32 %v1041, 0.0
      %v1249 = vmax.f32 %v1044, 0.0
      %v1250 = vmax.f32 %v1046, 0.0
      %v1251 = vmax.f32 %v1049, 0.0
      %v1252 = vmax.f32 %v1051, 0.0
      %v1253 = vmax.f32 %v1054, 0.0
      %v1254 = vmax.f32 %v1056, 0.0
      %v1255 = vmax.f32 %v1059, 0.0
      %v1256 = vmax.f32 %v1061, 0.0
      %v1257 = vmax.f32 %v1064, 0.0
      %v1258 = vmax.f32 %v1066, 0.0
      %v1259 = vmax.f32 %v1069, 0.0
      %v1260 = vmax.f32 %v1071, 0.0
      %v1261 = vmax.f32 %v1074, 0.0
      %v1262 = vmax.f32 %v1076, 0.0
      %v1263 = vmax.f32 %v1079, 0.0
      %v1264 = vmax.f32 %v1081, 0.0
      %v1265 = vmax.f32 %v1084, 0.0
      %v1266 = vmax.f32 %v1086, 0.0
      %v1267 = vmax.f32 %v1089, 0.0
      %v1268 = vmax.f32 %v1091, 0.0
      %v1269 = vmax.f32 %v1094, 0.0
      %v1270 = vmax.f32 %v1096, 0.0
      %v1271 = vmax.f32 %v1099, 0.0
      %v1272 = vmax.f32 %v1101, 0.0
      %v1273 = vmax.f32 %v1104, 0.0
      %v1274 = vmax.f32 %v1106, 0.0
      %v1275 = vmax.f32 %v1109, 0.0
      %v1276 = vmax.f32 %v1111, 0.0
      %v1277 = vmax.f32 %v1114, 0.0
      %v1278 = vmax.f32 %v1116, 0.0
      %v1279 = vmax.f32 %v1119, 0.0
      %v1280 = vmax.f32 %v1121, 0.0
      %v1281 = vmax.f32 %v1124, 0.0
      %v1282 = vmax.f32 %v1126, 0.0
      %v1283 = vmax.f32 %v1129, 0.0
      %v1284 = vmax.f32 %v1131, 0.0
      %v1285 = vmax.f32 %v1134, 0.0
      %v1286 = vmax.f32 %v1136, 0.0
      %v1287 = vmax.f32 %v1139, 0.0
      %v1288 = vmax.f32 %v1141, 0.0
      %v1289 = vmax.f32 %v1144, 0.0
      %v1290 = vmax.f32 %v1146, 0.0
      %v1291 = vmax.f32 %v1149, 0.0
      %v1292 = vmax.f32 %v1151, 0.0
      %v1293 = vmax.f32 %v1154, 0.0
      %v1294 = vmax.f32 %v1156, 0.0
      %v1295 = vmax.f32 %v1159, 0.0
      %v1296 = vmax.f32 %v1161, 0.0
      %v1297 = vmax.f32 %v1164, 0.0
      %v1298 = vmax.f32 %v1166, 0.0
      %v1299 = vmax.f32 %v1169, 0.0
      %v1300 = vmax.f32 %v1171, 0.0
      %v1301 = vpack.c.bf16 %v1173, %v1173
      %v1302 = vpack.c.bf16 %v1174, %v1174
      %v1303 = vpack.c.bf16 %v1175, %v1175
      %v1304 = vpack.c.bf16 %v1176, %v1176
      %v1305 = vpack.c.bf16 %v1177, %v1177
      %v1306 = vpack.c.bf16 %v1178, %v1178
      %v1307 = vpack.c.bf16 %v1179, %v1179
      %v1308 = vpack.c.bf16 %v1180, %v1180
      %v1309 = vpack.c.bf16 %v1181, %v1181
      %v1310 = vpack.c.bf16 %v1182, %v1182
      %v1311 = vpack.c.bf16 %v1183, %v1183
      %v1312 = vpack.c.bf16 %v1184, %v1184
      %v1313 = vpack.c.bf16 %v1185, %v1185
      %v1314 = vpack.c.bf16 %v1186, %v1186
      %v1315 = vpack.c.bf16 %v1187, %v1187
      %v1316 = vpack.c.bf16 %v1188, %v1188
      %v1317 = vpack.c.bf16 %v1189, %v1189
      %v1318 = vpack.c.bf16 %v1190, %v1190
      %v1319 = vpack.c.bf16 %v1191, %v1191
      %v1320 = vpack.c.bf16 %v1192, %v1192
      %v1321 = vpack.c.bf16 %v1193, %v1193
      %v1322 = vpack.c.bf16 %v1194, %v1194
      %v1323 = vpack.c.bf16 %v1195, %v1195
      %v1324 = vpack.c.bf16 %v1196, %v1196
      %v1325 = vpack.c.bf16 %v1197, %v1197
      %v1326 = vpack.c.bf16 %v1198, %v1198
      %v1327 = vpack.c.bf16 %v1199, %v1199
      %v1328 = vpack.c.bf16 %v1200, %v1200
      %v1329 = vpack.c.bf16 %v1201, %v1201
      %v1330 = vpack.c.bf16 %v1202, %v1202
      %v1331 = vpack.c.bf16 %v1203, %v1203
      %v1332 = vpack.c.bf16 %v1204, %v1204
      %v1333 = vpack.c.bf16 %v1205, %v1205
      %v1334 = vpack.c.bf16 %v1206, %v1206
      %v1335 = vpack.c.bf16 %v1207, %v1207
      %v1336 = vpack.c.bf16 %v1208, %v1208
      %v1337 = vpack.c.bf16 %v1209, %v1209
      %v1338 = vpack.c.bf16 %v1210, %v1210
      %v1339 = vpack.c.bf16 %v1211, %v1211
      %v1340 = vpack.c.bf16 %v1212, %v1212
      %v1341 = vpack.c.bf16 %v1213, %v1213
      %v1342 = vpack.c.bf16 %v1214, %v1214
      %v1343 = vpack.c.bf16 %v1215, %v1215
      %v1344 = vpack.c.bf16 %v1216, %v1216
      %v1345 = vpack.c.bf16 %v1217, %v1217
      %v1346 = vpack.c.bf16 %v1218, %v1218
      %v1347 = vpack.c.bf16 %v1219, %v1219
      %v1348 = vpack.c.bf16 %v1220, %v1220
      %v1349 = vpack.c.bf16 %v1221, %v1221
      %v1350 = vpack.c.bf16 %v1222, %v1222
      %v1351 = vpack.c.bf16 %v1223, %v1223
      %v1352 = vpack.c.bf16 %v1224, %v1224
      %v1353 = vpack.c.bf16 %v1225, %v1225
      %v1354 = vpack.c.bf16 %v1226, %v1226
      %v1355 = vpack.c.bf16 %v1227, %v1227
      %v1356 = vpack.c.bf16 %v1228, %v1228
      %v1357 = vpack.c.bf16 %v1229, %v1229
      %v1358 = vpack.c.bf16 %v1230, %v1230
      %v1359 = vpack.c.bf16 %v1231, %v1231
      %v1360 = vpack.c.bf16 %v1232, %v1232
      %v1361 = vpack.c.bf16 %v1233, %v1233
      %v1362 = vpack.c.bf16 %v1234, %v1234
      %v1363 = vpack.c.bf16 %v1235, %v1235
      %v1364 = vpack.c.bf16 %v1236, %v1236
      %v1365 = vpack.c.bf16 %v1237, %v1237
      %v1366 = vpack.c.bf16 %v1238, %v1238
      %v1367 = vpack.c.bf16 %v1239, %v1239
      %v1368 = vpack.c.bf16 %v1240, %v1240
      %v1369 = vpack.c.bf16 %v1241, %v1241
      %v1370 = vpack.c.bf16 %v1242, %v1242
      %v1371 = vpack.c.bf16 %v1243, %v1243
      %v1372 = vpack.c.bf16 %v1244, %v1244
      %v1373 = vpack.c.bf16 %v1245, %v1245
      %v1374 = vpack.c.bf16 %v1246, %v1246
      %v1375 = vpack.c.bf16 %v1247, %v1247
      %v1376 = vpack.c.bf16 %v1248, %v1248
      %v1377 = vpack.c.bf16 %v1249, %v1249
      %v1378 = vpack.c.bf16 %v1250, %v1250
      %v1379 = vpack.c.bf16 %v1251, %v1251
      %v1380 = vpack.c.bf16 %v1252, %v1252
      %v1381 = vpack.c.bf16 %v1253, %v1253
      %v1382 = vpack.c.bf16 %v1254, %v1254
      %v1383 = vpack.c.bf16 %v1255, %v1255
      %v1384 = vpack.c.bf16 %v1256, %v1256
      %v1385 = vpack.c.bf16 %v1257, %v1257
      %v1386 = vpack.c.bf16 %v1258, %v1258
      %v1387 = vpack.c.bf16 %v1259, %v1259
      %v1388 = vpack.c.bf16 %v1260, %v1260
      %v1389 = vpack.c.bf16 %v1261, %v1261
      %v1390 = vpack.c.bf16 %v1262, %v1262
      %v1391 = vpack.c.bf16 %v1263, %v1263
      %v1392 = vpack.c.bf16 %v1264, %v1264
      %v1393 = vpack.c.bf16 %v1265, %v1265
      %v1394 = vpack.c.bf16 %v1266, %v1266
      %v1395 = vpack.c.bf16 %v1267, %v1267
      %v1396 = vpack.c.bf16 %v1268, %v1268
      %v1397 = vpack.c.bf16 %v1269, %v1269
      %v1398 = vpack.c.bf16 %v1270, %v1270
      %v1399 = vpack.c.bf16 %v1271, %v1271
      %v1400 = vpack.c.bf16 %v1272, %v1272
      %v1401 = vpack.c.bf16 %v1273, %v1273
      %v1402 = vpack.c.bf16 %v1274, %v1274
      %v1403 = vpack.c.bf16 %v1275, %v1275
      %v1404 = vpack.c.bf16 %v1276, %v1276
      %v1405 = vpack.c.bf16 %v1277, %v1277
      %v1406 = vpack.c.bf16 %v1278, %v1278
      %v1407 = vpack.c.bf16 %v1279, %v1279
      %v1408 = vpack.c.bf16 %v1280, %v1280
      %v1409 = vpack.c.bf16 %v1281, %v1281
      %v1410 = vpack.c.bf16 %v1282, %v1282
      %v1411 = vpack.c.bf16 %v1283, %v1283
      %v1412 = vpack.c.bf16 %v1284, %v1284
      %v1413 = vpack.c.bf16 %v1285, %v1285
      %v1414 = vpack.c.bf16 %v1286, %v1286
      %v1415 = vpack.c.bf16 %v1287, %v1287
      %v1416 = vpack.c.bf16 %v1288, %v1288
      %v1417 = vpack.c.bf16 %v1289, %v1289
      %v1418 = vpack.c.bf16 %v1290, %v1290
      %v1419 = vpack.c.bf16 %v1291, %v1291
      %v1420 = vpack.c.bf16 %v1292, %v1292
      %v1421 = vpack.c.bf16 %v1293, %v1293
      %v1422 = vpack.c.bf16 %v1294, %v1294
      %v1423 = vpack.c.bf16 %v1295, %v1295
      %v1424 = vpack.c.bf16 %v1296, %v1296
      %v1425 = vpack.c.bf16 %v1297, %v1297
      %v1426 = vpack.c.bf16 %v1298, %v1298
      %v1427 = vpack.c.bf16 %v1299, %v1299
      %v1428 = vpack.c.bf16 %v1300, %v1300
      %vm1429 = vcmask 125952
      %1430 = vst.msk [vmem:[%s172] sm:$0xf] %vm1429, %v1301
      %1431 = vst.msk [vmem:[%s172 + $0x4] sm:$0xf] %vm1429, %v1302
      %1432 = vst.msk [vmem:[%s172 + $0x8] sm:$0xf] %vm1429, %v1303
      %1433 = vst.msk [vmem:[%s172 + $0xc] sm:$0xf] %vm1429, %v1304
      %1434 = vst.msk [vmem:[%s172 + $0x10] sm:$0xf] %vm1429, %v1305
      %1435 = vst.msk [vmem:[%s172 + $0x14] sm:$0xf] %vm1429, %v1306
      %1436 = vst.msk [vmem:[%s172 + $0x18] sm:$0xf] %vm1429, %v1307
      %1437 = vst.msk [vmem:[%s172 + $0x1c] sm:$0xf] %vm1429, %v1308
      %1438 = vst.msk [vmem:[%s172 + $0x20] sm:$0xf] %vm1429, %v1309
      %1439 = vst.msk [vmem:[%s172 + $0x24] sm:$0xf] %vm1429, %v1310
      %1440 = vst.msk [vmem:[%s172 + $0x28] sm:$0xf] %vm1429, %v1311
      %1441 = vst.msk [vmem:[%s172 + $0x2c] sm:$0xf] %vm1429, %v1312
      %1442 = vst.msk [vmem:[%s172 + $0x30] sm:$0xf] %vm1429, %v1313
      %1443 = vst.msk [vmem:[%s172 + $0x34] sm:$0xf] %vm1429, %v1314
      %1444 = vst.msk [vmem:[%s172 + $0x38] sm:$0xf] %vm1429, %v1315
      %1445 = vst.msk [vmem:[%s172 + $0x3c] sm:$0xf] %vm1429, %v1316
      %1446 = vst.msk [vmem:[%s172 + $0x40] sm:$0xf] %vm1429, %v1317
      %1447 = vst.msk [vmem:[%s172 + $0x44] sm:$0xf] %vm1429, %v1318
      %1448 = vst.msk [vmem:[%s172 + $0x48] sm:$0xf] %vm1429, %v1319
      %1449 = vst.msk [vmem:[%s172 + $0x4c] sm:$0xf] %vm1429, %v1320
      %1450 = vst.msk [vmem:[%s172 + $0x50] sm:$0xf] %vm1429, %v1321
      %1451 = vst.msk [vmem:[%s172 + $0x54] sm:$0xf] %vm1429, %v1322
      %1452 = vst.msk [vmem:[%s172 + $0x58] sm:$0xf] %vm1429, %v1323
      %1453 = vst.msk [vmem:[%s172 + $0x5c] sm:$0xf] %vm1429, %v1324
      %1454 = vst.msk [vmem:[%s172 + $0x60] sm:$0xf] %vm1429, %v1325
      %1455 = vst.msk [vmem:[%s172 + $0x64] sm:$0xf] %vm1429, %v1326
      %1456 = vst.msk [vmem:[%s172 + $0x68] sm:$0xf] %vm1429, %v1327
      %1457 = vst.msk [vmem:[%s172 + $0x6c] sm:$0xf] %vm1429, %v1328
      %1458 = vst.msk [vmem:[%s172 + $0x70] sm:$0xf] %vm1429, %v1329
      %1459 = vst.msk [vmem:[%s172 + $0x74] sm:$0xf] %vm1429, %v1330
      %1460 = vst.msk [vmem:[%s172 + $0x78] sm:$0xf] %vm1429, %v1331
      %1461 = vst.msk [vmem:[%s172 + $0x7c] sm:$0xf] %vm1429, %v1332
      %1462 = vst.msk [vmem:[%s172 + $0x80] sm:$0xf] %vm1429, %v1333
      %1463 = vst.msk [vmem:[%s172 + $0x84] sm:$0xf] %vm1429, %v1334
      %1464 = vst.msk [vmem:[%s172 + $0x88] sm:$0xf] %vm1429, %v1335
      %1465 = vst.msk [vmem:[%s172 + $0x8c] sm:$0xf] %vm1429, %v1336
      %1466 = vst.msk [vmem:[%s172 + $0x90] sm:$0xf] %vm1429, %v1337
      %1467 = vst.msk [vmem:[%s172 + $0x94] sm:$0xf] %vm1429, %v1338
      %1468 = vst.msk [vmem:[%s172 + $0x98] sm:$0xf] %vm1429, %v1339
      %1469 = vst.msk [vmem:[%s172 + $0x9c] sm:$0xf] %vm1429, %v1340
      %1470 = vst.msk [vmem:[%s172 + $0xa0] sm:$0xf] %vm1429, %v1341
      %1471 = vst.msk [vmem:[%s172 + $0xa4] sm:$0xf] %vm1429, %v1342
      %1472 = vst.msk [vmem:[%s172 + $0xa8] sm:$0xf] %vm1429, %v1343
      %1473 = vst.msk [vmem:[%s172 + $0xac] sm:$0xf] %vm1429, %v1344
      %1474 = vst.msk [vmem:[%s172 + $0xb0] sm:$0xf] %vm1429, %v1345
      %1475 = vst.msk [vmem:[%s172 + $0xb4] sm:$0xf] %vm1429, %v1346
      %1476 = vst.msk [vmem:[%s172 + $0xb8] sm:$0xf] %vm1429, %v1347
      %1477 = vst.msk [vmem:[%s172 + $0xbc] sm:$0xf] %vm1429, %v1348
      %1478 = vst.msk [vmem:[%s172 + $0xc0] sm:$0xf] %vm1429, %v1349
      %1479 = vst.msk [vmem:[%s172 + $0xc4] sm:$0xf] %vm1429, %v1350
      %1480 = vst.msk [vmem:[%s172 + $0xc8] sm:$0xf] %vm1429, %v1351
      %1481 = vst.msk [vmem:[%s172 + $0xcc] sm:$0xf] %vm1429, %v1352
      %1482 = vst.msk [vmem:[%s172 + $0xd0] sm:$0xf] %vm1429, %v1353
      %1483 = vst.msk [vmem:[%s172 + $0xd4] sm:$0xf] %vm1429, %v1354
      %1484 = vst.msk [vmem:[%s172 + $0xd8] sm:$0xf] %vm1429, %v1355
      %1485 = vst.msk [vmem:[%s172 + $0xdc] sm:$0xf] %vm1429, %v1356
      %1486 = vst.msk [vmem:[%s172 + $0xe0] sm:$0xf] %vm1429, %v1357
      %1487 = vst.msk [vmem:[%s172 + $0xe4] sm:$0xf] %vm1429, %v1358
      %1488 = vst.msk [vmem:[%s172 + $0xe8] sm:$0xf] %vm1429, %v1359
      %1489 = vst.msk [vmem:[%s172 + $0xec] sm:$0xf] %vm1429, %v1360
      %1490 = vst.msk [vmem:[%s172 + $0xf0] sm:$0xf] %vm1429, %v1361
      %1491 = vst.msk [vmem:[%s172 + $0xf4] sm:$0xf] %vm1429, %v1362
      %1492 = vst.msk [vmem:[%s172 + $0xf8] sm:$0xf] %vm1429, %v1363
      %1493 = vst.msk [vmem:[%s172 + $0xfc] sm:$0xf] %vm1429, %v1364
      %1494 = vst.msk [vmem:[%s172 + $0x100] sm:$0xf] %vm1429, %v1365
      %1495 = vst.msk [vmem:[%s172 + $0x104] sm:$0xf] %vm1429, %v1366
      %1496 = vst.msk [vmem:[%s172 + $0x108] sm:$0xf] %vm1429, %v1367
      %1497 = vst.msk [vmem:[%s172 + $0x10c] sm:$0xf] %vm1429, %v1368
      %1498 = vst.msk [vmem:[%s172 + $0x110] sm:$0xf] %vm1429, %v1369
      %1499 = vst.msk [vmem:[%s172 + $0x114] sm:$0xf] %vm1429, %v1370
      %1500 = vst.msk [vmem:[%s172 + $0x118] sm:$0xf] %vm1429, %v1371
      %1501 = vst.msk [vmem:[%s172 + $0x11c] sm:$0xf] %vm1429, %v1372
      %1502 = vst.msk [vmem:[%s172 + $0x120] sm:$0xf] %vm1429, %v1373
      %1503 = vst.msk [vmem:[%s172 + $0x124] sm:$0xf] %vm1429, %v1374
      %1504 = vst.msk [vmem:[%s172 + $0x128] sm:$0xf] %vm1429, %v1375
      %1505 = vst.msk [vmem:[%s172 + $0x12c] sm:$0xf] %vm1429, %v1376
      %1506 = vst.msk [vmem:[%s172 + $0x130] sm:$0xf] %vm1429, %v1377
      %1507 = vst.msk [vmem:[%s172 + $0x134] sm:$0xf] %vm1429, %v1378
      %1508 = vst.msk [vmem:[%s172 + $0x138] sm:$0xf] %vm1429, %v1379
      %1509 = vst.msk [vmem:[%s172 + $0x13c] sm:$0xf] %vm1429, %v1380
      %1510 = vst.msk [vmem:[%s172 + $0x140] sm:$0xf] %vm1429, %v1381
      %1511 = vst.msk [vmem:[%s172 + $0x144] sm:$0xf] %vm1429, %v1382
      %1512 = vst.msk [vmem:[%s172 + $0x148] sm:$0xf] %vm1429, %v1383
      %1513 = vst.msk [vmem:[%s172 + $0x14c] sm:$0xf] %vm1429, %v1384
      %1514 = vst.msk [vmem:[%s172 + $0x150] sm:$0xf] %vm1429, %v1385
      %1515 = vst.msk [vmem:[%s172 + $0x154] sm:$0xf] %vm1429, %v1386
      %1516 = vst.msk [vmem:[%s172 + $0x158] sm:$0xf] %vm1429, %v1387
      %1517 = vst.msk [vmem:[%s172 + $0x15c] sm:$0xf] %vm1429, %v1388
      %1518 = vst.msk [vmem:[%s172 + $0x160] sm:$0xf] %vm1429, %v1389
      %1519 = vst.msk [vmem:[%s172 + $0x164] sm:$0xf] %vm1429, %v1390
      %1520 = vst.msk [vmem:[%s172 + $0x168] sm:$0xf] %vm1429, %v1391
      %1521 = vst.msk [vmem:[%s172 + $0x16c] sm:$0xf] %vm1429, %v1392
      %1522 = vst.msk [vmem:[%s172 + $0x170] sm:$0xf] %vm1429, %v1393
      %1523 = vst.msk [vmem:[%s172 + $0x174] sm:$0xf] %vm1429, %v1394
      %1524 = vst.msk [vmem:[%s172 + $0x178] sm:$0xf] %vm1429, %v1395
      %1525 = vst.msk [vmem:[%s172 + $0x17c] sm:$0xf] %vm1429, %v1396
      %1526 = vst.msk [vmem:[%s172 + $0x180] sm:$0xf] %vm1429, %v1397
      %1527 = vst.msk [vmem:[%s172 + $0x184] sm:$0xf] %vm1429, %v1398
      %1528 = vst.msk [vmem:[%s172 + $0x188] sm:$0xf] %vm1429, %v1399
      %1529 = vst.msk [vmem:[%s172 + $0x18c] sm:$0xf] %vm1429, %v1400
      %1530 = vst.msk [vmem:[%s172 + $0x190] sm:$0xf] %vm1429, %v1401
      %1531 = vst.msk [vmem:[%s172 + $0x194] sm:$0xf] %vm1429, %v1402
      %1532 = vst.msk [vmem:[%s172 + $0x198] sm:$0xf] %vm1429, %v1403
      %1533 = vst.msk [vmem:[%s172 + $0x19c] sm:$0xf] %vm1429, %v1404
      %1534 = vst.msk [vmem:[%s172 + $0x1a0] sm:$0xf] %vm1429, %v1405
      %1535 = vst.msk [vmem:[%s172 + $0x1a4] sm:$0xf] %vm1429, %v1406
      %1536 = vst.msk [vmem:[%s172 + $0x1a8] sm:$0xf] %vm1429, %v1407
      %1537 = vst.msk [vmem:[%s172 + $0x1ac] sm:$0xf] %vm1429, %v1408
      %1538 = vst.msk [vmem:[%s172 + $0x1b0] sm:$0xf] %vm1429, %v1409
      %1539 = vst.msk [vmem:[%s172 + $0x1b4] sm:$0xf] %vm1429, %v1410
      %1540 = vst.msk [vmem:[%s172 + $0x1b8] sm:$0xf] %vm1429, %v1411
      %1541 = vst.msk [vmem:[%s172 + $0x1bc] sm:$0xf] %vm1429, %v1412
      %1542 = vst.msk [vmem:[%s172 + $0x1c0] sm:$0xf] %vm1429, %v1413
      %1543 = vst.msk [vmem:[%s172 + $0x1c4] sm:$0xf] %vm1429, %v1414
      %1544 = vst.msk [vmem:[%s172 + $0x1c8] sm:$0xf] %vm1429, %v1415
      %1545 = vst.msk [vmem:[%s172 + $0x1cc] sm:$0xf] %vm1429, %v1416
      %1546 = vst.msk [vmem:[%s172 + $0x1d0] sm:$0xf] %vm1429, %v1417
      %1547 = vst.msk [vmem:[%s172 + $0x1d4] sm:$0xf] %vm1429, %v1418
      %1548 = vst.msk [vmem:[%s172 + $0x1d8] sm:$0xf] %vm1429, %v1419
      %1549 = vst.msk [vmem:[%s172 + $0x1dc] sm:$0xf] %vm1429, %v1420
      %1550 = vst.msk [vmem:[%s172 + $0x1e0] sm:$0xf] %vm1429, %v1421
      %1551 = vst.msk [vmem:[%s172 + $0x1e4] sm:$0xf] %vm1429, %v1422
      %1552 = vst.msk [vmem:[%s172 + $0x1e8] sm:$0xf] %vm1429, %v1423
      %1553 = vst.msk [vmem:[%s172 + $0x1ec] sm:$0xf] %vm1429, %v1424
      %1554 = vst.msk [vmem:[%s172 + $0x1f0] sm:$0xf] %vm1429, %v1425
      %1555 = vst.msk [vmem:[%s172 + $0x1f4] sm:$0xf] %vm1429, %v1426
      %1556 = vst.msk [vmem:[%s172 + $0x1f8] sm:$0xf] %vm1429, %v1427
      %1557 = vst.msk [vmem:[%s172 + $0x1fc] sm:$0xf] %vm1429, %v1428
      %s1558 = smul.u32 128, %s14
      %p1559 = scmp.lt.s32.totalorder %s1558, 255
      %s1560 = scalar_select %p1559, %s1558, 255
      %s1561 = smul.addr %s1560, 4
      %s1562 = scalar_lea.vmem %s3, %s1561
      // Predicated region
      $region33: #{pdc_model_forward.2} parent=31 // pred_check
        %p1563 = pneg %p100
      $region34: #{pdc_model_forward.2} parent=31 // pred_check_branch
        %1565 = sbr.rel (%p1563) target = $region36
      $region35: #{pdc_model_forward.2} parent=31 // pred_region
        %s1566 = smul.u32 128, %s14
      $region36: #{pdc_model_forward.2} parent=31 // pred_fallthru
        _
    $region32: #{pdc_model_forward.2} parent=5 // pred_fallthru
      _
    %p1567 = scmp.le.s32.totalorder 2, %s9
    // Predicated region
    $region37: #{pdc_model_forward.2} parent=5 // pred_check
      %p1568 = pneg %p1567
    $region38: #{pdc_model_forward.2} parent=5 // pred_check_branch
      %1570 = sbr.rel (%p1568) target = $region40
    $region39: #{pdc_model_forward.2} parent=5 // pred_region
      %s1571 = ssub.s32 %s9, 2
      // Predicated region
      $region41: #{pdc_model_forward.2} parent=39 // pred_check
        %p1572 = pneg %p106
      $region42: #{pdc_model_forward.2} parent=39 // pred_check_branch
        %1574 = sbr.rel (%p1572) target = $region44
      $region43: #{pdc_model_forward.2} parent=39 // pred_region
        %s1575 = smul.u32 128, %s15
        %p1576 = scmp.lt.s32.totalorder %s1575, 255
        %s1577 = scalar_select %p1576, %s1575, 255
        %s1578 = smul.addr %s1577, 4
        %s1579 = scalar_lea.vmem %s3, %s1578
      $region44: #{pdc_model_forward.2} parent=39 // pred_fallthru
        _
    $region40: #{pdc_model_forward.2} parent=5 // pred_fallthru
      _
  $region6: #{pdc_model_forward.2} parent=0 // loop_footer
    %s13 = sadd.s32 1, %s9
  $region7: #{pdc_model_forward.2} parent=0 // loop_footer_branch
    %8 = sbr.rel target = $region3
  $region8: #{pdc_model_forward.2} parent=0 // loop_exit
    _

</llo_original>
